<compile_context>
chip_gen: v5e
topology: v5e:2x2
jax: 0.10.0
libtpu: 0.0.40
codegen_flags: <defaults>
</compile_context>

<pallas_src>
import jax
import jax.numpy as jnp
from jax.experimental import pallas as pl
from jax.experimental.pallas import tpu as pltpu

# ----------------------- small ViT configuration -----------------------------
IMG = 32          # image spatial size (ViT-base uses 224; small for the demo)
PATCH = 8         # patch size (ViT-base uses 16)
CIN = 3           # input channels
DIM = 32          # hidden_dim (ViT-base uses 768)
HEADS = 4
HEAD_DIM = DIM // HEADS
DEPTH = 2         # transformer blocks (ViT-base uses 12)
MLP = 64          # MLP hidden size (ViT-base uses 3072)
NCLASSES = 10
EPS = 1e-6        # timm ViT LayerNorm eps

GRID = IMG // PATCH
NPATCH = GRID * GRID              # 16 patches
SEQ = NPATCH + 1                  # 17 tokens (CLS + patches)
S_PAD = 24                        # sequence padded to a multiple of 8
PDIM = CIN * PATCH * PATCH        # 192 flattened patch dim
NCLS_PAD = 128                    # lane-dense classifier output width
MAX_B_BLK = 8                     # up to 8 * 24 = 192 rows per grid step


# ------------------------------ in-kernel helpers ------------------------------
def _ln(x, g, b):
    """Row-wise LayerNorm over the last dim (biased variance), f32 statistics."""
    mu = jnp.mean(x, axis=-1, keepdims=True)
    xc = x - mu
    var = jnp.mean(xc * xc, axis=-1, keepdims=True)
    return xc * jax.lax.rsqrt(var + EPS) * g + b


# ------------------------------ fused forward kernel ---------------------------
def _make_vit_kernel(b_blk):
    """Kernel processing b_blk samples (R = b_blk*S_PAD rows) per grid step."""

    def kernel(patch_ref, pw_ref, add_ref, bias_ref,
               ln1_g_ref, ln1_b_ref, qkv_w_ref, qkv_b_ref,
               proj_w_ref, proj_b_ref, ln2_g_ref, ln2_b_ref,
               fc1_w_ref, fc1_b_ref, fc2_w_ref, fc2_b_ref,
               lnf_g_ref, lnf_b_ref, fcw_ref, fcb_ref,
               logits_ref):
        # --- patch embedding (+ CLS / positional / patch-bias additive term) ------
        # patch_ref: (R, PDIM) bf16, CLS-slot and pad rows are zero.
        x = jnp.dot(patch_ref[...], pw_ref[...],
                    preferred_element_type=jnp.float32)
        x = x + add_ref[...]                                  # (R, DIM) f32

        attn_bias = bias_ref[...]                             # (R, R) f32, block-diag

        # TODO(synk): if DEPTH is ever scaled up, switch to lax.fori_loop with dynamic
        # layer indexing to bound vreg live ranges; static unroll is fine at DEPTH=2.
        for l in range(DEPTH):
            # ----------------------- attention sub-block --------------------------
            h = _ln(x, ln1_g_ref[l], ln1_b_ref[l])
            qkv = jnp.dot(h.astype(jnp.bfloat16), qkv_w_ref[l],
                          preferred_element_type=jnp.float32)
            qkv = qkv + qkv_b_ref[l]                          # (R, 3*DIM), Q pre-scaled

            heads = []
            for hh in range(HEADS):
                lo = hh * HEAD_DIM
                q = qkv[:, lo:lo + HEAD_DIM].astype(jnp.bfloat16)
                k = qkv[:, DIM + lo:DIM + lo + HEAD_DIM].astype(jnp.bfloat16)
                v = qkv[:, 2 * DIM + lo:2 * DIM + lo + HEAD_DIM].astype(jnp.bfloat16)
                s = jax.lax.dot_general(q, k, (((1,), (1,)), ((), ())),
                                        preferred_element_type=jnp.float32)
                s = s + attn_bias                              # mask pad / cross-sample
                s = s - jnp.max(s, axis=-1, keepdims=True)
                p = jnp.exp(s)
                p = p * pl.reciprocal(jnp.sum(p, axis=-1, keepdims=True), approx=True)
                heads.append(jnp.dot(p.astype(jnp.bfloat16), v,
                                     preferred_element_type=jnp.float32))
            attn = jnp.concatenate(heads, axis=-1)             # (R, DIM) head-merge
            attn = jnp.dot(attn.astype(jnp.bfloat16), proj_w_ref[l],
                           preferred_element_type=jnp.float32)  # single proj matmul
            x = x + attn + proj_b_ref[l]

            # -------------------------- MLP sub-block -----------------------------
            h2 = _ln(x, ln2_g_ref[l], ln2_b_ref[l])
            m = jnp.dot(h2.astype(jnp.bfloat16), fc1_w_ref[l],
                        preferred_element_type=jnp.float32) + fc1_b_ref[l]
            # TODO(synk): PyTorch nn.GELU default is exact erf; tanh approximation here.
            m = jax.nn.gelu(m, approximate=True)
            m = jnp.dot(m.astype(jnp.bfloat16), fc2_w_ref[l],
                        preferred_element_type=jnp.float32) + fc2_b_ref[l]
            x = x + m

        # --- final LayerNorm + classifier head on the b_blk CLS rows only ----------
        cls = jnp.concatenate(
            [x[s * S_PAD:s * S_PAD + 1, :] for s in range(b_blk)], axis=0)
        f = _ln(cls, lnf_g_ref[...], lnf_b_ref[...])           # (b_blk, DIM)
        logits = jnp.dot(f.astype(jnp.bfloat16), fcw_ref[...],
                         preferred_element_type=jnp.float32) + fcb_ref[...]
        logits_ref[...] = logits.astype(logits_ref.dtype)      # (b_blk, NCLS_PAD)

    return kernel


# --------------------------- parameter initialization --------------------------
def init_params(key):
    keys = iter(jax.random.split(key, 64))

    def nrm(shape, scale=0.02):
        return (jax.random.normal(next(keys), shape, jnp.float32) * scale).astype(jnp.float32)

    params = {
        "patch_w": nrm((PDIM, DIM)),
        "patch_b": jnp.zeros((DIM,), jnp.float32),
        "cls": nrm((1, DIM)),
        "pos": nrm((SEQ, DIM)),
        "lnf_g": jnp.ones((DIM,), jnp.float32),
        "lnf_b": jnp.zeros((DIM,), jnp.float32),
        "fc_w": nrm((DIM, NCLASSES)),
        "fc_b": jnp.zeros((NCLASSES,), jnp.float32),
        # per-layer weights stacked along a leading DEPTH axis -> one VMEM residency
        "blocks": {
            "ln1_g": jnp.ones((DEPTH, DIM), jnp.float32),
            "ln1_b": jnp.zeros((DEPTH, DIM), jnp.float32),
            "qkv_w": nrm((DEPTH, DIM, 3 * DIM)),
            "qkv_b": jnp.zeros((DEPTH, 3 * DIM), jnp.float32),
            "proj_w": nrm((DEPTH, DIM, DIM)),
            "proj_b": jnp.zeros((DEPTH, DIM), jnp.float32),
            "ln2_g": jnp.ones((DEPTH, DIM), jnp.float32),
            "ln2_b": jnp.zeros((DEPTH, DIM), jnp.float32),
            "fc1_w": nrm((DEPTH, DIM, MLP)),
            "fc1_b": jnp.zeros((DEPTH, MLP), jnp.float32),
            "fc2_w": nrm((DEPTH, MLP, DIM)),
            "fc2_b": jnp.zeros((DEPTH, DIM), jnp.float32),
        },
    }
    return params


# -------------------------------- forward pass ---------------------------------
def _rep_spec(shape):
    """Full-array block replicated across the batch grid axis."""
    nd = len(shape)
    return pl.BlockSpec(tuple(shape), lambda *_, _nd=nd: (0,) * _nd)


def my_vit_net_forward(params, x):
    """MyVitNet.forward: features = ViT encoder CLS token; logits = fc(features)."""
    B, C, H, W = x.shape
    gh, gw = H // PATCH, W // PATCH
    n = gh * gw

    # ---- samples per grid step (row batching) ----------------------------------
    b_blk = min(B, MAX_B_BLK)
    num_blocks = pl.cdiv(B, b_blk)
    b_pad = num_blocks * b_blk
    R = b_blk * S_PAD                               # rows per grid step

    # Patchify == Conv2d(kernel=stride=PATCH) with (C, kh, kw) weight flattening order.
    patches = x.reshape(B, C, gh, PATCH, gw, PATCH).transpose(0, 2, 4, 1, 3, 5)
    patches = patches.reshape(B, n, PDIM)
    # Row 0 (CLS slot) and trailing pad rows/samples are zero; contents come from `add`.
    patch_pad = jnp.pad(patches, ((0, b_pad - B), (1, S_PAD - 1 - n), (0, 0)))
    patch_pad = patch_pad.reshape(num_blocks, R, PDIM).astype(jnp.bfloat16)

    # Per-row additive term baked host-side: cls+pos0 / pos+patch_bias / 0, tiled.
    add_one = jnp.concatenate([
        params["cls"] + params["pos"][0:1],
        params["pos"][1:] + params["patch_b"][None, :],
        jnp.zeros((S_PAD - SEQ, DIM), jnp.float32),
    ], axis=0)                                                    # (S_PAD, DIM)
    add = jnp.tile(add_one, (b_blk, 1))                           # (R, DIM)

    # Block-diagonal additive attention bias: 0 for same-sample valid keys, -1e30 else.
    ids = jnp.arange(R)
    same = (ids[:, None] // S_PAD) == (ids[None, :] // S_PAD)
    key_ok = (ids % S_PAD) < SEQ
    attn_bias = jnp.where(same & key_ok[None, :], 0.0, -1e30).astype(jnp.float32)

    blk = params["blocks"]
    # Fold 1/sqrt(head_dim) into the Q columns of the QKV weight & bias (host-side).
    scale = 1.0 / (HEAD_DIM ** 0.5)
    qscale = jnp.concatenate([jnp.full((DIM,), scale, jnp.float32),
                              jnp.ones((2 * DIM,), jnp.float32)])
    qkv_w = (blk["qkv_w"] * qscale).astype(jnp.bfloat16)
    qkv_b = (blk["qkv_b"] * qscale).reshape(DEPTH, 1, 3 * DIM)

    fc_w_pad = jnp.pad(params["fc_w"],
                       ((0, 0), (0, NCLS_PAD - NCLASSES))).astype(jnp.bfloat16)
    fc_b_pad = jnp.pad(params["fc_b"], (0, NCLS_PAD - NCLASSES)).reshape(1, NCLS_PAD)

    in_arrays = (
        patch_pad,
        params["patch_w"].astype(jnp.bfloat16),
        add, attn_bias,
        blk["ln1_g"].reshape(DEPTH, 1, DIM), blk["ln1_b"].reshape(DEPTH, 1, DIM),
        qkv_w, qkv_b,
        blk["proj_w"].astype(jnp.bfloat16), blk["proj_b"].reshape(DEPTH, 1, DIM),
        blk["ln2_g"].reshape(DEPTH, 1, DIM), blk["ln2_b"].reshape(DEPTH, 1, DIM),
        blk["fc1_w"].astype(jnp.bfloat16), blk["fc1_b"].reshape(DEPTH, 1, MLP),
        blk["fc2_w"].astype(jnp.bfloat16), blk["fc2_b"].reshape(DEPTH, 1, DIM),
        params["lnf_g"].reshape(1, DIM), params["lnf_b"].reshape(1, DIM),
        fc_w_pad, fc_b_pad,
    )
    in_specs = [pl.BlockSpec((None, R, PDIM), lambda b: (b, 0, 0))]
    in_specs += [_rep_spec(a.shape) for a in in_arrays[1:]]

    logits_pad = pl.pallas_call(
        _make_vit_kernel(b_blk),
        out_shape=jax.ShapeDtypeStruct((num_blocks, b_blk, NCLS_PAD), jnp.float32),
        grid=(num_blocks,),
        in_specs=in_specs,
        out_specs=pl.BlockSpec((None, b_blk, NCLS_PAD), lambda b: (b, 0, 0)),
        compiler_params=pltpu.CompilerParams(
            dimension_semantics=("parallel",)),   # shard grid across TCs (v7x)
    )(*in_arrays)

    return logits_pad.reshape(b_pad, NCLS_PAD)[:B, :NCLASSES]


# ------------------------------------ main -------------------------------------
if __name__ == "__main__":
    key = jax.random.PRNGKey(0)
    pkey, xkey = jax.random.split(key)
    params = init_params(pkey)
    x = jax.random.normal(xkey, (2, CIN, IMG, IMG), jnp.float32)   # NCHW, like PyTorch

    logits = jax.jit(my_vit_net_forward)(params, x)
    jax.block_until_ready(logits)

    assert logits.shape == (2, NCLASSES), logits.shape
    assert bool(jnp.all(jnp.isfinite(logits)))
    print("KERNEL_OK")
</pallas_src>

<mosaic_0001>
module attributes {stable_mosaic.version = 11 : i64} {
  func.func @kernel(%arg0: i32, %arg1: memref<1x48x192xbf16, #tpu.memory_space<vmem>>, %arg2: memref<192x32xbf16, #tpu.memory_space<vmem>>, %arg3: memref<48x32xf32, #tpu.memory_space<vmem>>, %arg4: memref<48x48xf32, #tpu.memory_space<vmem>>, %arg5: memref<2x1x32xf32, #tpu.memory_space<vmem>>, %arg6: memref<2x1x32xf32, #tpu.memory_space<vmem>>, %arg7: memref<2x32x96xbf16, #tpu.memory_space<vmem>>, %arg8: memref<2x1x96xf32, #tpu.memory_space<vmem>>, %arg9: memref<2x32x32xbf16, #tpu.memory_space<vmem>>, %arg10: memref<2x1x32xf32, #tpu.memory_space<vmem>>, %arg11: memref<2x1x32xf32, #tpu.memory_space<vmem>>, %arg12: memref<2x1x32xf32, #tpu.memory_space<vmem>>, %arg13: memref<2x32x64xbf16, #tpu.memory_space<vmem>>, %arg14: memref<2x1x64xf32, #tpu.memory_space<vmem>>, %arg15: memref<2x64x32xbf16, #tpu.memory_space<vmem>>, %arg16: memref<2x1x32xf32, #tpu.memory_space<vmem>>, %arg17: memref<1x32xf32, #tpu.memory_space<vmem>>, %arg18: memref<1x32xf32, #tpu.memory_space<vmem>>, %arg19: memref<32x128xbf16, #tpu.memory_space<vmem>>, %arg20: memref<1x128xf32, #tpu.memory_space<vmem>>, %arg21: memref<1x2x128xf32, #tpu.memory_space<vmem>>) attributes {dimension_semantics = [#tpu.dimension_semantics<parallel>], iteration_bounds = array<i64: 1>, scalar_prefetch = 0 : i64, scratch_operands = 0 : i64, tpu.core_type = #tpu.core_type<tc>, window_params = [{transform_indices = @transform_0, window_bounds = array<i64: 1, 48, 192>}, {pipeline_mode = #tpu.pipeline_mode<synchronous>, transform_indices = @transform_1, window_bounds = array<i64: 192, 32>}, {pipeline_mode = #tpu.pipeline_mode<synchronous>, transform_indices = @transform_2, window_bounds = array<i64: 48, 32>}, {pipeline_mode = #tpu.pipeline_mode<synchronous>, transform_indices = @transform_3, window_bounds = array<i64: 48, 48>}, {pipeline_mode = #tpu.pipeline_mode<synchronous>, transform_indices = @transform_4, window_bounds = array<i64: 2, 1, 32>}, {pipeline_mode = #tpu.pipeline_mode<synchronous>, transform_indices = @transform_5, window_bounds = array<i64: 2, 1, 32>}, {pipeline_mode = #tpu.pipeline_mode<synchronous>, transform_indices = @transform_6, window_bounds = array<i64: 2, 32, 96>}, {pipeline_mode = #tpu.pipeline_mode<synchronous>, transform_indices = @transform_7, window_bounds = array<i64: 2, 1, 96>}, {pipeline_mode = #tpu.pipeline_mode<synchronous>, transform_indices = @transform_8, window_bounds = array<i64: 2, 32, 32>}, {pipeline_mode = #tpu.pipeline_mode<synchronous>, transform_indices = @transform_9, window_bounds = array<i64: 2, 1, 32>}, {pipeline_mode = #tpu.pipeline_mode<synchronous>, transform_indices = @transform_10, window_bounds = array<i64: 2, 1, 32>}, {pipeline_mode = #tpu.pipeline_mode<synchronous>, transform_indices = @transform_11, window_bounds = array<i64: 2, 1, 32>}, {pipeline_mode = #tpu.pipeline_mode<synchronous>, transform_indices = @transform_12, window_bounds = array<i64: 2, 32, 64>}, {pipeline_mode = #tpu.pipeline_mode<synchronous>, transform_indices = @transform_13, window_bounds = array<i64: 2, 1, 64>}, {pipeline_mode = #tpu.pipeline_mode<synchronous>, transform_indices = @transform_14, window_bounds = array<i64: 2, 64, 32>}, {pipeline_mode = #tpu.pipeline_mode<synchronous>, transform_indices = @transform_15, window_bounds = array<i64: 2, 1, 32>}, {pipeline_mode = #tpu.pipeline_mode<synchronous>, transform_indices = @transform_16, window_bounds = array<i64: 1, 32>}, {pipeline_mode = #tpu.pipeline_mode<synchronous>, transform_indices = @transform_17, window_bounds = array<i64: 1, 32>}, {pipeline_mode = #tpu.pipeline_mode<synchronous>, transform_indices = @transform_18, window_bounds = array<i64: 32, 128>}, {pipeline_mode = #tpu.pipeline_mode<synchronous>, transform_indices = @transform_19, window_bounds = array<i64: 1, 128>}, {transform_indices = @transform_20, window_bounds = array<i64: 1, 2, 128>}]} {
    %c0 = arith.constant 0 : index
    %c0_0 = arith.constant 0 : index
    %c0_1 = arith.constant 0 : index
    %0 = vector.load %arg1[%c0, %c0_0, %c0_1] : memref<1x48x192xbf16, #tpu.memory_space<vmem>>, vector<1x48x192xbf16>
    %1 = vector.shape_cast %0 : vector<1x48x192xbf16> to vector<48x192xbf16>
    %c0_2 = arith.constant 0 : index
    %c0_3 = arith.constant 0 : index
    %2 = vector.load %arg2[%c0_2, %c0_3] : memref<192x32xbf16, #tpu.memory_space<vmem>>, vector<192x32xbf16>
    %cst = arith.constant dense<0.000000e+00> : vector<48x32xf32>
    %3 = tpu.matmul %1, %2, %cst {dimension_numbers = #tpu.dot_dimension_numbers<[1], [0], [0], [1], [0, 0, 1, 1], [], []>} : vector<48x192xbf16>, vector<192x32xbf16>, vector<48x32xf32> -> vector<48x32xf32>
    %c0_4 = arith.constant 0 : index
    %c0_5 = arith.constant 0 : index
    %4 = vector.load %arg3[%c0_4, %c0_5] : memref<48x32xf32, #tpu.memory_space<vmem>>, vector<48x32xf32>
    %5 = arith.addf %3, %4 : vector<48x32xf32>
    %c0_6 = arith.constant 0 : index
    %c0_7 = arith.constant 0 : index
    %6 = vector.load %arg4[%c0_6, %c0_7] : memref<48x48xf32, #tpu.memory_space<vmem>>, vector<48x48xf32>
    %c0_8 = arith.constant 0 : index
    %c0_9 = arith.constant 0 : index
    %c0_10 = arith.constant 0 : index
    %7 = vector.load %arg5[%c0_8, %c0_9, %c0_10] : memref<2x1x32xf32, #tpu.memory_space<vmem>>, vector<1x1x32xf32>
    %8 = vector.shape_cast %7 : vector<1x1x32xf32> to vector<1x32xf32>
    %c0_11 = arith.constant 0 : index
    %c0_12 = arith.constant 0 : index
    %c0_13 = arith.constant 0 : index
    %9 = vector.load %arg6[%c0_11, %c0_12, %c0_13] : memref<2x1x32xf32, #tpu.memory_space<vmem>>, vector<1x1x32xf32>
    %10 = vector.shape_cast %9 : vector<1x1x32xf32> to vector<1x32xf32>
    %cst_14 = arith.constant dense<0.000000e+00> : vector<48xf32>
    %11 = vector.multi_reduction <add>, %5, %cst_14 [1] : vector<48x32xf32> to vector<48xf32>
    %12 = vector.shape_cast %11 : vector<48xf32> to vector<48x1xf32>
    %cst_15 = arith.constant 3.200000e+01 : f32
    %13 = vector.broadcast %cst_15 : f32 to vector<48x1xf32>
    %14 = arith.divf %12, %13 : vector<48x1xf32>
    %15 = vector.broadcast %14 : vector<48x1xf32> to vector<48x32xf32>
    %16 = arith.subf %5, %15 : vector<48x32xf32>
    %17 = arith.mulf %16, %16 : vector<48x32xf32>
    %cst_16 = arith.constant dense<0.000000e+00> : vector<48xf32>
    %18 = vector.multi_reduction <add>, %17, %cst_16 [1] : vector<48x32xf32> to vector<48xf32>
    %19 = vector.shape_cast %18 : vector<48xf32> to vector<48x1xf32>
    %cst_17 = arith.constant 3.200000e+01 : f32
    %20 = vector.broadcast %cst_17 : f32 to vector<48x1xf32>
    %21 = arith.divf %19, %20 : vector<48x1xf32>
    %cst_18 = arith.constant 9.99999997E-7 : f32
    %22 = vector.broadcast %cst_18 : f32 to vector<48x1xf32>
    %23 = arith.addf %21, %22 : vector<48x1xf32>
    %24 = math.rsqrt %23 : vector<48x1xf32>
    %25 = vector.broadcast %24 : vector<48x1xf32> to vector<48x32xf32>
    %26 = arith.mulf %16, %25 : vector<48x32xf32>
    %27 = vector.broadcast %8 : vector<1x32xf32> to vector<48x32xf32>
    %28 = arith.mulf %26, %27 : vector<48x32xf32>
    %29 = vector.broadcast %10 : vector<1x32xf32> to vector<48x32xf32>
    %30 = arith.addf %28, %29 : vector<48x32xf32>
    %31 = arith.truncf %30 : vector<48x32xf32> to vector<48x32xbf16>
    %c0_19 = arith.constant 0 : index
    %c0_20 = arith.constant 0 : index
    %c0_21 = arith.constant 0 : index
    %32 = vector.load %arg7[%c0_19, %c0_20, %c0_21] : memref<2x32x96xbf16, #tpu.memory_space<vmem>>, vector<1x32x96xbf16>
    %33 = vector.shape_cast %32 : vector<1x32x96xbf16> to vector<32x96xbf16>
    %cst_22 = arith.constant dense<0.000000e+00> : vector<48x96xf32>
    %34 = tpu.matmul %31, %33, %cst_22 {dimension_numbers = #tpu.dot_dimension_numbers<[1], [0], [0], [1], [0, 0, 1, 1], [], []>} : vector<48x32xbf16>, vector<32x96xbf16>, vector<48x96xf32> -> vector<48x96xf32>
    %c0_23 = arith.constant 0 : index
    %c0_24 = arith.constant 0 : index
    %c0_25 = arith.constant 0 : index
    %35 = vector.load %arg8[%c0_23, %c0_24, %c0_25] : memref<2x1x96xf32, #tpu.memory_space<vmem>>, vector<1x1x96xf32>
    %36 = vector.shape_cast %35 : vector<1x1x96xf32> to vector<1x96xf32>
    %37 = vector.broadcast %36 : vector<1x96xf32> to vector<48x96xf32>
    %38 = arith.addf %34, %37 : vector<48x96xf32>
    %39 = vector.extract_strided_slice %38 {offsets = [0, 0], sizes = [48, 8], strides = [1, 1]} : vector<48x96xf32> to vector<48x8xf32>
    %40 = arith.truncf %39 : vector<48x8xf32> to vector<48x8xbf16>
    %41 = vector.extract_strided_slice %38 {offsets = [0, 32], sizes = [48, 8], strides = [1, 1]} : vector<48x96xf32> to vector<48x8xf32>
    %42 = arith.truncf %41 : vector<48x8xf32> to vector<48x8xbf16>
    %43 = vector.extract_strided_slice %38 {offsets = [0, 64], sizes = [48, 8], strides = [1, 1]} : vector<48x96xf32> to vector<48x8xf32>
    %44 = arith.truncf %43 : vector<48x8xf32> to vector<48x8xbf16>
    %cst_26 = arith.constant dense<0.000000e+00> : vector<48x48xf32>
    %45 = tpu.matmul %40, %42, %cst_26 {dimension_numbers = #tpu.dot_dimension_numbers<[1], [1], [0], [0], [0, 0, 1, 0], [], []>} : vector<48x8xbf16>, vector<48x8xbf16>, vector<48x48xf32> -> vector<48x48xf32>
    %46 = arith.addf %45, %6 : vector<48x48xf32>
    %cst_27 = arith.constant dense<0xFF800000> : vector<48xf32>
    %47 = vector.multi_reduction <maximumf>, %46, %cst_27 [1] : vector<48x48xf32> to vector<48xf32>
    %48 = vector.shape_cast %47 : vector<48xf32> to vector<48x1xf32>
    %49 = vector.broadcast %48 : vector<48x1xf32> to vector<48x48xf32>
    %50 = arith.subf %46, %49 : vector<48x48xf32>
    %51 = math.exp %50 : vector<48x48xf32>
    %cst_28 = arith.constant dense<0.000000e+00> : vector<48xf32>
    %52 = vector.multi_reduction <add>, %51, %cst_28 [1] : vector<48x48xf32> to vector<48xf32>
    %53 = vector.shape_cast %52 : vector<48xf32> to vector<48x1xf32>
    %54 = tpu.reciprocal %53 {approx = true} : vector<48x1xf32> -> vector<48x1xf32>
    %55 = vector.broadcast %54 : vector<48x1xf32> to vector<48x48xf32>
    %56 = arith.mulf %51, %55 : vector<48x48xf32>
    %57 = arith.truncf %56 : vector<48x48xf32> to vector<48x48xbf16>
    %cst_29 = arith.constant dense<0.000000e+00> : vector<48x8xf32>
    %58 = tpu.matmul %57, %44, %cst_29 {dimension_numbers = #tpu.dot_dimension_numbers<[1], [0], [0], [1], [0, 0, 1, 1], [], []>} : vector<48x48xbf16>, vector<48x8xbf16>, vector<48x8xf32> -> vector<48x8xf32>
    %59 = vector.extract_strided_slice %38 {offsets = [0, 8], sizes = [48, 8], strides = [1, 1]} : vector<48x96xf32> to vector<48x8xf32>
    %60 = arith.truncf %59 : vector<48x8xf32> to vector<48x8xbf16>
    %61 = vector.extract_strided_slice %38 {offsets = [0, 40], sizes = [48, 8], strides = [1, 1]} : vector<48x96xf32> to vector<48x8xf32>
    %62 = arith.truncf %61 : vector<48x8xf32> to vector<48x8xbf16>
    %63 = vector.extract_strided_slice %38 {offsets = [0, 72], sizes = [48, 8], strides = [1, 1]} : vector<48x96xf32> to vector<48x8xf32>
    %64 = arith.truncf %63 : vector<48x8xf32> to vector<48x8xbf16>
    %cst_30 = arith.constant dense<0.000000e+00> : vector<48x48xf32>
    %65 = tpu.matmul %60, %62, %cst_30 {dimension_numbers = #tpu.dot_dimension_numbers<[1], [1], [0], [0], [0, 0, 1, 0], [], []>} : vector<48x8xbf16>, vector<48x8xbf16>, vector<48x48xf32> -> vector<48x48xf32>
    %66 = arith.addf %65, %6 : vector<48x48xf32>
    %cst_31 = arith.constant dense<0xFF800000> : vector<48xf32>
    %67 = vector.multi_reduction <maximumf>, %66, %cst_31 [1] : vector<48x48xf32> to vector<48xf32>
    %68 = vector.shape_cast %67 : vector<48xf32> to vector<48x1xf32>
    %69 = vector.broadcast %68 : vector<48x1xf32> to vector<48x48xf32>
    %70 = arith.subf %66, %69 : vector<48x48xf32>
    %71 = math.exp %70 : vector<48x48xf32>
    %cst_32 = arith.constant dense<0.000000e+00> : vector<48xf32>
    %72 = vector.multi_reduction <add>, %71, %cst_32 [1] : vector<48x48xf32> to vector<48xf32>
    %73 = vector.shape_cast %72 : vector<48xf32> to vector<48x1xf32>
    %74 = tpu.reciprocal %73 {approx = true} : vector<48x1xf32> -> vector<48x1xf32>
    %75 = vector.broadcast %74 : vector<48x1xf32> to vector<48x48xf32>
    %76 = arith.mulf %71, %75 : vector<48x48xf32>
    %77 = arith.truncf %76 : vector<48x48xf32> to vector<48x48xbf16>
    %cst_33 = arith.constant dense<0.000000e+00> : vector<48x8xf32>
    %78 = tpu.matmul %77, %64, %cst_33 {dimension_numbers = #tpu.dot_dimension_numbers<[1], [0], [0], [1], [0, 0, 1, 1], [], []>} : vector<48x48xbf16>, vector<48x8xbf16>, vector<48x8xf32> -> vector<48x8xf32>
    %79 = vector.extract_strided_slice %38 {offsets = [0, 16], sizes = [48, 8], strides = [1, 1]} : vector<48x96xf32> to vector<48x8xf32>
    %80 = arith.truncf %79 : vector<48x8xf32> to vector<48x8xbf16>
    %81 = vector.extract_strided_slice %38 {offsets = [0, 48], sizes = [48, 8], strides = [1, 1]} : vector<48x96xf32> to vector<48x8xf32>
    %82 = arith.truncf %81 : vector<48x8xf32> to vector<48x8xbf16>
    %83 = vector.extract_strided_slice %38 {offsets = [0, 80], sizes = [48, 8], strides = [1, 1]} : vector<48x96xf32> to vector<48x8xf32>
    %84 = arith.truncf %83 : vector<48x8xf32> to vector<48x8xbf16>
    %cst_34 = arith.constant dense<0.000000e+00> : vector<48x48xf32>
    %85 = tpu.matmul %80, %82, %cst_34 {dimension_numbers = #tpu.dot_dimension_numbers<[1], [1], [0], [0], [0, 0, 1, 0], [], []>} : vector<48x8xbf16>, vector<48x8xbf16>, vector<48x48xf32> -> vector<48x48xf32>
    %86 = arith.addf %85, %6 : vector<48x48xf32>
    %cst_35 = arith.constant dense<0xFF800000> : vector<48xf32>
    %87 = vector.multi_reduction <maximumf>, %86, %cst_35 [1] : vector<48x48xf32> to vector<48xf32>
    %88 = vector.shape_cast %87 : vector<48xf32> to vector<48x1xf32>
    %89 = vector.broadcast %88 : vector<48x1xf32> to vector<48x48xf32>
    %90 = arith.subf %86, %89 : vector<48x48xf32>
    %91 = math.exp %90 : vector<48x48xf32>
    %cst_36 = arith.constant dense<0.000000e+00> : vector<48xf32>
    %92 = vector.multi_reduction <add>, %91, %cst_36 [1] : vector<48x48xf32> to vector<48xf32>
    %93 = vector.shape_cast %92 : vector<48xf32> to vector<48x1xf32>
    %94 = tpu.reciprocal %93 {approx = true} : vector<48x1xf32> -> vector<48x1xf32>
    %95 = vector.broadcast %94 : vector<48x1xf32> to vector<48x48xf32>
    %96 = arith.mulf %91, %95 : vector<48x48xf32>
    %97 = arith.truncf %96 : vector<48x48xf32> to vector<48x48xbf16>
    %cst_37 = arith.constant dense<0.000000e+00> : vector<48x8xf32>
    %98 = tpu.matmul %97, %84, %cst_37 {dimension_numbers = #tpu.dot_dimension_numbers<[1], [0], [0], [1], [0, 0, 1, 1], [], []>} : vector<48x48xbf16>, vector<48x8xbf16>, vector<48x8xf32> -> vector<48x8xf32>
    %99 = vector.extract_strided_slice %38 {offsets = [0, 24], sizes = [48, 8], strides = [1, 1]} : vector<48x96xf32> to vector<48x8xf32>
    %100 = arith.truncf %99 : vector<48x8xf32> to vector<48x8xbf16>
    %101 = vector.extract_strided_slice %38 {offsets = [0, 56], sizes = [48, 8], strides = [1, 1]} : vector<48x96xf32> to vector<48x8xf32>
    %102 = arith.truncf %101 : vector<48x8xf32> to vector<48x8xbf16>
    %103 = vector.extract_strided_slice %38 {offsets = [0, 88], sizes = [48, 8], strides = [1, 1]} : vector<48x96xf32> to vector<48x8xf32>
    %104 = arith.truncf %103 : vector<48x8xf32> to vector<48x8xbf16>
    %cst_38 = arith.constant dense<0.000000e+00> : vector<48x48xf32>
    %105 = tpu.matmul %100, %102, %cst_38 {dimension_numbers = #tpu.dot_dimension_numbers<[1], [1], [0], [0], [0, 0, 1, 0], [], []>} : vector<48x8xbf16>, vector<48x8xbf16>, vector<48x48xf32> -> vector<48x48xf32>
    %106 = arith.addf %105, %6 : vector<48x48xf32>
    %cst_39 = arith.constant dense<0xFF800000> : vector<48xf32>
    %107 = vector.multi_reduction <maximumf>, %106, %cst_39 [1] : vector<48x48xf32> to vector<48xf32>
    %108 = vector.shape_cast %107 : vector<48xf32> to vector<48x1xf32>
    %109 = vector.broadcast %108 : vector<48x1xf32> to vector<48x48xf32>
    %110 = arith.subf %106, %109 : vector<48x48xf32>
    %111 = math.exp %110 : vector<48x48xf32>
    %cst_40 = arith.constant dense<0.000000e+00> : vector<48xf32>
    %112 = vector.multi_reduction <add>, %111, %cst_40 [1] : vector<48x48xf32> to vector<48xf32>
    %113 = vector.shape_cast %112 : vector<48xf32> to vector<48x1xf32>
    %114 = tpu.reciprocal %113 {approx = true} : vector<48x1xf32> -> vector<48x1xf32>
    %115 = vector.broadcast %114 : vector<48x1xf32> to vector<48x48xf32>
    %116 = arith.mulf %111, %115 : vector<48x48xf32>
    %117 = arith.truncf %116 : vector<48x48xf32> to vector<48x48xbf16>
    %cst_41 = arith.constant dense<0.000000e+00> : vector<48x8xf32>
    %118 = tpu.matmul %117, %104, %cst_41 {dimension_numbers = #tpu.dot_dimension_numbers<[1], [0], [0], [1], [0, 0, 1, 1], [], []>} : vector<48x48xbf16>, vector<48x8xbf16>, vector<48x8xf32> -> vector<48x8xf32>
    %119 = tpu.concatenate %58, %78, %98, %118 in 1 : vector<48x8xf32>, vector<48x8xf32>, vector<48x8xf32>, vector<48x8xf32> -> vector<48x32xf32>
    %120 = arith.truncf %119 : vector<48x32xf32> to vector<48x32xbf16>
    %c0_42 = arith.constant 0 : index
    %c0_43 = arith.constant 0 : index
    %c0_44 = arith.constant 0 : index
    %121 = vector.load %arg9[%c0_42, %c0_43, %c0_44] : memref<2x32x32xbf16, #tpu.memory_space<vmem>>, vector<1x32x32xbf16>
    %122 = vector.shape_cast %121 : vector<1x32x32xbf16> to vector<32x32xbf16>
    %cst_45 = arith.constant dense<0.000000e+00> : vector<48x32xf32>
    %123 = tpu.matmul %120, %122, %cst_45 {dimension_numbers = #tpu.dot_dimension_numbers<[1], [0], [0], [1], [0, 0, 1, 1], [], []>} : vector<48x32xbf16>, vector<32x32xbf16>, vector<48x32xf32> -> vector<48x32xf32>
    %124 = arith.addf %5, %123 : vector<48x32xf32>
    %c0_46 = arith.constant 0 : index
    %c0_47 = arith.constant 0 : index
    %c0_48 = arith.constant 0 : index
    %125 = vector.load %arg10[%c0_46, %c0_47, %c0_48] : memref<2x1x32xf32, #tpu.memory_space<vmem>>, vector<1x1x32xf32>
    %126 = vector.shape_cast %125 : vector<1x1x32xf32> to vector<1x32xf32>
    %127 = vector.broadcast %126 : vector<1x32xf32> to vector<48x32xf32>
    %128 = arith.addf %124, %127 : vector<48x32xf32>
    %c0_49 = arith.constant 0 : index
    %c0_50 = arith.constant 0 : index
    %c0_51 = arith.constant 0 : index
    %129 = vector.load %arg11[%c0_49, %c0_50, %c0_51] : memref<2x1x32xf32, #tpu.memory_space<vmem>>, vector<1x1x32xf32>
    %130 = vector.shape_cast %129 : vector<1x1x32xf32> to vector<1x32xf32>
    %c0_52 = arith.constant 0 : index
    %c0_53 = arith.constant 0 : index
    %c0_54 = arith.constant 0 : index
    %131 = vector.load %arg12[%c0_52, %c0_53, %c0_54] : memref<2x1x32xf32, #tpu.memory_space<vmem>>, vector<1x1x32xf32>
    %132 = vector.shape_cast %131 : vector<1x1x32xf32> to vector<1x32xf32>
    %cst_55 = arith.constant dense<0.000000e+00> : vector<48xf32>
    %133 = vector.multi_reduction <add>, %128, %cst_55 [1] : vector<48x32xf32> to vector<48xf32>
    %134 = vector.shape_cast %133 : vector<48xf32> to vector<48x1xf32>
    %cst_56 = arith.constant 3.200000e+01 : f32
    %135 = vector.broadcast %cst_56 : f32 to vector<48x1xf32>
    %136 = arith.divf %134, %135 : vector<48x1xf32>
    %137 = vector.broadcast %136 : vector<48x1xf32> to vector<48x32xf32>
    %138 = arith.subf %128, %137 : vector<48x32xf32>
    %139 = arith.mulf %138, %138 : vector<48x32xf32>
    %cst_57 = arith.constant dense<0.000000e+00> : vector<48xf32>
    %140 = vector.multi_reduction <add>, %139, %cst_57 [1] : vector<48x32xf32> to vector<48xf32>
    %141 = vector.shape_cast %140 : vector<48xf32> to vector<48x1xf32>
    %cst_58 = arith.constant 3.200000e+01 : f32
    %142 = vector.broadcast %cst_58 : f32 to vector<48x1xf32>
    %143 = arith.divf %141, %142 : vector<48x1xf32>
    %cst_59 = arith.constant 9.99999997E-7 : f32
    %144 = vector.broadcast %cst_59 : f32 to vector<48x1xf32>
    %145 = arith.addf %143, %144 : vector<48x1xf32>
    %146 = math.rsqrt %145 : vector<48x1xf32>
    %147 = vector.broadcast %146 : vector<48x1xf32> to vector<48x32xf32>
    %148 = arith.mulf %138, %147 : vector<48x32xf32>
    %149 = vector.broadcast %130 : vector<1x32xf32> to vector<48x32xf32>
    %150 = arith.mulf %148, %149 : vector<48x32xf32>
    %151 = vector.broadcast %132 : vector<1x32xf32> to vector<48x32xf32>
    %152 = arith.addf %150, %151 : vector<48x32xf32>
    %153 = arith.truncf %152 : vector<48x32xf32> to vector<48x32xbf16>
    %c0_60 = arith.constant 0 : index
    %c0_61 = arith.constant 0 : index
    %c0_62 = arith.constant 0 : index
    %154 = vector.load %arg13[%c0_60, %c0_61, %c0_62] : memref<2x32x64xbf16, #tpu.memory_space<vmem>>, vector<1x32x64xbf16>
    %155 = vector.shape_cast %154 : vector<1x32x64xbf16> to vector<32x64xbf16>
    %cst_63 = arith.constant dense<0.000000e+00> : vector<48x64xf32>
    %156 = tpu.matmul %153, %155, %cst_63 {dimension_numbers = #tpu.dot_dimension_numbers<[1], [0], [0], [1], [0, 0, 1, 1], [], []>} : vector<48x32xbf16>, vector<32x64xbf16>, vector<48x64xf32> -> vector<48x64xf32>
    %c0_64 = arith.constant 0 : index
    %c0_65 = arith.constant 0 : index
    %c0_66 = arith.constant 0 : index
    %157 = vector.load %arg14[%c0_64, %c0_65, %c0_66] : memref<2x1x64xf32, #tpu.memory_space<vmem>>, vector<1x1x64xf32>
    %158 = vector.shape_cast %157 : vector<1x1x64xf32> to vector<1x64xf32>
    %159 = vector.broadcast %158 : vector<1x64xf32> to vector<48x64xf32>
    %160 = arith.addf %156, %159 : vector<48x64xf32>
    %161 = arith.mulf %160, %160 : vector<48x64xf32>
    %162 = arith.mulf %160, %161 : vector<48x64xf32>
    %cst_67 = arith.constant 4.471500e-02 : f32
    %163 = vector.broadcast %cst_67 : f32 to vector<48x64xf32>
    %164 = arith.mulf %163, %162 : vector<48x64xf32>
    %165 = arith.addf %160, %164 : vector<48x64xf32>
    %cst_68 = arith.constant 0.797884583 : f32
    %166 = vector.broadcast %cst_68 : f32 to vector<48x64xf32>
    %167 = arith.mulf %166, %165 : vector<48x64xf32>
    %168 = math.tanh %167 : vector<48x64xf32>
    %cst_69 = arith.constant 1.000000e+00 : f32
    %169 = vector.broadcast %cst_69 : f32 to vector<48x64xf32>
    %170 = arith.addf %169, %168 : vector<48x64xf32>
    %cst_70 = arith.constant 5.000000e-01 : f32
    %171 = vector.broadcast %cst_70 : f32 to vector<48x64xf32>
    %172 = arith.mulf %171, %170 : vector<48x64xf32>
    %173 = arith.mulf %160, %172 : vector<48x64xf32>
    %174 = arith.truncf %173 : vector<48x64xf32> to vector<48x64xbf16>
    %c0_71 = arith.constant 0 : index
    %c0_72 = arith.constant 0 : index
    %c0_73 = arith.constant 0 : index
    %175 = vector.load %arg15[%c0_71, %c0_72, %c0_73] : memref<2x64x32xbf16, #tpu.memory_space<vmem>>, vector<1x64x32xbf16>
    %176 = vector.shape_cast %175 : vector<1x64x32xbf16> to vector<64x32xbf16>
    %cst_74 = arith.constant dense<0.000000e+00> : vector<48x32xf32>
    %177 = tpu.matmul %174, %176, %cst_74 {dimension_numbers = #tpu.dot_dimension_numbers<[1], [0], [0], [1], [0, 0, 1, 1], [], []>} : vector<48x64xbf16>, vector<64x32xbf16>, vector<48x32xf32> -> vector<48x32xf32>
    %c0_75 = arith.constant 0 : index
    %c0_76 = arith.constant 0 : index
    %c0_77 = arith.constant 0 : index
    %178 = vector.load %arg16[%c0_75, %c0_76, %c0_77] : memref<2x1x32xf32, #tpu.memory_space<vmem>>, vector<1x1x32xf32>
    %179 = vector.shape_cast %178 : vector<1x1x32xf32> to vector<1x32xf32>
    %180 = vector.broadcast %179 : vector<1x32xf32> to vector<48x32xf32>
    %181 = arith.addf %177, %180 : vector<48x32xf32>
    %182 = arith.addf %128, %181 : vector<48x32xf32>
    %c1 = arith.constant 1 : index
    %c0_78 = arith.constant 0 : index
    %c0_79 = arith.constant 0 : index
    %183 = vector.load %arg5[%c1, %c0_78, %c0_79] : memref<2x1x32xf32, #tpu.memory_space<vmem>>, vector<1x1x32xf32>
    %184 = vector.shape_cast %183 : vector<1x1x32xf32> to vector<1x32xf32>
    %c1_80 = arith.constant 1 : index
    %c0_81 = arith.constant 0 : index
    %c0_82 = arith.constant 0 : index
    %185 = vector.load %arg6[%c1_80, %c0_81, %c0_82] : memref<2x1x32xf32, #tpu.memory_space<vmem>>, vector<1x1x32xf32>
    %186 = vector.shape_cast %185 : vector<1x1x32xf32> to vector<1x32xf32>
    %cst_83 = arith.constant dense<0.000000e+00> : vector<48xf32>
    %187 = vector.multi_reduction <add>, %182, %cst_83 [1] : vector<48x32xf32> to vector<48xf32>
    %188 = vector.shape_cast %187 : vector<48xf32> to vector<48x1xf32>
    %cst_84 = arith.constant 3.200000e+01 : f32
    %189 = vector.broadcast %cst_84 : f32 to vector<48x1xf32>
    %190 = arith.divf %188, %189 : vector<48x1xf32>
    %191 = vector.broadcast %190 : vector<48x1xf32> to vector<48x32xf32>
    %192 = arith.subf %182, %191 : vector<48x32xf32>
    %193 = arith.mulf %192, %192 : vector<48x32xf32>
    %cst_85 = arith.constant dense<0.000000e+00> : vector<48xf32>
    %194 = vector.multi_reduction <add>, %193, %cst_85 [1] : vector<48x32xf32> to vector<48xf32>
    %195 = vector.shape_cast %194 : vector<48xf32> to vector<48x1xf32>
    %cst_86 = arith.constant 3.200000e+01 : f32
    %196 = vector.broadcast %cst_86 : f32 to vector<48x1xf32>
    %197 = arith.divf %195, %196 : vector<48x1xf32>
    %cst_87 = arith.constant 9.99999997E-7 : f32
    %198 = vector.broadcast %cst_87 : f32 to vector<48x1xf32>
    %199 = arith.addf %197, %198 : vector<48x1xf32>
    %200 = math.rsqrt %199 : vector<48x1xf32>
    %201 = vector.broadcast %200 : vector<48x1xf32> to vector<48x32xf32>
    %202 = arith.mulf %192, %201 : vector<48x32xf32>
    %203 = vector.broadcast %184 : vector<1x32xf32> to vector<48x32xf32>
    %204 = arith.mulf %202, %203 : vector<48x32xf32>
    %205 = vector.broadcast %186 : vector<1x32xf32> to vector<48x32xf32>
    %206 = arith.addf %204, %205 : vector<48x32xf32>
    %207 = arith.truncf %206 : vector<48x32xf32> to vector<48x32xbf16>
    %c1_88 = arith.constant 1 : index
    %c0_89 = arith.constant 0 : index
    %c0_90 = arith.constant 0 : index
    %208 = vector.load %arg7[%c1_88, %c0_89, %c0_90] : memref<2x32x96xbf16, #tpu.memory_space<vmem>>, vector<1x32x96xbf16>
    %209 = vector.shape_cast %208 : vector<1x32x96xbf16> to vector<32x96xbf16>
    %cst_91 = arith.constant dense<0.000000e+00> : vector<48x96xf32>
    %210 = tpu.matmul %207, %209, %cst_91 {dimension_numbers = #tpu.dot_dimension_numbers<[1], [0], [0], [1], [0, 0, 1, 1], [], []>} : vector<48x32xbf16>, vector<32x96xbf16>, vector<48x96xf32> -> vector<48x96xf32>
    %c1_92 = arith.constant 1 : index
    %c0_93 = arith.constant 0 : index
    %c0_94 = arith.constant 0 : index
    %211 = vector.load %arg8[%c1_92, %c0_93, %c0_94] : memref<2x1x96xf32, #tpu.memory_space<vmem>>, vector<1x1x96xf32>
    %212 = vector.shape_cast %211 : vector<1x1x96xf32> to vector<1x96xf32>
    %213 = vector.broadcast %212 : vector<1x96xf32> to vector<48x96xf32>
    %214 = arith.addf %210, %213 : vector<48x96xf32>
    %215 = vector.extract_strided_slice %214 {offsets = [0, 0], sizes = [48, 8], strides = [1, 1]} : vector<48x96xf32> to vector<48x8xf32>
    %216 = arith.truncf %215 : vector<48x8xf32> to vector<48x8xbf16>
    %217 = vector.extract_strided_slice %214 {offsets = [0, 32], sizes = [48, 8], strides = [1, 1]} : vector<48x96xf32> to vector<48x8xf32>
    %218 = arith.truncf %217 : vector<48x8xf32> to vector<48x8xbf16>
    %219 = vector.extract_strided_slice %214 {offsets = [0, 64], sizes = [48, 8], strides = [1, 1]} : vector<48x96xf32> to vector<48x8xf32>
    %220 = arith.truncf %219 : vector<48x8xf32> to vector<48x8xbf16>
    %cst_95 = arith.constant dense<0.000000e+00> : vector<48x48xf32>
    %221 = tpu.matmul %216, %218, %cst_95 {dimension_numbers = #tpu.dot_dimension_numbers<[1], [1], [0], [0], [0, 0, 1, 0], [], []>} : vector<48x8xbf16>, vector<48x8xbf16>, vector<48x48xf32> -> vector<48x48xf32>
    %222 = arith.addf %221, %6 : vector<48x48xf32>
    %cst_96 = arith.constant dense<0xFF800000> : vector<48xf32>
    %223 = vector.multi_reduction <maximumf>, %222, %cst_96 [1] : vector<48x48xf32> to vector<48xf32>
    %224 = vector.shape_cast %223 : vector<48xf32> to vector<48x1xf32>
    %225 = vector.broadcast %224 : vector<48x1xf32> to vector<48x48xf32>
    %226 = arith.subf %222, %225 : vector<48x48xf32>
    %227 = math.exp %226 : vector<48x48xf32>
    %cst_97 = arith.constant dense<0.000000e+00> : vector<48xf32>
    %228 = vector.multi_reduction <add>, %227, %cst_97 [1] : vector<48x48xf32> to vector<48xf32>
    %229 = vector.shape_cast %228 : vector<48xf32> to vector<48x1xf32>
    %230 = tpu.reciprocal %229 {approx = true} : vector<48x1xf32> -> vector<48x1xf32>
    %231 = vector.broadcast %230 : vector<48x1xf32> to vector<48x48xf32>
    %232 = arith.mulf %227, %231 : vector<48x48xf32>
    %233 = arith.truncf %232 : vector<48x48xf32> to vector<48x48xbf16>
    %cst_98 = arith.constant dense<0.000000e+00> : vector<48x8xf32>
    %234 = tpu.matmul %233, %220, %cst_98 {dimension_numbers = #tpu.dot_dimension_numbers<[1], [0], [0], [1], [0, 0, 1, 1], [], []>} : vector<48x48xbf16>, vector<48x8xbf16>, vector<48x8xf32> -> vector<48x8xf32>
    %235 = vector.extract_strided_slice %214 {offsets = [0, 8], sizes = [48, 8], strides = [1, 1]} : vector<48x96xf32> to vector<48x8xf32>
    %236 = arith.truncf %235 : vector<48x8xf32> to vector<48x8xbf16>
    %237 = vector.extract_strided_slice %214 {offsets = [0, 40], sizes = [48, 8], strides = [1, 1]} : vector<48x96xf32> to vector<48x8xf32>
    %238 = arith.truncf %237 : vector<48x8xf32> to vector<48x8xbf16>
    %239 = vector.extract_strided_slice %214 {offsets = [0, 72], sizes = [48, 8], strides = [1, 1]} : vector<48x96xf32> to vector<48x8xf32>
    %240 = arith.truncf %239 : vector<48x8xf32> to vector<48x8xbf16>
    %cst_99 = arith.constant dense<0.000000e+00> : vector<48x48xf32>
    %241 = tpu.matmul %236, %238, %cst_99 {dimension_numbers = #tpu.dot_dimension_numbers<[1], [1], [0], [0], [0, 0, 1, 0], [], []>} : vector<48x8xbf16>, vector<48x8xbf16>, vector<48x48xf32> -> vector<48x48xf32>
    %242 = arith.addf %241, %6 : vector<48x48xf32>
    %cst_100 = arith.constant dense<0xFF800000> : vector<48xf32>
    %243 = vector.multi_reduction <maximumf>, %242, %cst_100 [1] : vector<48x48xf32> to vector<48xf32>
    %244 = vector.shape_cast %243 : vector<48xf32> to vector<48x1xf32>
    %245 = vector.broadcast %244 : vector<48x1xf32> to vector<48x48xf32>
    %246 = arith.subf %242, %245 : vector<48x48xf32>
    %247 = math.exp %246 : vector<48x48xf32>
    %cst_101 = arith.constant dense<0.000000e+00> : vector<48xf32>
    %248 = vector.multi_reduction <add>, %247, %cst_101 [1] : vector<48x48xf32> to vector<48xf32>
    %249 = vector.shape_cast %248 : vector<48xf32> to vector<48x1xf32>
    %250 = tpu.reciprocal %249 {approx = true} : vector<48x1xf32> -> vector<48x1xf32>
    %251 = vector.broadcast %250 : vector<48x1xf32> to vector<48x48xf32>
    %252 = arith.mulf %247, %251 : vector<48x48xf32>
    %253 = arith.truncf %252 : vector<48x48xf32> to vector<48x48xbf16>
    %cst_102 = arith.constant dense<0.000000e+00> : vector<48x8xf32>
    %254 = tpu.matmul %253, %240, %cst_102 {dimension_numbers = #tpu.dot_dimension_numbers<[1], [0], [0], [1], [0, 0, 1, 1], [], []>} : vector<48x48xbf16>, vector<48x8xbf16>, vector<48x8xf32> -> vector<48x8xf32>
    %255 = vector.extract_strided_slice %214 {offsets = [0, 16], sizes = [48, 8], strides = [1, 1]} : vector<48x96xf32> to vector<48x8xf32>
    %256 = arith.truncf %255 : vector<48x8xf32> to vector<48x8xbf16>
    %257 = vector.extract_strided_slice %214 {offsets = [0, 48], sizes = [48, 8], strides = [1, 1]} : vector<48x96xf32> to vector<48x8xf32>
    %258 = arith.truncf %257 : vector<48x8xf32> to vector<48x8xbf16>
    %259 = vector.extract_strided_slice %214 {offsets = [0, 80], sizes = [48, 8], strides = [1, 1]} : vector<48x96xf32> to vector<48x8xf32>
    %260 = arith.truncf %259 : vector<48x8xf32> to vector<48x8xbf16>
    %cst_103 = arith.constant dense<0.000000e+00> : vector<48x48xf32>
    %261 = tpu.matmul %256, %258, %cst_103 {dimension_numbers = #tpu.dot_dimension_numbers<[1], [1], [0], [0], [0, 0, 1, 0], [], []>} : vector<48x8xbf16>, vector<48x8xbf16>, vector<48x48xf32> -> vector<48x48xf32>
    %262 = arith.addf %261, %6 : vector<48x48xf32>
    %cst_104 = arith.constant dense<0xFF800000> : vector<48xf32>
    %263 = vector.multi_reduction <maximumf>, %262, %cst_104 [1] : vector<48x48xf32> to vector<48xf32>
    %264 = vector.shape_cast %263 : vector<48xf32> to vector<48x1xf32>
    %265 = vector.broadcast %264 : vector<48x1xf32> to vector<48x48xf32>
    %266 = arith.subf %262, %265 : vector<48x48xf32>
    %267 = math.exp %266 : vector<48x48xf32>
    %cst_105 = arith.constant dense<0.000000e+00> : vector<48xf32>
    %268 = vector.multi_reduction <add>, %267, %cst_105 [1] : vector<48x48xf32> to vector<48xf32>
    %269 = vector.shape_cast %268 : vector<48xf32> to vector<48x1xf32>
    %270 = tpu.reciprocal %269 {approx = true} : vector<48x1xf32> -> vector<48x1xf32>
    %271 = vector.broadcast %270 : vector<48x1xf32> to vector<48x48xf32>
    %272 = arith.mulf %267, %271 : vector<48x48xf32>
    %273 = arith.truncf %272 : vector<48x48xf32> to vector<48x48xbf16>
    %cst_106 = arith.constant dense<0.000000e+00> : vector<48x8xf32>
    %274 = tpu.matmul %273, %260, %cst_106 {dimension_numbers = #tpu.dot_dimension_numbers<[1], [0], [0], [1], [0, 0, 1, 1], [], []>} : vector<48x48xbf16>, vector<48x8xbf16>, vector<48x8xf32> -> vector<48x8xf32>
    %275 = vector.extract_strided_slice %214 {offsets = [0, 24], sizes = [48, 8], strides = [1, 1]} : vector<48x96xf32> to vector<48x8xf32>
    %276 = arith.truncf %275 : vector<48x8xf32> to vector<48x8xbf16>
    %277 = vector.extract_strided_slice %214 {offsets = [0, 56], sizes = [48, 8], strides = [1, 1]} : vector<48x96xf32> to vector<48x8xf32>
    %278 = arith.truncf %277 : vector<48x8xf32> to vector<48x8xbf16>
    %279 = vector.extract_strided_slice %214 {offsets = [0, 88], sizes = [48, 8], strides = [1, 1]} : vector<48x96xf32> to vector<48x8xf32>
    %280 = arith.truncf %279 : vector<48x8xf32> to vector<48x8xbf16>
    %cst_107 = arith.constant dense<0.000000e+00> : vector<48x48xf32>
    %281 = tpu.matmul %276, %278, %cst_107 {dimension_numbers = #tpu.dot_dimension_numbers<[1], [1], [0], [0], [0, 0, 1, 0], [], []>} : vector<48x8xbf16>, vector<48x8xbf16>, vector<48x48xf32> -> vector<48x48xf32>
    %282 = arith.addf %281, %6 : vector<48x48xf32>
    %cst_108 = arith.constant dense<0xFF800000> : vector<48xf32>
    %283 = vector.multi_reduction <maximumf>, %282, %cst_108 [1] : vector<48x48xf32> to vector<48xf32>
    %284 = vector.shape_cast %283 : vector<48xf32> to vector<48x1xf32>
    %285 = vector.broadcast %284 : vector<48x1xf32> to vector<48x48xf32>
    %286 = arith.subf %282, %285 : vector<48x48xf32>
    %287 = math.exp %286 : vector<48x48xf32>
    %cst_109 = arith.constant dense<0.000000e+00> : vector<48xf32>
    %288 = vector.multi_reduction <add>, %287, %cst_109 [1] : vector<48x48xf32> to vector<48xf32>
    %289 = vector.shape_cast %288 : vector<48xf32> to vector<48x1xf32>
    %290 = tpu.reciprocal %289 {approx = true} : vector<48x1xf32> -> vector<48x1xf32>
    %291 = vector.broadcast %290 : vector<48x1xf32> to vector<48x48xf32>
    %292 = arith.mulf %287, %291 : vector<48x48xf32>
    %293 = arith.truncf %292 : vector<48x48xf32> to vector<48x48xbf16>
    %cst_110 = arith.constant dense<0.000000e+00> : vector<48x8xf32>
    %294 = tpu.matmul %293, %280, %cst_110 {dimension_numbers = #tpu.dot_dimension_numbers<[1], [0], [0], [1], [0, 0, 1, 1], [], []>} : vector<48x48xbf16>, vector<48x8xbf16>, vector<48x8xf32> -> vector<48x8xf32>
    %295 = tpu.concatenate %234, %254, %274, %294 in 1 : vector<48x8xf32>, vector<48x8xf32>, vector<48x8xf32>, vector<48x8xf32> -> vector<48x32xf32>
    %296 = arith.truncf %295 : vector<48x32xf32> to vector<48x32xbf16>
    %c1_111 = arith.constant 1 : index
    %c0_112 = arith.constant 0 : index
    %c0_113 = arith.constant 0 : index
    %297 = vector.load %arg9[%c1_111, %c0_112, %c0_113] : memref<2x32x32xbf16, #tpu.memory_space<vmem>>, vector<1x32x32xbf16>
    %298 = vector.shape_cast %297 : vector<1x32x32xbf16> to vector<32x32xbf16>
    %cst_114 = arith.constant dense<0.000000e+00> : vector<48x32xf32>
    %299 = tpu.matmul %296, %298, %cst_114 {dimension_numbers = #tpu.dot_dimension_numbers<[1], [0], [0], [1], [0, 0, 1, 1], [], []>} : vector<48x32xbf16>, vector<32x32xbf16>, vector<48x32xf32> -> vector<48x32xf32>
    %300 = arith.addf %182, %299 : vector<48x32xf32>
    %c1_115 = arith.constant 1 : index
    %c0_116 = arith.constant 0 : index
    %c0_117 = arith.constant 0 : index
    %301 = vector.load %arg10[%c1_115, %c0_116, %c0_117] : memref<2x1x32xf32, #tpu.memory_space<vmem>>, vector<1x1x32xf32>
    %302 = vector.shape_cast %301 : vector<1x1x32xf32> to vector<1x32xf32>
    %303 = vector.broadcast %302 : vector<1x32xf32> to vector<48x32xf32>
    %304 = arith.addf %300, %303 : vector<48x32xf32>
    %c1_118 = arith.constant 1 : index
    %c0_119 = arith.constant 0 : index
    %c0_120 = arith.constant 0 : index
    %305 = vector.load %arg11[%c1_118, %c0_119, %c0_120] : memref<2x1x32xf32, #tpu.memory_space<vmem>>, vector<1x1x32xf32>
    %306 = vector.shape_cast %305 : vector<1x1x32xf32> to vector<1x32xf32>
    %c1_121 = arith.constant 1 : index
    %c0_122 = arith.constant 0 : index
    %c0_123 = arith.constant 0 : index
    %307 = vector.load %arg12[%c1_121, %c0_122, %c0_123] : memref<2x1x32xf32, #tpu.memory_space<vmem>>, vector<1x1x32xf32>
    %308 = vector.shape_cast %307 : vector<1x1x32xf32> to vector<1x32xf32>
    %cst_124 = arith.constant dense<0.000000e+00> : vector<48xf32>
    %309 = vector.multi_reduction <add>, %304, %cst_124 [1] : vector<48x32xf32> to vector<48xf32>
    %310 = vector.shape_cast %309 : vector<48xf32> to vector<48x1xf32>
    %cst_125 = arith.constant 3.200000e+01 : f32
    %311 = vector.broadcast %cst_125 : f32 to vector<48x1xf32>
    %312 = arith.divf %310, %311 : vector<48x1xf32>
    %313 = vector.broadcast %312 : vector<48x1xf32> to vector<48x32xf32>
    %314 = arith.subf %304, %313 : vector<48x32xf32>
    %315 = arith.mulf %314, %314 : vector<48x32xf32>
    %cst_126 = arith.constant dense<0.000000e+00> : vector<48xf32>
    %316 = vector.multi_reduction <add>, %315, %cst_126 [1] : vector<48x32xf32> to vector<48xf32>
    %317 = vector.shape_cast %316 : vector<48xf32> to vector<48x1xf32>
    %cst_127 = arith.constant 3.200000e+01 : f32
    %318 = vector.broadcast %cst_127 : f32 to vector<48x1xf32>
    %319 = arith.divf %317, %318 : vector<48x1xf32>
    %cst_128 = arith.constant 9.99999997E-7 : f32
    %320 = vector.broadcast %cst_128 : f32 to vector<48x1xf32>
    %321 = arith.addf %319, %320 : vector<48x1xf32>
    %322 = math.rsqrt %321 : vector<48x1xf32>
    %323 = vector.broadcast %322 : vector<48x1xf32> to vector<48x32xf32>
    %324 = arith.mulf %314, %323 : vector<48x32xf32>
    %325 = vector.broadcast %306 : vector<1x32xf32> to vector<48x32xf32>
    %326 = arith.mulf %324, %325 : vector<48x32xf32>
    %327 = vector.broadcast %308 : vector<1x32xf32> to vector<48x32xf32>
    %328 = arith.addf %326, %327 : vector<48x32xf32>
    %329 = arith.truncf %328 : vector<48x32xf32> to vector<48x32xbf16>
    %c1_129 = arith.constant 1 : index
    %c0_130 = arith.constant 0 : index
    %c0_131 = arith.constant 0 : index
    %330 = vector.load %arg13[%c1_129, %c0_130, %c0_131] : memref<2x32x64xbf16, #tpu.memory_space<vmem>>, vector<1x32x64xbf16>
    %331 = vector.shape_cast %330 : vector<1x32x64xbf16> to vector<32x64xbf16>
    %cst_132 = arith.constant dense<0.000000e+00> : vector<48x64xf32>
    %332 = tpu.matmul %329, %331, %cst_132 {dimension_numbers = #tpu.dot_dimension_numbers<[1], [0], [0], [1], [0, 0, 1, 1], [], []>} : vector<48x32xbf16>, vector<32x64xbf16>, vector<48x64xf32> -> vector<48x64xf32>
    %c1_133 = arith.constant 1 : index
    %c0_134 = arith.constant 0 : index
    %c0_135 = arith.constant 0 : index
    %333 = vector.load %arg14[%c1_133, %c0_134, %c0_135] : memref<2x1x64xf32, #tpu.memory_space<vmem>>, vector<1x1x64xf32>
    %334 = vector.shape_cast %333 : vector<1x1x64xf32> to vector<1x64xf32>
    %335 = vector.broadcast %334 : vector<1x64xf32> to vector<48x64xf32>
    %336 = arith.addf %332, %335 : vector<48x64xf32>
    %337 = arith.mulf %336, %336 : vector<48x64xf32>
    %338 = arith.mulf %336, %337 : vector<48x64xf32>
    %cst_136 = arith.constant 4.471500e-02 : f32
    %339 = vector.broadcast %cst_136 : f32 to vector<48x64xf32>
    %340 = arith.mulf %339, %338 : vector<48x64xf32>
    %341 = arith.addf %336, %340 : vector<48x64xf32>
    %cst_137 = arith.constant 0.797884583 : f32
    %342 = vector.broadcast %cst_137 : f32 to vector<48x64xf32>
    %343 = arith.mulf %342, %341 : vector<48x64xf32>
    %344 = math.tanh %343 : vector<48x64xf32>
    %cst_138 = arith.constant 1.000000e+00 : f32
    %345 = vector.broadcast %cst_138 : f32 to vector<48x64xf32>
    %346 = arith.addf %345, %344 : vector<48x64xf32>
    %cst_139 = arith.constant 5.000000e-01 : f32
    %347 = vector.broadcast %cst_139 : f32 to vector<48x64xf32>
    %348 = arith.mulf %347, %346 : vector<48x64xf32>
    %349 = arith.mulf %336, %348 : vector<48x64xf32>
    %350 = arith.truncf %349 : vector<48x64xf32> to vector<48x64xbf16>
    %c1_140 = arith.constant 1 : index
    %c0_141 = arith.constant 0 : index
    %c0_142 = arith.constant 0 : index
    %351 = vector.load %arg15[%c1_140, %c0_141, %c0_142] : memref<2x64x32xbf16, #tpu.memory_space<vmem>>, vector<1x64x32xbf16>
    %352 = vector.shape_cast %351 : vector<1x64x32xbf16> to vector<64x32xbf16>
    %cst_143 = arith.constant dense<0.000000e+00> : vector<48x32xf32>
    %353 = tpu.matmul %350, %352, %cst_143 {dimension_numbers = #tpu.dot_dimension_numbers<[1], [0], [0], [1], [0, 0, 1, 1], [], []>} : vector<48x64xbf16>, vector<64x32xbf16>, vector<48x32xf32> -> vector<48x32xf32>
    %c1_144 = arith.constant 1 : index
    %c0_145 = arith.constant 0 : index
    %c0_146 = arith.constant 0 : index
    %354 = vector.load %arg16[%c1_144, %c0_145, %c0_146] : memref<2x1x32xf32, #tpu.memory_space<vmem>>, vector<1x1x32xf32>
    %355 = vector.shape_cast %354 : vector<1x1x32xf32> to vector<1x32xf32>
    %356 = vector.broadcast %355 : vector<1x32xf32> to vector<48x32xf32>
    %357 = arith.addf %353, %356 : vector<48x32xf32>
    %358 = arith.addf %304, %357 : vector<48x32xf32>
    %359 = vector.extract_strided_slice %358 {offsets = [0, 0], sizes = [1, 32], strides = [1, 1]} : vector<48x32xf32> to vector<1x32xf32>
    %360 = vector.extract_strided_slice %358 {offsets = [24, 0], sizes = [1, 32], strides = [1, 1]} : vector<48x32xf32> to vector<1x32xf32>
    %361 = tpu.concatenate %359, %360 in 0 : vector<1x32xf32>, vector<1x32xf32> -> vector<2x32xf32>
    %c0_147 = arith.constant 0 : index
    %c0_148 = arith.constant 0 : index
    %362 = vector.load %arg17[%c0_147, %c0_148] : memref<1x32xf32, #tpu.memory_space<vmem>>, vector<1x32xf32>
    %c0_149 = arith.constant 0 : index
    %c0_150 = arith.constant 0 : index
    %363 = vector.load %arg18[%c0_149, %c0_150] : memref<1x32xf32, #tpu.memory_space<vmem>>, vector<1x32xf32>
    %cst_151 = arith.constant dense<0.000000e+00> : vector<2xf32>
    %364 = vector.multi_reduction <add>, %361, %cst_151 [1] : vector<2x32xf32> to vector<2xf32>
    %365 = vector.shape_cast %364 : vector<2xf32> to vector<2x1xf32>
    %cst_152 = arith.constant 3.200000e+01 : f32
    %366 = vector.broadcast %cst_152 : f32 to vector<2x1xf32>
    %367 = arith.divf %365, %366 : vector<2x1xf32>
    %368 = vector.broadcast %367 : vector<2x1xf32> to vector<2x32xf32>
    %369 = arith.subf %361, %368 : vector<2x32xf32>
    %370 = arith.mulf %369, %369 : vector<2x32xf32>
    %cst_153 = arith.constant dense<0.000000e+00> : vector<2xf32>
    %371 = vector.multi_reduction <add>, %370, %cst_153 [1] : vector<2x32xf32> to vector<2xf32>
    %372 = vector.shape_cast %371 : vector<2xf32> to vector<2x1xf32>
    %cst_154 = arith.constant 3.200000e+01 : f32
    %373 = vector.broadcast %cst_154 : f32 to vector<2x1xf32>
    %374 = arith.divf %372, %373 : vector<2x1xf32>
    %cst_155 = arith.constant 9.99999997E-7 : f32
    %375 = vector.broadcast %cst_155 : f32 to vector<2x1xf32>
    %376 = arith.addf %374, %375 : vector<2x1xf32>
    %377 = math.rsqrt %376 : vector<2x1xf32>
    %378 = vector.broadcast %377 : vector<2x1xf32> to vector<2x32xf32>
    %379 = arith.mulf %369, %378 : vector<2x32xf32>
    %380 = vector.broadcast %362 : vector<1x32xf32> to vector<2x32xf32>
    %381 = arith.mulf %379, %380 : vector<2x32xf32>
    %382 = vector.broadcast %363 : vector<1x32xf32> to vector<2x32xf32>
    %383 = arith.addf %381, %382 : vector<2x32xf32>
    %384 = arith.truncf %383 : vector<2x32xf32> to vector<2x32xbf16>
    %c0_156 = arith.constant 0 : index
    %c0_157 = arith.constant 0 : index
    %385 = vector.load %arg19[%c0_156, %c0_157] : memref<32x128xbf16, #tpu.memory_space<vmem>>, vector<32x128xbf16>
    %cst_158 = arith.constant dense<0.000000e+00> : vector<2x128xf32>
    %386 = tpu.matmul %384, %385, %cst_158 {dimension_numbers = #tpu.dot_dimension_numbers<[1], [0], [0], [1], [0, 0, 1, 1], [], []>} : vector<2x32xbf16>, vector<32x128xbf16>, vector<2x128xf32> -> vector<2x128xf32>
    %c0_159 = arith.constant 0 : index
    %c0_160 = arith.constant 0 : index
    %387 = vector.load %arg20[%c0_159, %c0_160] : memref<1x128xf32, #tpu.memory_space<vmem>>, vector<1x128xf32>
    %388 = vector.broadcast %387 : vector<1x128xf32> to vector<2x128xf32>
    %389 = arith.addf %386, %388 : vector<2x128xf32>
    %c0_161 = arith.constant 0 : index
    %c0_162 = arith.constant 0 : index
    %c0_163 = arith.constant 0 : index
    %390 = vector.load %arg21[%c0_161, %c0_162, %c0_163] : memref<1x2x128xf32, #tpu.memory_space<vmem>>, vector<1x2x128xf32>
    %391 = vector.shape_cast %390 : vector<1x2x128xf32> to vector<2x128xf32>
    %392 = vector.shape_cast %389 : vector<2x128xf32> to vector<1x2x128xf32>
    tpu.vector_store %arg21[%c0_161, %c0_162, %c0_163], %392 {strides = array<i32>} : memref<1x2x128xf32, #tpu.memory_space<vmem>>, vector<1x2x128xf32>,
    return
  }
  func.func @transform_0(%arg0: i32) -> (i32, i32, i32) {
    %c0_i32 = arith.constant 0 : i32
    %c0_i32_0 = arith.constant 0 : i32
    %c0_i32_1 = arith.constant 0 : i32
    return %arg0, %c0_i32, %c0_i32_0 : i32, i32, i32
  }
  func.func @transform_1(%arg0: i32) -> (i32, i32) {
    %c0_i32 = arith.constant 0 : i32
    %c0_i32_0 = arith.constant 0 : i32
    %c0_i32_1 = arith.constant 0 : i32
    return %c0_i32, %c0_i32_0 : i32, i32
  }
  func.func @transform_2(%arg0: i32) -> (i32, i32) {
    %c0_i32 = arith.constant 0 : i32
    %c0_i32_0 = arith.constant 0 : i32
    %c0_i32_1 = arith.constant 0 : i32
    return %c0_i32, %c0_i32_0 : i32, i32
  }
  func.func @transform_3(%arg0: i32) -> (i32, i32) {
    %c0_i32 = arith.constant 0 : i32
    %c0_i32_0 = arith.constant 0 : i32
    %c0_i32_1 = arith.constant 0 : i32
    return %c0_i32, %c0_i32_0 : i32, i32
  }
  func.func @transform_4(%arg0: i32) -> (i32, i32, i32) {
    %c0_i32 = arith.constant 0 : i32
    %c0_i32_0 = arith.constant 0 : i32
    %c0_i32_1 = arith.constant 0 : i32
    %c0_i32_2 = arith.constant 0 : i32
    return %c0_i32, %c0_i32_0, %c0_i32_1 : i32, i32, i32
  }
  func.func @transform_5(%arg0: i32) -> (i32, i32, i32) {
    %c0_i32 = arith.constant 0 : i32
    %c0_i32_0 = arith.constant 0 : i32
    %c0_i32_1 = arith.constant 0 : i32
    %c0_i32_2 = arith.constant 0 : i32
    return %c0_i32, %c0_i32_0, %c0_i32_1 : i32, i32, i32
  }
  func.func @transform_6(%arg0: i32) -> (i32, i32, i32) {
    %c0_i32 = arith.constant 0 : i32
    %c0_i32_0 = arith.constant 0 : i32
    %c0_i32_1 = arith.constant 0 : i32
    %c0_i32_2 = arith.constant 0 : i32
    return %c0_i32, %c0_i32_0, %c0_i32_1 : i32, i32, i32
  }
  func.func @transform_7(%arg0: i32) -> (i32, i32, i32) {
    %c0_i32 = arith.constant 0 : i32
    %c0_i32_0 = arith.constant 0 : i32
    %c0_i32_1 = arith.constant 0 : i32
    %c0_i32_2 = arith.constant 0 : i32
    return %c0_i32, %c0_i32_0, %c0_i32_1 : i32, i32, i32
  }
  func.func @transform_8(%arg0: i32) -> (i32, i32, i32) {
    %c0_i32 = arith.constant 0 : i32
    %c0_i32_0 = arith.constant 0 : i32
    %c0_i32_1 = arith.constant 0 : i32
    %c0_i32_2 = arith.constant 0 : i32
    return %c0_i32, %c0_i32_0, %c0_i32_1 : i32, i32, i32
  }
  func.func @transform_9(%arg0: i32) -> (i32, i32, i32) {
    %c0_i32 = arith.constant 0 : i32
    %c0_i32_0 = arith.constant 0 : i32
    %c0_i32_1 = arith.constant 0 : i32
    %c0_i32_2 = arith.constant 0 : i32
    return %c0_i32, %c0_i32_0, %c0_i32_1 : i32, i32, i32
  }
  func.func @transform_10(%arg0: i32) -> (i32, i32, i32) {
    %c0_i32 = arith.constant 0 : i32
    %c0_i32_0 = arith.constant 0 : i32
    %c0_i32_1 = arith.constant 0 : i32
    %c0_i32_2 = arith.constant 0 : i32
    return %c0_i32, %c0_i32_0, %c0_i32_1 : i32, i32, i32
  }
  func.func @transform_11(%arg0: i32) -> (i32, i32, i32) {
    %c0_i32 = arith.constant 0 : i32
    %c0_i32_0 = arith.constant 0 : i32
    %c0_i32_1 = arith.constant 0 : i32
    %c0_i32_2 = arith.constant 0 : i32
    return %c0_i32, %c0_i32_0, %c0_i32_1 : i32, i32, i32
  }
  func.func @transform_12(%arg0: i32) -> (i32, i32, i32) {
    %c0_i32 = arith.constant 0 : i32
    %c0_i32_0 = arith.constant 0 : i32
    %c0_i32_1 = arith.constant 0 : i32
    %c0_i32_2 = arith.constant 0 : i32
    return %c0_i32, %c0_i32_0, %c0_i32_1 : i32, i32, i32
  }
  func.func @transform_13(%arg0: i32) -> (i32, i32, i32) {
    %c0_i32 = arith.constant 0 : i32
    %c0_i32_0 = arith.constant 0 : i32
    %c0_i32_1 = arith.constant 0 : i32
    %c0_i32_2 = arith.constant 0 : i32
    return %c0_i32, %c0_i32_0, %c0_i32_1 : i32, i32, i32
  }
  func.func @transform_14(%arg0: i32) -> (i32, i32, i32) {
    %c0_i32 = arith.constant 0 : i32
    %c0_i32_0 = arith.constant 0 : i32
    %c0_i32_1 = arith.constant 0 : i32
    %c0_i32_2 = arith.constant 0 : i32
    return %c0_i32, %c0_i32_0, %c0_i32_1 : i32, i32, i32
  }
  func.func @transform_15(%arg0: i32) -> (i32, i32, i32) {
    %c0_i32 = arith.constant 0 : i32
    %c0_i32_0 = arith.constant 0 : i32
    %c0_i32_1 = arith.constant 0 : i32
    %c0_i32_2 = arith.constant 0 : i32
    return %c0_i32, %c0_i32_0, %c0_i32_1 : i32, i32, i32
  }
  func.func @transform_16(%arg0: i32) -> (i32, i32) {
    %c0_i32 = arith.constant 0 : i32
    %c0_i32_0 = arith.constant 0 : i32
    %c0_i32_1 = arith.constant 0 : i32
    return %c0_i32, %c0_i32_0 : i32, i32
  }
  func.func @transform_17(%arg0: i32) -> (i32, i32) {
    %c0_i32 = arith.constant 0 : i32
    %c0_i32_0 = arith.constant 0 : i32
    %c0_i32_1 = arith.constant 0 : i32
    return %c0_i32, %c0_i32_0 : i32, i32
  }
  func.func @transform_18(%arg0: i32) -> (i32, i32) {
    %c0_i32 = arith.constant 0 : i32
    %c0_i32_0 = arith.constant 0 : i32
    %c0_i32_1 = arith.constant 0 : i32
    return %c0_i32, %c0_i32_0 : i32, i32
  }
  func.func @transform_19(%arg0: i32) -> (i32, i32) {
    %c0_i32 = arith.constant 0 : i32
    %c0_i32_0 = arith.constant 0 : i32
    %c0_i32_1 = arith.constant 0 : i32
    return %c0_i32, %c0_i32_0 : i32, i32
  }
  func.func @transform_20(%arg0: i32) -> (i32, i32, i32) {
    %c0_i32 = arith.constant 0 : i32
    %c0_i32_0 = arith.constant 0 : i32
    %c0_i32_1 = arith.constant 0 : i32
    return %arg0, %c0_i32, %c0_i32_0 : i32, i32, i32
  }
}

</mosaic_0001>

<llo_original>
// kernel: my_vit_net_forward.1
$region0: #{my_vit_net_forward.1}
  #allocation0 [shape = 'u32[]', space=smem, size = 0x4, offset = 0x4, fixed_abs, tag = 'smem constant byte address 0x4 - core index']
  #allocation1 [shape = 'u32[72,128]{1,0:T(1,128)}', space=vmem, size = 0x9000, scoped, tag = 'internal scratch']
  %s0 = inlined_call_operand.vmem [shape: bf16[1,48,192], index: 0, kind: input, shape index: {}]
  %s1 = inlined_call_operand.vmem [shape: bf16[192,32], index: 1, kind: input, shape index: {}]
  %s2 = inlined_call_operand.vmem [shape: f32[48,32], index: 2, kind: input, shape index: {}]
  %s3 = inlined_call_operand.vmem [shape: f32[48,48], index: 3, kind: input, shape index: {}]
  %s4 = inlined_call_operand.vmem [shape: f32[2,1,32], index: 4, kind: input, shape index: {}]
  %s5 = inlined_call_operand.vmem [shape: f32[2,1,32], index: 5, kind: input, shape index: {}]
  %s6 = inlined_call_operand.vmem [shape: bf16[2,32,96], index: 6, kind: input, shape index: {}]
  %s7 = inlined_call_operand.vmem [shape: f32[2,1,96], index: 7, kind: input, shape index: {}]
  %s8 = inlined_call_operand.vmem [shape: bf16[2,32,32], index: 8, kind: input, shape index: {}]
  %s9 = inlined_call_operand.vmem [shape: f32[2,1,32], index: 9, kind: input, shape index: {}]
  %s10 = inlined_call_operand.vmem [shape: f32[2,1,32], index: 10, kind: input, shape index: {}]
  %s11 = inlined_call_operand.vmem [shape: f32[2,1,32], index: 11, kind: input, shape index: {}]
  %s12 = inlined_call_operand.vmem [shape: bf16[2,32,64], index: 12, kind: input, shape index: {}]
  %s13 = inlined_call_operand.vmem [shape: f32[2,1,64], index: 13, kind: input, shape index: {}]
  %s14 = inlined_call_operand.vmem [shape: bf16[2,64,32], index: 14, kind: input, shape index: {}]
  %s15 = inlined_call_operand.vmem [shape: f32[2,1,32], index: 15, kind: input, shape index: {}]
  %s16 = inlined_call_operand.vmem [shape: f32[1,32], index: 16, kind: input, shape index: {}]
  %s17 = inlined_call_operand.vmem [shape: f32[1,32], index: 17, kind: input, shape index: {}]
  %s18 = inlined_call_operand.vmem [shape: bf16[32,128], index: 18, kind: input, shape index: {}]
  %s19 = inlined_call_operand.vmem [shape: f32[1,128], index: 19, kind: input, shape index: {}]
  %s20 = inlined_call_operand.hbm [shape: f32[1,2,128], index: 20, kind: output, shape index: {}]
  %s21 = sld [smem:[#allocation0]]
  $region90: #{my_vit_net_forward.1} parent=0
    _
  %s23 = ssub.s32 1, %s21
  %s24 = scalar_select 0, %s23, %s21
  $region1: #{my_vit_net_forward.1} parent=0
    #allocation2 [shape = 'u8[1024]{0}', space=vmem, size = 0x400, scoped, tag = 'output window, operand 0, single buffered']
    #allocation3 [shape = 's32[1]{0}', space=sflag, size = 0x4, scoped, tag = 'scoped memory for my_vit_net_forward.1']
    %25 = vsyncpa [#allocation3], 0
    // Predicated region
    $region2: #{my_vit_net_forward.1} parent=1 // pred_check
      _
    $region3: #{my_vit_net_forward.1} parent=1 // pred_check_branch
      %27 = sbr.rel (0) target = $region5
    $region4: #{my_vit_net_forward.1} parent=1 // pred_region
      _
    $region5: #{my_vit_net_forward.1} parent=1 // pred_fallthru
      _
    // Predicated region
    $region6: #{my_vit_net_forward.1} parent=1 // pred_check
      _
    $region7: #{my_vit_net_forward.1} parent=1 // pred_check_branch
      %29 = sbr.rel (0) target = $region9
    $region8: #{my_vit_net_forward.1} parent=1 // pred_region
      _
    $region9: #{my_vit_net_forward.1} parent=1 // pred_fallthru
      _
    // Predicated region
    $region10: #{my_vit_net_forward.1} parent=1 // pred_check
      _
    $region11: #{my_vit_net_forward.1} parent=1 // pred_check_branch
      %31 = sbr.rel (0) target = $region13
    $region12: #{my_vit_net_forward.1} parent=1 // pred_region
      _
    $region13: #{my_vit_net_forward.1} parent=1 // pred_fallthru
      _
    // Predicated region
    $region14: #{my_vit_net_forward.1} parent=1 // pred_check
      _
    $region15: #{my_vit_net_forward.1} parent=1 // pred_check_branch
      %33 = sbr.rel (0) target = $region17
    $region16: #{my_vit_net_forward.1} parent=1 // pred_region
      _
    $region17: #{my_vit_net_forward.1} parent=1 // pred_fallthru
      _
    // Predicated region
    $region18: #{my_vit_net_forward.1} parent=1 // pred_check
      _
    $region19: #{my_vit_net_forward.1} parent=1 // pred_check_branch
      %35 = sbr.rel (0) target = $region21
    $region20: #{my_vit_net_forward.1} parent=1 // pred_region
      _
    $region21: #{my_vit_net_forward.1} parent=1 // pred_fallthru
      _
    // Predicated region
    $region22: #{my_vit_net_forward.1} parent=1 // pred_check
      _
    $region23: #{my_vit_net_forward.1} parent=1 // pred_check_branch
      %37 = sbr.rel (0) target = $region25
    $region24: #{my_vit_net_forward.1} parent=1 // pred_region
      _
    $region25: #{my_vit_net_forward.1} parent=1 // pred_fallthru
      _
    // Predicated region
    $region26: #{my_vit_net_forward.1} parent=1 // pred_check
      _
    $region27: #{my_vit_net_forward.1} parent=1 // pred_check_branch
      %39 = sbr.rel (0) target = $region29
    $region28: #{my_vit_net_forward.1} parent=1 // pred_region
      _
    $region29: #{my_vit_net_forward.1} parent=1 // pred_fallthru
      _
    // Predicated region
    $region30: #{my_vit_net_forward.1} parent=1 // pred_check
      _
    $region31: #{my_vit_net_forward.1} parent=1 // pred_check_branch
      %41 = sbr.rel (0) target = $region33
    $region32: #{my_vit_net_forward.1} parent=1 // pred_region
      _
    $region33: #{my_vit_net_forward.1} parent=1 // pred_fallthru
      _
    // Predicated region
    $region34: #{my_vit_net_forward.1} parent=1 // pred_check
      _
    $region35: #{my_vit_net_forward.1} parent=1 // pred_check_branch
      %43 = sbr.rel (0) target = $region37
    $region36: #{my_vit_net_forward.1} parent=1 // pred_region
      _
    $region37: #{my_vit_net_forward.1} parent=1 // pred_fallthru
      _
    // Predicated region
    $region38: #{my_vit_net_forward.1} parent=1 // pred_check
      _
    $region39: #{my_vit_net_forward.1} parent=1 // pred_check_branch
      %45 = sbr.rel (0) target = $region41
    $region40: #{my_vit_net_forward.1} parent=1 // pred_region
      _
    $region41: #{my_vit_net_forward.1} parent=1 // pred_fallthru
      _
    // Predicated region
    $region42: #{my_vit_net_forward.1} parent=1 // pred_check
      _
    $region43: #{my_vit_net_forward.1} parent=1 // pred_check_branch
      %47 = sbr.rel (0) target = $region45
    $region44: #{my_vit_net_forward.1} parent=1 // pred_region
      _
    $region45: #{my_vit_net_forward.1} parent=1 // pred_fallthru
      _
    // Predicated region
    $region46: #{my_vit_net_forward.1} parent=1 // pred_check
      _
    $region47: #{my_vit_net_forward.1} parent=1 // pred_check_branch
      %49 = sbr.rel (0) target = $region49
    $region48: #{my_vit_net_forward.1} parent=1 // pred_region
      _
    $region49: #{my_vit_net_forward.1} parent=1 // pred_fallthru
      _
    // Predicated region
    $region50: #{my_vit_net_forward.1} parent=1 // pred_check
      _
    $region51: #{my_vit_net_forward.1} parent=1 // pred_check_branch
      %51 = sbr.rel (0) target = $region53
    $region52: #{my_vit_net_forward.1} parent=1 // pred_region
      _
    $region53: #{my_vit_net_forward.1} parent=1 // pred_fallthru
      _
    // Predicated region
    $region54: #{my_vit_net_forward.1} parent=1 // pred_check
      _
    $region55: #{my_vit_net_forward.1} parent=1 // pred_check_branch
      %53 = sbr.rel (0) target = $region57
    $region56: #{my_vit_net_forward.1} parent=1 // pred_region
      _
    $region57: #{my_vit_net_forward.1} parent=1 // pred_fallthru
      _
    // Predicated region
    $region58: #{my_vit_net_forward.1} parent=1 // pred_check
      _
    $region59: #{my_vit_net_forward.1} parent=1 // pred_check_branch
      %55 = sbr.rel (0) target = $region61
    $region60: #{my_vit_net_forward.1} parent=1 // pred_region
      _
    $region61: #{my_vit_net_forward.1} parent=1 // pred_fallthru
      _
    // Predicated region
    $region62: #{my_vit_net_forward.1} parent=1 // pred_check
      _
    $region63: #{my_vit_net_forward.1} parent=1 // pred_check_branch
      %57 = sbr.rel (0) target = $region65
    $region64: #{my_vit_net_forward.1} parent=1 // pred_region
      _
    $region65: #{my_vit_net_forward.1} parent=1 // pred_fallthru
      _
    // Predicated region
    $region66: #{my_vit_net_forward.1} parent=1 // pred_check
      _
    $region67: #{my_vit_net_forward.1} parent=1 // pred_check_branch
      %59 = sbr.rel (0) target = $region69
    $region68: #{my_vit_net_forward.1} parent=1 // pred_region
      _
    $region69: #{my_vit_net_forward.1} parent=1 // pred_fallthru
      _
    // Predicated region
    $region70: #{my_vit_net_forward.1} parent=1 // pred_check
      _
    $region71: #{my_vit_net_forward.1} parent=1 // pred_check_branch
      %61 = sbr.rel (0) target = $region73
    $region72: #{my_vit_net_forward.1} parent=1 // pred_region
      _
    $region73: #{my_vit_net_forward.1} parent=1 // pred_fallthru
      _
    // Predicated region
    $region74: #{my_vit_net_forward.1} parent=1 // pred_check
      _
    $region75: #{my_vit_net_forward.1} parent=1 // pred_check_branch
      %63 = sbr.rel (0) target = $region77
    $region76: #{my_vit_net_forward.1} parent=1 // pred_region
      _
    $region77: #{my_vit_net_forward.1} parent=1 // pred_fallthru
      _
    // Predicated region
    $region78: #{my_vit_net_forward.1} parent=1 // pred_check
      _
    $region79: #{my_vit_net_forward.1} parent=1 // pred_check_branch
      %65 = sbr.rel (0) target = $region81
    $region80: #{my_vit_net_forward.1} parent=1 // pred_region
      _
    $region81: #{my_vit_net_forward.1} parent=1 // pred_fallthru
      _
    %v67 = vld [vmem:[%s0] sm:$0xff]
    %v68 = vld [vmem:[%s0 + $0x8] sm:$0xff]
    %v69 = vld [vmem:[%s0 + $0x10] sm:$0xff]
    %v70 = vld [vmem:[%s0 + $0x18] sm:$0xff]
    %v71 = vld [vmem:[%s0 + $0x20] sm:$0xff]
    %v72 = vld [vmem:[%s0 + $0x28] sm:$0xff]
    %v73 = vld [vmem:[%s1] sm:$0xf]
    %v74 = vld [vmem:[%s1 + $0x4] sm:$0xf]
    %v75 = vld [vmem:[%s1 + $0x8] sm:$0xf]
    %v76 = vld [vmem:[%s1 + $0xc] sm:$0xf]
    %v77 = vld [vmem:[%s1 + $0x10] sm:$0xf]
    %v78 = vld [vmem:[%s1 + $0x14] sm:$0xf]
    %v79 = vld [vmem:[%s1 + $0x18] sm:$0xf]
    %v80 = vld [vmem:[%s1 + $0x1c] sm:$0xf]
    %v81 = vld [vmem:[%s1 + $0x20] sm:$0xf]
    %v82 = vld [vmem:[%s1 + $0x24] sm:$0xf]
    %v83 = vld [vmem:[%s1 + $0x28] sm:$0xf]
    %v84 = vld [vmem:[%s1 + $0x2c] sm:$0xf]
    %v85 = vld [vmem:[%s1 + $0x30] sm:$0xf]
    %v86 = vld [vmem:[%s1 + $0x34] sm:$0xf]
    %v87 = vld [vmem:[%s1 + $0x38] sm:$0xf]
    %v88 = vld [vmem:[%s1 + $0x3c] sm:$0xf]
    %v89 = vld [vmem:[%s1 + $0x40] sm:$0xf]
    %v90 = vld [vmem:[%s1 + $0x44] sm:$0xf]
    %v91 = vld [vmem:[%s1 + $0x48] sm:$0xf]
    %v92 = vld [vmem:[%s1 + $0x4c] sm:$0xf]
    %v93 = vld [vmem:[%s1 + $0x50] sm:$0xf]
    %v94 = vld [vmem:[%s1 + $0x54] sm:$0xf]
    %v95 = vld [vmem:[%s1 + $0x58] sm:$0xf]
    %v96 = vld [vmem:[%s1 + $0x5c] sm:$0xf]
    %v97 = vld [vmem:[%s2] sm:$0xff]
    %v98 = vld [vmem:[%s2 + $0x8] sm:$0xff]
    %v99 = vld [vmem:[%s2 + $0x10] sm:$0xff]
    %v100 = vld [vmem:[%s2 + $0x18] sm:$0xff]
    %v101 = vld [vmem:[%s2 + $0x20] sm:$0xff]
    %v102 = vld [vmem:[%s2 + $0x28] sm:$0xff]
    %v109 = vunpack.c.l.b16 %v67
    %v110 = vunpack.c.h.b16 %v67
    %v111 = vunpack.c.l.b16 %v68
    %v112 = vunpack.c.h.b16 %v68
    %v113 = vunpack.c.l.b16 %v69
    %v114 = vunpack.c.h.b16 %v69
    %v115 = vunpack.c.l.b16 %v70
    %v116 = vunpack.c.h.b16 %v70
    %v117 = vunpack.c.l.b16 %v71
    %v118 = vunpack.c.h.b16 %v71
    %v119 = vunpack.c.l.b16 %v72
    %v120 = vunpack.c.h.b16 %v72
    %v121 = vpack.c.b16 %v111, %v109
    %v122 = vpack.c.b16 %v112, %v110
    %v123 = vpack.c.b16 %v115, %v113
    %v124 = vpack.c.b16 %v116, %v114
    %v125 = vpack.c.b16 %v119, %v117
    %v126 = vpack.c.b16 %v120, %v118
    %v154 = vunpack.c.l.b16 %v73
    %v155 = vunpack.c.l.b16 %v74
    %v156 = vunpack.c.l.b16 %v75
    %v157 = vunpack.c.l.b16 %v76
    %v158 = vunpack.c.l.b16 %v77
    %v159 = vunpack.c.l.b16 %v78
    %v160 = vunpack.c.l.b16 %v79
    %v161 = vunpack.c.l.b16 %v80
    %v162 = vunpack.c.l.b16 %v81
    %v163 = vunpack.c.l.b16 %v82
    %v164 = vunpack.c.l.b16 %v83
    %v165 = vunpack.c.l.b16 %v84
    %v166 = vunpack.c.l.b16 %v85
    %v167 = vunpack.c.l.b16 %v86
    %v168 = vunpack.c.l.b16 %v87
    %v169 = vunpack.c.l.b16 %v88
    %v170 = vunpack.c.l.b16 %v89
    %v171 = vunpack.c.l.b16 %v90
    %v172 = vunpack.c.l.b16 %v91
    %v173 = vunpack.c.l.b16 %v92
    %v174 = vunpack.c.l.b16 %v93
    %v175 = vunpack.c.l.b16 %v94
    %v176 = vunpack.c.l.b16 %v95
    %v177 = vunpack.c.l.b16 %v96
    %v178 = vpack.c.b16 %v155, %v154
    %v179 = vpack.c.b16 %v157, %v156
    %v180 = vpack.c.b16 %v159, %v158
    %v181 = vpack.c.b16 %v161, %v160
    %v182 = vpack.c.b16 %v163, %v162
    %v183 = vpack.c.b16 %v165, %v164
    %v184 = vpack.c.b16 %v167, %v166
    %v185 = vpack.c.b16 %v169, %v168
    %v186 = vpack.c.b16 %v171, %v170
    %v187 = vpack.c.b16 %v173, %v172
    %v188 = vpack.c.b16 %v175, %v174
    %v189 = vpack.c.b16 %v177, %v176
    %vm202 = vcmask 523264
    %v204 = vsel %vm202, %v122, 0
    %v207 = vsel %vm202, %v124, 0
    %v210 = vsel %vm202, %v126, 0
    %212 = vmatpush.bf16.msra.mxu0 %v185
    %213 = vmatpush.bf16.msra.mxu0 %v184
    %214 = vmatpush.bf16.msra.mxu0 %v183
    %215 = vmatpush.bf16.msra.mxu0 %v182
    %216 = vmatpush.bf16.msra.mxu0 %v181
    %217 = vmatpush.bf16.msra.mxu0 %v180
    %218 = vmatpush.bf16.msra.mxu0 %v179
    %219 = vmatpush.bf16.msra.mxu0 %v178
    %220 = vmatmul.bf16.gmra.mxu0 %v121
    %v221 = vpop.f32.mrf.mxu0
    %v222 = vadd.f32 %v97, %v221
    %v223 = vpop.f32.mrf.mxu0
    %v224 = vadd.f32 %v98, %v223
    %225 = vmatmul.bf16.gmra.mxu0 %v123
    %v226 = vpop.f32.mrf.mxu0
    %v227 = vadd.f32 %v99, %v226
    %v228 = vpop.f32.mrf.mxu0
    %v229 = vadd.f32 %v100, %v228
    %230 = vmatmul.bf16.gmra.mxu0 %v125
    %v231 = vpop.f32.mrf.mxu0
    %v232 = vadd.f32 %v101, %v231
    %v233 = vpop.f32.mrf.mxu0
    %v234 = vadd.f32 %v102, %v233
    %235 = vdwg.mxu0
    %236 = vmatpush.bf16.msra.mxu0 0
    %237 = vmatpush.bf16.msra.mxu0 0
    %238 = vmatpush.bf16.msra.mxu0 0
    %239 = vmatpush.bf16.msra.mxu0 0
    %240 = vmatpush.bf16.msra.mxu0 %v189
    %241 = vmatpush.bf16.msra.mxu0 %v188
    %242 = vmatpush.bf16.msra.mxu0 %v187
    %243 = vmatpush.bf16.msra.mxu0 %v186
    %244 = vmatmul.bf16.gmra.mxu0 %v204
    %v245 = vpop.f32.mrf.mxu0
    %v246 = vadd.f32 %v222, %v245
    %v247 = vpop.f32.mrf.mxu0
    %v248 = vadd.f32 %v224, %v247
    %249 = vmatmul.bf16.gmra.mxu0 %v207
    %v250 = vpop.f32.mrf.mxu0
    %v251 = vadd.f32 %v227, %v250
    %v252 = vpop.f32.mrf.mxu0
    %v253 = vadd.f32 %v229, %v252
    %254 = vmatmul.bf16.gmra.mxu0 %v210
    %v255 = vpop.f32.mrf.mxu0
    %v256 = vadd.f32 %v232, %v255
    %v257 = vpop.f32.mrf.mxu0
    %v258 = vadd.f32 %v234, %v257
    %259 = vdwg.mxu0
    %v260 = vld [vmem:[%s3] sm:$0xff]
    %v261 = vld [vmem:[%s3 + $0x8] sm:$0xff]
    %v262 = vld [vmem:[%s3 + $0x10] sm:$0xff]
    %v263 = vld [vmem:[%s3 + $0x18] sm:$0xff]
    %v264 = vld [vmem:[%s3 + $0x20] sm:$0xff]
    %v265 = vld [vmem:[%s3 + $0x28] sm:$0xff]
    %v266 = vld [vmem:[%s4] sm:$0x1]
    %v267 = vld [vmem:[%s5] sm:$0x1]
    %vm268 = vcmask 261120
    %v269 = vsel %vm268, %v246, 0.0
    %270 = vadd.xlane.f32.xlu0 %v269
    %v271 = vpop.xlane.xlu0 %270
    %v272 = vsel %vm268, %v248, 0.0
    %273 = vadd.xlane.f32.xlu0 %v272
    %v274 = vpop.xlane.xlu0 %273
    %v275 = vsel %vm268, %v251, 0.0
    %276 = vadd.xlane.f32.xlu0 %v275
    %v277 = vpop.xlane.xlu0 %276
    %v278 = vsel %vm268, %v253, 0.0
    %279 = vadd.xlane.f32.xlu0 %v278
    %v280 = vpop.xlane.xlu0 %279
    %v281 = vsel %vm268, %v256, 0.0
    %282 = vadd.xlane.f32.xlu0 %v281
    %v283 = vpop.xlane.xlu0 %282
    %v284 = vsel %vm268, %v258, 0.0
    %285 = vadd.xlane.f32.xlu0 %v284
    %v286 = vpop.xlane.xlu0 %285
    %v287 = vrcp.pop 32.0
    %v288 = vmul.f32 32.0, %v287
    %v289 = vsub.f32 1.0, %v288
    %v290 = vmul.f32 %v287, %v289
    %v291 = vadd.f32 %v287, %v290
    %vm292 = vweird.f32 %v287
    %v293 = vsel %vm292, %v287, %v291
    %v294 = vmul.f32 %v271, %v293
    %v295 = vmul.f32 %v274, %v293
    %v296 = vmul.f32 %v277, %v293
    %v297 = vmul.f32 %v280, %v293
    %v298 = vmul.f32 %v283, %v293
    %v299 = vmul.f32 %v286, %v293
    %v300 = vsub.f32 %v246, %v294
    %v301 = vsub.f32 %v248, %v295
    %v302 = vsub.f32 %v251, %v296
    %v303 = vsub.f32 %v253, %v297
    %v304 = vsub.f32 %v256, %v298
    %v305 = vsub.f32 %v258, %v299
    %v306 = vmul.f32 %v300, %v300
    %v307 = vmul.f32 %v301, %v301
    %v308 = vmul.f32 %v302, %v302
    %v309 = vmul.f32 %v303, %v303
    %v310 = vmul.f32 %v304, %v304
    %v311 = vmul.f32 %v305, %v305
    %v312 = vsel %vm268, %v306, 0.0
    %313 = vadd.xlane.f32.xlu0 %v312
    %v314 = vpop.xlane.xlu0 %313
    %v315 = vsel %vm268, %v307, 0.0
    %316 = vadd.xlane.f32.xlu0 %v315
    %v317 = vpop.xlane.xlu0 %316
    %v318 = vsel %vm268, %v308, 0.0
    %319 = vadd.xlane.f32.xlu0 %v318
    %v320 = vpop.xlane.xlu0 %319
    %v321 = vsel %vm268, %v309, 0.0
    %322 = vadd.xlane.f32.xlu0 %v321
    %v323 = vpop.xlane.xlu0 %322
    %v324 = vsel %vm268, %v310, 0.0
    %325 = vadd.xlane.f32.xlu0 %v324
    %v326 = vpop.xlane.xlu0 %325
    %v327 = vsel %vm268, %v311, 0.0
    %328 = vadd.xlane.f32.xlu0 %v327
    %v329 = vpop.xlane.xlu0 %328
    %v330 = vmul.f32 %v314, %v293
    %v331 = vmul.f32 %v317, %v293
    %v332 = vmul.f32 %v320, %v293
    %v333 = vmul.f32 %v323, %v293
    %v334 = vmul.f32 %v326, %v293
    %v335 = vmul.f32 %v329, %v293
    %v336 = vadd.f32 %v330, 1e-06
    %v337 = vadd.f32 %v331, 1e-06
    %v338 = vadd.f32 %v332, 1e-06
    %v339 = vadd.f32 %v333, 1e-06
    %v340 = vadd.f32 %v334, 1e-06
    %v341 = vadd.f32 %v335, 1e-06
    %v342 = vrsqrt.pop %v336
    %v343 = vmul.f32 %v342, %v336
    %v344 = vmul.f32 %v343, %v342
    %v345 = vmul.f32 0.5, %v344
    %v346 = vsub.f32 1.5, %v345
    %v347 = vmul.f32 %v342, %v346
    %vm348 = vweird.f32 %v336
    %vm349 = vweird.f32 %v342
    %vm350 = vmor %vm348, %vm349
    %v351 = vsel %vm350, %v342, %v347
    %v352 = vrsqrt.pop %v337
    %v353 = vmul.f32 %v352, %v337
    %v354 = vmul.f32 %v353, %v352
    %v355 = vmul.f32 0.5, %v354
    %v356 = vsub.f32 1.5, %v355
    %v357 = vmul.f32 %v352, %v356
    %vm358 = vweird.f32 %v337
    %vm359 = vweird.f32 %v352
    %vm360 = vmor %vm358, %vm359
    %v361 = vsel %vm360, %v352, %v357
    %v362 = vrsqrt.pop %v338
    %v363 = vmul.f32 %v362, %v338
    %v364 = vmul.f32 %v363, %v362
    %v365 = vmul.f32 0.5, %v364
    %v366 = vsub.f32 1.5, %v365
    %v367 = vmul.f32 %v362, %v366
    %vm368 = vweird.f32 %v338
    %vm369 = vweird.f32 %v362
    %vm370 = vmor %vm368, %vm369
    %v371 = vsel %vm370, %v362, %v367
    %v372 = vrsqrt.pop %v339
    %v373 = vmul.f32 %v372, %v339
    %v374 = vmul.f32 %v373, %v372
    %v375 = vmul.f32 0.5, %v374
    %v376 = vsub.f32 1.5, %v375
    %v377 = vmul.f32 %v372, %v376
    %vm378 = vweird.f32 %v339
    %vm379 = vweird.f32 %v372
    %vm380 = vmor %vm378, %vm379
    %v381 = vsel %vm380, %v372, %v377
    %v382 = vrsqrt.pop %v340
    %v383 = vmul.f32 %v382, %v340
    %v384 = vmul.f32 %v383, %v382
    %v385 = vmul.f32 0.5, %v384
    %v386 = vsub.f32 1.5, %v385
    %v387 = vmul.f32 %v382, %v386
    %vm388 = vweird.f32 %v340
    %vm389 = vweird.f32 %v382
    %vm390 = vmor %vm388, %vm389
    %v391 = vsel %vm390, %v382, %v387
    %v392 = vrsqrt.pop %v341
    %v393 = vmul.f32 %v392, %v341
    %v394 = vmul.f32 %v393, %v392
    %v395 = vmul.f32 0.5, %v394
    %v396 = vsub.f32 1.5, %v395
    %v397 = vmul.f32 %v392, %v396
    %vm398 = vweird.f32 %v341
    %vm399 = vweird.f32 %v392
    %vm400 = vmor %vm398, %vm399
    %v401 = vsel %vm400, %v392, %v397
    %v402 = vmul.f32 %v300, %v351
    %v403 = vmul.f32 %v301, %v361
    %v404 = vmul.f32 %v302, %v371
    %v405 = vmul.f32 %v303, %v381
    %v406 = vmul.f32 %v304, %v391
    %v407 = vmul.f32 %v305, %v401
    %v409 = vperm.slane %v266, 0
    %v411 = vmul.f32 %v402, %v409
    %v412 = vmul.f32 %v403, %v409
    %v413 = vmul.f32 %v404, %v409
    %v414 = vmul.f32 %v405, %v409
    %v415 = vmul.f32 %v406, %v409
    %v416 = vmul.f32 %v407, %v409
    %v418 = vperm.slane %v267, 0
    %v420 = vadd.f32 %v411, %v418
    %v421 = vadd.f32 %v412, %v418
    %v422 = vadd.f32 %v413, %v418
    %v423 = vadd.f32 %v414, %v418
    %v424 = vadd.f32 %v415, %v418
    %v425 = vadd.f32 %v416, %v418
    %v426 = vpack.c.bf16 %v421, %v420
    %v427 = vpack.c.bf16 %v423, %v422
    %v428 = vpack.c.bf16 %v425, %v424
    %v429 = vld [vmem:[%s6] sm:$0xf]
    %v430 = vld [vmem:[%s6 + $0x4] sm:$0xf]
    %v431 = vld [vmem:[%s6 + $0x8] sm:$0xf]
    %v432 = vld [vmem:[%s6 + $0xc] sm:$0xf]
    %v433 = vld [vmem:[%s7] sm:$0x1]
    %v435 = vperm.slane %v433, 0
    %v441 = vunpack.c.l.b16 %v429
    %v442 = vunpack.c.l.b16 %v430
    %v443 = vunpack.c.l.b16 %v431
    %v444 = vunpack.c.l.b16 %v432
    %v445 = vpack.c.b16 %v442, %v441
    %v446 = vpack.c.b16 %v444, %v443
    %v450 = vsel %vm268, %v426, 0
    %v453 = vsel %vm268, %v427, 0
    %v456 = vsel %vm268, %v428, 0
    %458 = vmatpush.bf16.msra.mxu0 0
    %459 = vmatpush.bf16.msra.mxu0 0
    %460 = vmatpush.bf16.msra.mxu0 0
    %461 = vmatpush.bf16.msra.mxu0 0
    %462 = vmatpush.bf16.msra.mxu0 0
    %463 = vmatpush.bf16.msra.mxu0 0
    %464 = vmatpush.bf16.msra.mxu0 %v446
    %465 = vmatpush.bf16.msra.mxu0 %v445
    %466 = vmatmul.bf16.gmra.mxu0 %v450
    %v467 = vpop.f32.mrf.mxu0
    %v468 = vadd.f32 %v435, %v467
    %v469 = vpop.f32.mrf.mxu0
    %v470 = vadd.f32 %v435, %v469
    %471 = vmatmul.bf16.gmra.mxu0 %v453
    %v472 = vpop.f32.mrf.mxu0
    %v473 = vadd.f32 %v435, %v472
    %v474 = vpop.f32.mrf.mxu0
    %v475 = vadd.f32 %v435, %v474
    %476 = vmatmul.bf16.gmra.mxu0 %v456
    %v477 = vpop.f32.mrf.mxu0
    %v478 = vadd.f32 %v435, %v477
    %v479 = vpop.f32.mrf.mxu0
    %v480 = vadd.f32 %v435, %v479
    %481 = vdwg.mxu0
    %v482 = vpack.c.bf16 %v470, %v468
    %v483 = vpack.c.bf16 %v475, %v473
    %v484 = vpack.c.bf16 %v480, %v478
    %488 = vrot.lane.b32.xlu0 %v482, 96
    %v489 = vpop.permute.xlu0 %488
    %490 = vrot.lane.b32.xlu0 %v483, 96
    %v491 = vpop.permute.xlu0 %490
    %492 = vrot.lane.b32.xlu0 %v484, 96
    %v493 = vpop.permute.xlu0 %492
    %vm494 = vcmask 64512
    %v496 = vsel %vm494, %v482, 0
    %v499 = vsel %vm494, %v483, 0
    %v502 = vsel %vm494, %v484, 0
    %v505 = vsel %vm494, %v489, 0
    %v508 = vsel %vm494, %v491, 0
    %v511 = vsel %vm494, %v493, 0
    %513 = vmatpush.bf16.xpose.msra.mxu0 0
    %514 = vmatpush.bf16.xpose.msra.mxu0 0
    %515 = vmatpush.bf16.xpose.msra.mxu0 0
    %516 = vmatpush.bf16.xpose.msra.mxu0 0
    %517 = vmatpush.bf16.xpose.msra.mxu0 0
    %518 = vmatpush.bf16.xpose.msra.mxu0 %v511
    %519 = vmatpush.bf16.xpose.msra.mxu0 %v508
    %520 = vmatpush.bf16.xpose.msra.mxu0 %v505
    %521 = vmatmul.bf16.gmra.mxu0 %v496
    %v522 = vpop.f32.mrf.mxu0
    %v523 = vadd.f32 %v260, %v522
    %v524 = vpop.f32.mrf.mxu0
    %v525 = vadd.f32 %v261, %v524
    %526 = vmatmul.bf16.gmra.mxu0 %v499
    %v527 = vpop.f32.mrf.mxu0
    %v528 = vadd.f32 %v262, %v527
    %v529 = vpop.f32.mrf.mxu0
    %v530 = vadd.f32 %v263, %v529
    %531 = vmatmul.bf16.gmra.mxu0 %v502
    %v532 = vpop.f32.mrf.mxu0
    %v533 = vadd.f32 %v264, %v532
    %v534 = vpop.f32.mrf.mxu0
    %v535 = vadd.f32 %v265, %v534
    %536 = vdwg.mxu0
    %vm537 = vcmask 392192
    %v538 = vsel %vm537, %v523, -inf
    %539 = vmax.xlane.f32.xlu0 %v538
    %v540 = vpop.xlane.xlu0 %539
    %v541 = vsel %vm537, %v525, -inf
    %542 = vmax.xlane.f32.xlu0 %v541
    %v543 = vpop.xlane.xlu0 %542
    %v544 = vsel %vm537, %v528, -inf
    %545 = vmax.xlane.f32.xlu0 %v544
    %v546 = vpop.xlane.xlu0 %545
    %v547 = vsel %vm537, %v530, -inf
    %548 = vmax.xlane.f32.xlu0 %v547
    %v549 = vpop.xlane.xlu0 %548
    %v550 = vsel %vm537, %v533, -inf
    %551 = vmax.xlane.f32.xlu0 %v550
    %v552 = vpop.xlane.xlu0 %551
    %v553 = vsel %vm537, %v535, -inf
    %554 = vmax.xlane.f32.xlu0 %v553
    %v555 = vpop.xlane.xlu0 %554
    %v556 = vsub.f32 %v523, %v540
    %v557 = vsub.f32 %v525, %v543
    %v558 = vsub.f32 %v528, %v546
    %v559 = vsub.f32 %v530, %v549
    %v560 = vsub.f32 %v533, %v552
    %v561 = vsub.f32 %v535, %v555
    %v562 = vmul.f32 %v556, 1.442695
    %v563 = vpow.pop %v562
    %v564 = vmul.f32 %v557, 1.442695
    %v565 = vpow.pop %v564
    %v566 = vmul.f32 %v558, 1.442695
    %v567 = vpow.pop %v566
    %v568 = vmul.f32 %v559, 1.442695
    %v569 = vpow.pop %v568
    %v570 = vmul.f32 %v560, 1.442695
    %v571 = vpow.pop %v570
    %v572 = vmul.f32 %v561, 1.442695
    %v573 = vpow.pop %v572
    %v574 = vsel %vm537, %v563, 0.0
    %575 = vadd.xlane.f32.xlu0 %v574
    %v576 = vpop.xlane.xlu0 %575
    %v577 = vsel %vm537, %v565, 0.0
    %578 = vadd.xlane.f32.xlu0 %v577
    %v579 = vpop.xlane.xlu0 %578
    %v580 = vsel %vm537, %v567, 0.0
    %581 = vadd.xlane.f32.xlu0 %v580
    %v582 = vpop.xlane.xlu0 %581
    %v583 = vsel %vm537, %v569, 0.0
    %584 = vadd.xlane.f32.xlu0 %v583
    %v585 = vpop.xlane.xlu0 %584
    %v586 = vsel %vm537, %v571, 0.0
    %587 = vadd.xlane.f32.xlu0 %v586
    %v588 = vpop.xlane.xlu0 %587
    %v589 = vsel %vm537, %v573, 0.0
    %590 = vadd.xlane.f32.xlu0 %v589
    %v591 = vpop.xlane.xlu0 %590
    %v592 = vrcp.pop %v576
    %v593 = vrcp.pop %v579
    %v594 = vrcp.pop %v582
    %v595 = vrcp.pop %v585
    %v596 = vrcp.pop %v588
    %v597 = vrcp.pop %v591
    %v598 = vmul.f32 %v563, %v592
    %v599 = vmul.f32 %v565, %v593
    %v600 = vmul.f32 %v567, %v594
    %v601 = vmul.f32 %v569, %v595
    %v602 = vmul.f32 %v571, %v596
    %v603 = vmul.f32 %v573, %v597
    %v604 = vpack.c.bf16 %v599, %v598
    %v605 = vpack.c.bf16 %v601, %v600
    %v606 = vpack.c.bf16 %v603, %v602
    %607 = vrot.lane.b32.xlu0 %v482, 64
    %v608 = vpop.permute.xlu0 %607
    %609 = vrot.lane.b32.xlu0 %v483, 64
    %v610 = vpop.permute.xlu0 %609
    %611 = vrot.lane.b32.xlu0 %v484, 64
    %v612 = vpop.permute.xlu0 %611
    %v617 = vsel %vm537, %v604, 0
    %v620 = vsel %vm537, %v605, 0
    %v623 = vsel %vm537, %v606, 0
    %625 = vmatpush.bf16.msra.mxu0 0
    %626 = vmatpush.bf16.msra.mxu0 0
    %627 = vmatpush.bf16.msra.mxu0 0
    %628 = vmatpush.bf16.msra.mxu0 0
    %629 = vmatpush.bf16.msra.mxu0 0
    %630 = vmatpush.bf16.msra.mxu0 %v612
    %631 = vmatpush.bf16.msra.mxu0 %v610
    %632 = vmatpush.bf16.msra.mxu0 %v608
    %633 = vmatmul.bf16.gmra.mxu0 %v617
    %v634 = vpop.f32.mrf.mxu0
    %v635 = vadd.f32 0.0, %v634
    %v636 = vpop.f32.mrf.mxu0
    %v637 = vadd.f32 0.0, %v636
    %638 = vmatmul.bf16.gmra.mxu0 %v620
    %v639 = vpop.f32.mrf.mxu0
    %v640 = vadd.f32 0.0, %v639
    %v641 = vpop.f32.mrf.mxu0
    %v642 = vadd.f32 0.0, %v641
    %643 = vmatmul.bf16.gmra.mxu0 %v623
    %v644 = vpop.f32.mrf.mxu0
    %v645 = vadd.f32 0.0, %v644
    %v646 = vpop.f32.mrf.mxu0
    %v647 = vadd.f32 0.0, %v646
    %648 = vdwg.mxu0
    %649 = vrot.lane.b32.xlu0 %v482, 120
    %v650 = vpop.permute.xlu0 %649
    %651 = vrot.lane.b32.xlu0 %v483, 120
    %v652 = vpop.permute.xlu0 %651
    %653 = vrot.lane.b32.xlu0 %v484, 120
    %v654 = vpop.permute.xlu0 %653
    %655 = vrot.lane.b32.xlu0 %v482, 88
    %v656 = vpop.permute.xlu0 %655
    %657 = vrot.lane.b32.xlu0 %v483, 88
    %v658 = vpop.permute.xlu0 %657
    %659 = vrot.lane.b32.xlu0 %v484, 88
    %v660 = vpop.permute.xlu0 %659
    %v662 = vsel %vm494, %v650, 0
    %v665 = vsel %vm494, %v652, 0
    %v668 = vsel %vm494, %v654, 0
    %v671 = vsel %vm494, %v656, 0
    %v674 = vsel %vm494, %v658, 0
    %v677 = vsel %vm494, %v660, 0
    %679 = vmatpush.bf16.xpose.msra.mxu0 0
    %680 = vmatpush.bf16.xpose.msra.mxu0 0
    %681 = vmatpush.bf16.xpose.msra.mxu0 0
    %682 = vmatpush.bf16.xpose.msra.mxu0 0
    %683 = vmatpush.bf16.xpose.msra.mxu0 0
    %684 = vmatpush.bf16.xpose.msra.mxu0 %v677
    %685 = vmatpush.bf16.xpose.msra.mxu0 %v674
    %686 = vmatpush.bf16.xpose.msra.mxu0 %v671
    %687 = vmatmul.bf16.gmra.mxu0 %v662
    %v688 = vpop.f32.mrf.mxu0
    %v689 = vadd.f32 %v260, %v688
    %v690 = vpop.f32.mrf.mxu0
    %v691 = vadd.f32 %v261, %v690
    %692 = vmatmul.bf16.gmra.mxu0 %v665
    %v693 = vpop.f32.mrf.mxu0
    %v694 = vadd.f32 %v262, %v693
    %v695 = vpop.f32.mrf.mxu0
    %v696 = vadd.f32 %v263, %v695
    %697 = vmatmul.bf16.gmra.mxu0 %v668
    %v698 = vpop.f32.mrf.mxu0
    %v699 = vadd.f32 %v264, %v698
    %v700 = vpop.f32.mrf.mxu0
    %v701 = vadd.f32 %v265, %v700
    %702 = vdwg.mxu0
    %v703 = vsel %vm537, %v689, -inf
    %704 = vmax.xlane.f32.xlu0 %v703
    %v705 = vpop.xlane.xlu0 %704
    %v706 = vsel %vm537, %v691, -inf
    %707 = vmax.xlane.f32.xlu0 %v706
    %v708 = vpop.xlane.xlu0 %707
    %v709 = vsel %vm537, %v694, -inf
    %710 = vmax.xlane.f32.xlu0 %v709
    %v711 = vpop.xlane.xlu0 %710
    %v712 = vsel %vm537, %v696, -inf
    %713 = vmax.xlane.f32.xlu0 %v712
    %v714 = vpop.xlane.xlu0 %713
    %v715 = vsel %vm537, %v699, -inf
    %716 = vmax.xlane.f32.xlu0 %v715
    %v717 = vpop.xlane.xlu0 %716
    %v718 = vsel %vm537, %v701, -inf
    %719 = vmax.xlane.f32.xlu0 %v718
    %v720 = vpop.xlane.xlu0 %719
    %v721 = vsub.f32 %v689, %v705
    %v722 = vsub.f32 %v691, %v708
    %v723 = vsub.f32 %v694, %v711
    %v724 = vsub.f32 %v696, %v714
    %v725 = vsub.f32 %v699, %v717
    %v726 = vsub.f32 %v701, %v720
    %v727 = vmul.f32 %v721, 1.442695
    %v728 = vpow.pop %v727
    %v729 = vmul.f32 %v722, 1.442695
    %v730 = vpow.pop %v729
    %v731 = vmul.f32 %v723, 1.442695
    %v732 = vpow.pop %v731
    %v733 = vmul.f32 %v724, 1.442695
    %v734 = vpow.pop %v733
    %v735 = vmul.f32 %v725, 1.442695
    %v736 = vpow.pop %v735
    %v737 = vmul.f32 %v726, 1.442695
    %v738 = vpow.pop %v737
    %v739 = vsel %vm537, %v728, 0.0
    %740 = vadd.xlane.f32.xlu0 %v739
    %v741 = vpop.xlane.xlu0 %740
    %v742 = vsel %vm537, %v730, 0.0
    %743 = vadd.xlane.f32.xlu0 %v742
    %v744 = vpop.xlane.xlu0 %743
    %v745 = vsel %vm537, %v732, 0.0
    %746 = vadd.xlane.f32.xlu0 %v745
    %v747 = vpop.xlane.xlu0 %746
    %v748 = vsel %vm537, %v734, 0.0
    %749 = vadd.xlane.f32.xlu0 %v748
    %v750 = vpop.xlane.xlu0 %749
    %v751 = vsel %vm537, %v736, 0.0
    %752 = vadd.xlane.f32.xlu0 %v751
    %v753 = vpop.xlane.xlu0 %752
    %v754 = vsel %vm537, %v738, 0.0
    %755 = vadd.xlane.f32.xlu0 %v754
    %v756 = vpop.xlane.xlu0 %755
    %v757 = vrcp.pop %v741
    %v758 = vrcp.pop %v744
    %v759 = vrcp.pop %v747
    %v760 = vrcp.pop %v750
    %v761 = vrcp.pop %v753
    %v762 = vrcp.pop %v756
    %v763 = vmul.f32 %v728, %v757
    %v764 = vmul.f32 %v730, %v758
    %v765 = vmul.f32 %v732, %v759
    %v766 = vmul.f32 %v734, %v760
    %v767 = vmul.f32 %v736, %v761
    %v768 = vmul.f32 %v738, %v762
    %v769 = vpack.c.bf16 %v764, %v763
    %v770 = vpack.c.bf16 %v766, %v765
    %v771 = vpack.c.bf16 %v768, %v767
    %772 = vrot.lane.b32.xlu0 %v482, 56
    %v773 = vpop.permute.xlu0 %772
    %774 = vrot.lane.b32.xlu0 %v483, 56
    %v775 = vpop.permute.xlu0 %774
    %776 = vrot.lane.b32.xlu0 %v484, 56
    %v777 = vpop.permute.xlu0 %776
    %v782 = vsel %vm537, %v769, 0
    %v785 = vsel %vm537, %v770, 0
    %v788 = vsel %vm537, %v771, 0
    %790 = vmatpush.bf16.msra.mxu0 0
    %791 = vmatpush.bf16.msra.mxu0 0
    %792 = vmatpush.bf16.msra.mxu0 0
    %793 = vmatpush.bf16.msra.mxu0 0
    %794 = vmatpush.bf16.msra.mxu0 0
    %795 = vmatpush.bf16.msra.mxu0 %v777
    %796 = vmatpush.bf16.msra.mxu0 %v775
    %797 = vmatpush.bf16.msra.mxu0 %v773
    %798 = vmatmul.bf16.gmra.mxu0 %v782
    %v799 = vpop.f32.mrf.mxu0
    %v800 = vadd.f32 0.0, %v799
    %v801 = vpop.f32.mrf.mxu0
    %v802 = vadd.f32 0.0, %v801
    %803 = vmatmul.bf16.gmra.mxu0 %v785
    %v804 = vpop.f32.mrf.mxu0
    %v805 = vadd.f32 0.0, %v804
    %v806 = vpop.f32.mrf.mxu0
    %v807 = vadd.f32 0.0, %v806
    %808 = vmatmul.bf16.gmra.mxu0 %v788
    %v809 = vpop.f32.mrf.mxu0
    %v810 = vadd.f32 0.0, %v809
    %v811 = vpop.f32.mrf.mxu0
    %v812 = vadd.f32 0.0, %v811
    %813 = vdwg.mxu0
    %814 = vrot.lane.b32.xlu0 %v482, 112
    %v815 = vpop.permute.xlu0 %814
    %816 = vrot.lane.b32.xlu0 %v483, 112
    %v817 = vpop.permute.xlu0 %816
    %818 = vrot.lane.b32.xlu0 %v484, 112
    %v819 = vpop.permute.xlu0 %818
    %820 = vrot.lane.b32.xlu0 %v482, 80
    %v821 = vpop.permute.xlu0 %820
    %822 = vrot.lane.b32.xlu0 %v483, 80
    %v823 = vpop.permute.xlu0 %822
    %824 = vrot.lane.b32.xlu0 %v484, 80
    %v825 = vpop.permute.xlu0 %824
    %v827 = vsel %vm494, %v815, 0
    %v830 = vsel %vm494, %v817, 0
    %v833 = vsel %vm494, %v819, 0
    %v836 = vsel %vm494, %v821, 0
    %v839 = vsel %vm494, %v823, 0
    %v842 = vsel %vm494, %v825, 0
    %844 = vmatpush.bf16.xpose.msra.mxu0 0
    %845 = vmatpush.bf16.xpose.msra.mxu0 0
    %846 = vmatpush.bf16.xpose.msra.mxu0 0
    %847 = vmatpush.bf16.xpose.msra.mxu0 0
    %848 = vmatpush.bf16.xpose.msra.mxu0 0
    %849 = vmatpush.bf16.xpose.msra.mxu0 %v842
    %850 = vmatpush.bf16.xpose.msra.mxu0 %v839
    %851 = vmatpush.bf16.xpose.msra.mxu0 %v836
    %852 = vmatmul.bf16.gmra.mxu0 %v827
    %v853 = vpop.f32.mrf.mxu0
    %v854 = vadd.f32 %v260, %v853
    %v855 = vpop.f32.mrf.mxu0
    %v856 = vadd.f32 %v261, %v855
    %857 = vmatmul.bf16.gmra.mxu0 %v830
    %v858 = vpop.f32.mrf.mxu0
    %v859 = vadd.f32 %v262, %v858
    %v860 = vpop.f32.mrf.mxu0
    %v861 = vadd.f32 %v263, %v860
    %862 = vmatmul.bf16.gmra.mxu0 %v833
    %v863 = vpop.f32.mrf.mxu0
    %v864 = vadd.f32 %v264, %v863
    %v865 = vpop.f32.mrf.mxu0
    %v866 = vadd.f32 %v265, %v865
    %867 = vdwg.mxu0
    %v868 = vsel %vm537, %v854, -inf
    %869 = vmax.xlane.f32.xlu0 %v868
    %v870 = vpop.xlane.xlu0 %869
    %v871 = vsel %vm537, %v856, -inf
    %872 = vmax.xlane.f32.xlu0 %v871
    %v873 = vpop.xlane.xlu0 %872
    %v874 = vsel %vm537, %v859, -inf
    %875 = vmax.xlane.f32.xlu0 %v874
    %v876 = vpop.xlane.xlu0 %875
    %v877 = vsel %vm537, %v861, -inf
    %878 = vmax.xlane.f32.xlu0 %v877
    %v879 = vpop.xlane.xlu0 %878
    %v880 = vsel %vm537, %v864, -inf
    %881 = vmax.xlane.f32.xlu0 %v880
    %v882 = vpop.xlane.xlu0 %881
    %v883 = vsel %vm537, %v866, -inf
    %884 = vmax.xlane.f32.xlu0 %v883
    %v885 = vpop.xlane.xlu0 %884
    %v886 = vsub.f32 %v854, %v870
    %v887 = vsub.f32 %v856, %v873
    %v888 = vsub.f32 %v859, %v876
    %v889 = vsub.f32 %v861, %v879
    %v890 = vsub.f32 %v864, %v882
    %v891 = vsub.f32 %v866, %v885
    %v892 = vmul.f32 %v886, 1.442695
    %v893 = vpow.pop %v892
    %v894 = vmul.f32 %v887, 1.442695
    %v895 = vpow.pop %v894
    %v896 = vmul.f32 %v888, 1.442695
    %v897 = vpow.pop %v896
    %v898 = vmul.f32 %v889, 1.442695
    %v899 = vpow.pop %v898
    %v900 = vmul.f32 %v890, 1.442695
    %v901 = vpow.pop %v900
    %v902 = vmul.f32 %v891, 1.442695
    %v903 = vpow.pop %v902
    %v904 = vsel %vm537, %v893, 0.0
    %905 = vadd.xlane.f32.xlu0 %v904
    %v906 = vpop.xlane.xlu0 %905
    %v907 = vsel %vm537, %v895, 0.0
    %908 = vadd.xlane.f32.xlu0 %v907
    %v909 = vpop.xlane.xlu0 %908
    %v910 = vsel %vm537, %v897, 0.0
    %911 = vadd.xlane.f32.xlu0 %v910
    %v912 = vpop.xlane.xlu0 %911
    %v913 = vsel %vm537, %v899, 0.0
    %914 = vadd.xlane.f32.xlu0 %v913
    %v915 = vpop.xlane.xlu0 %914
    %v916 = vsel %vm537, %v901, 0.0
    %917 = vadd.xlane.f32.xlu0 %v916
    %v918 = vpop.xlane.xlu0 %917
    %v919 = vsel %vm537, %v903, 0.0
    %920 = vadd.xlane.f32.xlu0 %v919
    %v921 = vpop.xlane.xlu0 %920
    %v922 = vrcp.pop %v906
    %v923 = vrcp.pop %v909
    %v924 = vrcp.pop %v912
    %v925 = vrcp.pop %v915
    %v926 = vrcp.pop %v918
    %v927 = vrcp.pop %v921
    %v928 = vmul.f32 %v893, %v922
    %v929 = vmul.f32 %v895, %v923
    %v930 = vmul.f32 %v897, %v924
    %v931 = vmul.f32 %v899, %v925
    %v932 = vmul.f32 %v901, %v926
    %v933 = vmul.f32 %v903, %v927
    %v934 = vpack.c.bf16 %v929, %v928
    %v935 = vpack.c.bf16 %v931, %v930
    %v936 = vpack.c.bf16 %v933, %v932
    %937 = vrot.lane.b32.xlu0 %v482, 48
    %v938 = vpop.permute.xlu0 %937
    %939 = vrot.lane.b32.xlu0 %v483, 48
    %v940 = vpop.permute.xlu0 %939
    %941 = vrot.lane.b32.xlu0 %v484, 48
    %v942 = vpop.permute.xlu0 %941
    %v947 = vsel %vm537, %v934, 0
    %v950 = vsel %vm537, %v935, 0
    %v953 = vsel %vm537, %v936, 0
    %955 = vmatpush.bf16.msra.mxu0 0
    %956 = vmatpush.bf16.msra.mxu0 0
    %957 = vmatpush.bf16.msra.mxu0 0
    %958 = vmatpush.bf16.msra.mxu0 0
    %959 = vmatpush.bf16.msra.mxu0 0
    %960 = vmatpush.bf16.msra.mxu0 %v942
    %961 = vmatpush.bf16.msra.mxu0 %v940
    %962 = vmatpush.bf16.msra.mxu0 %v938
    %963 = vmatmul.bf16.gmra.mxu0 %v947
    %v964 = vpop.f32.mrf.mxu0
    %v965 = vadd.f32 0.0, %v964
    %v966 = vpop.f32.mrf.mxu0
    %v967 = vadd.f32 0.0, %v966
    %968 = vmatmul.bf16.gmra.mxu0 %v950
    %v969 = vpop.f32.mrf.mxu0
    %v970 = vadd.f32 0.0, %v969
    %v971 = vpop.f32.mrf.mxu0
    %v972 = vadd.f32 0.0, %v971
    %973 = vmatmul.bf16.gmra.mxu0 %v953
    %v974 = vpop.f32.mrf.mxu0
    %v975 = vadd.f32 0.0, %v974
    %v976 = vpop.f32.mrf.mxu0
    %v977 = vadd.f32 0.0, %v976
    %978 = vdwg.mxu0
    %979 = vrot.lane.b32.xlu0 %v482, 104
    %v980 = vpop.permute.xlu0 %979
    %981 = vrot.lane.b32.xlu0 %v483, 104
    %v982 = vpop.permute.xlu0 %981
    %983 = vrot.lane.b32.xlu0 %v484, 104
    %v984 = vpop.permute.xlu0 %983
    %985 = vrot.lane.b32.xlu0 %v482, 72
    %v986 = vpop.permute.xlu0 %985
    %987 = vrot.lane.b32.xlu0 %v483, 72
    %v988 = vpop.permute.xlu0 %987
    %989 = vrot.lane.b32.xlu0 %v484, 72
    %v990 = vpop.permute.xlu0 %989
    %v992 = vsel %vm494, %v980, 0
    %v995 = vsel %vm494, %v982, 0
    %v998 = vsel %vm494, %v984, 0
    %v1001 = vsel %vm494, %v986, 0
    %v1004 = vsel %vm494, %v988, 0
    %v1007 = vsel %vm494, %v990, 0
    %1009 = vmatpush.bf16.xpose.msra.mxu0 0
    %1010 = vmatpush.bf16.xpose.msra.mxu0 0
    %1011 = vmatpush.bf16.xpose.msra.mxu0 0
    %1012 = vmatpush.bf16.xpose.msra.mxu0 0
    %1013 = vmatpush.bf16.xpose.msra.mxu0 0
    %1014 = vmatpush.bf16.xpose.msra.mxu0 %v1007
    %1015 = vmatpush.bf16.xpose.msra.mxu0 %v1004
    %1016 = vmatpush.bf16.xpose.msra.mxu0 %v1001
    %1017 = vmatmul.bf16.gmra.mxu0 %v992
    %v1018 = vpop.f32.mrf.mxu0
    %v1019 = vadd.f32 %v260, %v1018
    %v1020 = vpop.f32.mrf.mxu0
    %v1021 = vadd.f32 %v261, %v1020
    %1022 = vmatmul.bf16.gmra.mxu0 %v995
    %v1023 = vpop.f32.mrf.mxu0
    %v1024 = vadd.f32 %v262, %v1023
    %v1025 = vpop.f32.mrf.mxu0
    %v1026 = vadd.f32 %v263, %v1025
    %1027 = vmatmul.bf16.gmra.mxu0 %v998
    %v1028 = vpop.f32.mrf.mxu0
    %v1029 = vadd.f32 %v264, %v1028
    %v1030 = vpop.f32.mrf.mxu0
    %v1031 = vadd.f32 %v265, %v1030
    %1032 = vdwg.mxu0
    %v1033 = vsel %vm537, %v1019, -inf
    %1034 = vmax.xlane.f32.xlu0 %v1033
    %v1035 = vpop.xlane.xlu0 %1034
    %v1036 = vsel %vm537, %v1021, -inf
    %1037 = vmax.xlane.f32.xlu0 %v1036
    %v1038 = vpop.xlane.xlu0 %1037
    %v1039 = vsel %vm537, %v1024, -inf
    %1040 = vmax.xlane.f32.xlu0 %v1039
    %v1041 = vpop.xlane.xlu0 %1040
    %v1042 = vsel %vm537, %v1026, -inf
    %1043 = vmax.xlane.f32.xlu0 %v1042
    %v1044 = vpop.xlane.xlu0 %1043
    %v1045 = vsel %vm537, %v1029, -inf
    %1046 = vmax.xlane.f32.xlu0 %v1045
    %v1047 = vpop.xlane.xlu0 %1046
    %v1048 = vsel %vm537, %v1031, -inf
    %1049 = vmax.xlane.f32.xlu0 %v1048
    %v1050 = vpop.xlane.xlu0 %1049
    %v1051 = vsub.f32 %v1019, %v1035
    %v1052 = vsub.f32 %v1021, %v1038
    %v1053 = vsub.f32 %v1024, %v1041
    %v1054 = vsub.f32 %v1026, %v1044
    %v1055 = vsub.f32 %v1029, %v1047
    %v1056 = vsub.f32 %v1031, %v1050
    %v1057 = vmul.f32 %v1051, 1.442695
    %v1058 = vpow.pop %v1057
    %v1059 = vmul.f32 %v1052, 1.442695
    %v1060 = vpow.pop %v1059
    %v1061 = vmul.f32 %v1053, 1.442695
    %v1062 = vpow.pop %v1061
    %v1063 = vmul.f32 %v1054, 1.442695
    %v1064 = vpow.pop %v1063
    %v1065 = vmul.f32 %v1055, 1.442695
    %v1066 = vpow.pop %v1065
    %v1067 = vmul.f32 %v1056, 1.442695
    %v1068 = vpow.pop %v1067
    %v1069 = vsel %vm537, %v1058, 0.0
    %1070 = vadd.xlane.f32.xlu0 %v1069
    %v1071 = vpop.xlane.xlu0 %1070
    %v1072 = vsel %vm537, %v1060, 0.0
    %1073 = vadd.xlane.f32.xlu0 %v1072
    %v1074 = vpop.xlane.xlu0 %1073
    %v1075 = vsel %vm537, %v1062, 0.0
    %1076 = vadd.xlane.f32.xlu0 %v1075
    %v1077 = vpop.xlane.xlu0 %1076
    %v1078 = vsel %vm537, %v1064, 0.0
    %1079 = vadd.xlane.f32.xlu0 %v1078
    %v1080 = vpop.xlane.xlu0 %1079
    %v1081 = vsel %vm537, %v1066, 0.0
    %1082 = vadd.xlane.f32.xlu0 %v1081
    %v1083 = vpop.xlane.xlu0 %1082
    %v1084 = vsel %vm537, %v1068, 0.0
    %1085 = vadd.xlane.f32.xlu0 %v1084
    %v1086 = vpop.xlane.xlu0 %1085
    %v1087 = vrcp.pop %v1071
    %v1088 = vrcp.pop %v1074
    %v1089 = vrcp.pop %v1077
    %v1090 = vrcp.pop %v1080
    %v1091 = vrcp.pop %v1083
    %v1092 = vrcp.pop %v1086
    %v1093 = vmul.f32 %v1058, %v1087
    %v1094 = vmul.f32 %v1060, %v1088
    %v1095 = vmul.f32 %v1062, %v1089
    %v1096 = vmul.f32 %v1064, %v1090
    %v1097 = vmul.f32 %v1066, %v1091
    %v1098 = vmul.f32 %v1068, %v1092
    %v1099 = vpack.c.bf16 %v1094, %v1093
    %v1100 = vpack.c.bf16 %v1096, %v1095
    %v1101 = vpack.c.bf16 %v1098, %v1097
    %1102 = vrot.lane.b32.xlu0 %v482, 40
    %v1103 = vpop.permute.xlu0 %1102
    %1104 = vrot.lane.b32.xlu0 %v483, 40
    %v1105 = vpop.permute.xlu0 %1104
    %1106 = vrot.lane.b32.xlu0 %v484, 40
    %v1107 = vpop.permute.xlu0 %1106
    %v1112 = vsel %vm537, %v1099, 0
    %v1115 = vsel %vm537, %v1100, 0
    %v1118 = vsel %vm537, %v1101, 0
    %1120 = vmatpush.bf16.msra.mxu0 0
    %1121 = vmatpush.bf16.msra.mxu0 0
    %1122 = vmatpush.bf16.msra.mxu0 0
    %1123 = vmatpush.bf16.msra.mxu0 0
    %1124 = vmatpush.bf16.msra.mxu0 0
    %1125 = vmatpush.bf16.msra.mxu0 %v1107
    %1126 = vmatpush.bf16.msra.mxu0 %v1105
    %1127 = vmatpush.bf16.msra.mxu0 %v1103
    %1128 = vmatmul.bf16.gmra.mxu0 %v1112
    %v1129 = vpop.f32.mrf.mxu0
    %v1130 = vadd.f32 0.0, %v1129
    %v1131 = vpop.f32.mrf.mxu0
    %v1132 = vadd.f32 0.0, %v1131
    %1133 = vmatmul.bf16.gmra.mxu0 %v1115
    %v1134 = vpop.f32.mrf.mxu0
    %v1135 = vadd.f32 0.0, %v1134
    %v1136 = vpop.f32.mrf.mxu0
    %v1137 = vadd.f32 0.0, %v1136
    %1138 = vmatmul.bf16.gmra.mxu0 %v1118
    %v1139 = vpop.f32.mrf.mxu0
    %v1140 = vadd.f32 0.0, %v1139
    %v1141 = vpop.f32.mrf.mxu0
    %v1142 = vadd.f32 0.0, %v1141
    %1143 = vdwg.mxu0
    %1150 = vrot.lane.b32.xlu0 %v800, 8
    %v1151 = vpop.permute.xlu0 %1150
    %1152 = vrot.lane.b32.xlu0 %v802, 8
    %v1153 = vpop.permute.xlu0 %1152
    %1154 = vrot.lane.b32.xlu0 %v805, 8
    %v1155 = vpop.permute.xlu0 %1154
    %1156 = vrot.lane.b32.xlu0 %v807, 8
    %v1157 = vpop.permute.xlu0 %1156
    %1158 = vrot.lane.b32.xlu0 %v810, 8
    %v1159 = vpop.permute.xlu0 %1158
    %1160 = vrot.lane.b32.xlu0 %v812, 8
    %v1161 = vpop.permute.xlu0 %1160
    %1174 = vrot.lane.b32.xlu0 %v965, 16
    %v1175 = vpop.permute.xlu0 %1174
    %1176 = vrot.lane.b32.xlu0 %v967, 16
    %v1177 = vpop.permute.xlu0 %1176
    %1178 = vrot.lane.b32.xlu0 %v970, 16
    %v1179 = vpop.permute.xlu0 %1178
    %1180 = vrot.lane.b32.xlu0 %v972, 16
    %v1181 = vpop.permute.xlu0 %1180
    %1182 = vrot.lane.b32.xlu0 %v975, 16
    %v1183 = vpop.permute.xlu0 %1182
    %1184 = vrot.lane.b32.xlu0 %v977, 16
    %v1185 = vpop.permute.xlu0 %1184
    %1198 = vrot.lane.b32.xlu0 %v1130, 24
    %v1199 = vpop.permute.xlu0 %1198
    %1200 = vrot.lane.b32.xlu0 %v1132, 24
    %v1201 = vpop.permute.xlu0 %1200
    %1202 = vrot.lane.b32.xlu0 %v1135, 24
    %v1203 = vpop.permute.xlu0 %1202
    %1204 = vrot.lane.b32.xlu0 %v1137, 24
    %v1205 = vpop.permute.xlu0 %1204
    %1206 = vrot.lane.b32.xlu0 %v1140, 24
    %v1207 = vpop.permute.xlu0 %1206
    %1208 = vrot.lane.b32.xlu0 %v1142, 24
    %v1209 = vpop.permute.xlu0 %1208
    %v1216 = vsel %vm494, %v635, %v1151
    %v1217 = vsel %vm494, %v637, %v1153
    %v1218 = vsel %vm494, %v640, %v1155
    %v1219 = vsel %vm494, %v642, %v1157
    %v1220 = vsel %vm494, %v645, %v1159
    %v1221 = vsel %vm494, %v647, %v1161
    %vm1222 = vcmask 130048
    %v1223 = vsel %vm1222, %v1216, %v1175
    %v1224 = vsel %vm1222, %v1217, %v1177
    %v1225 = vsel %vm1222, %v1218, %v1179
    %v1226 = vsel %vm1222, %v1219, %v1181
    %v1227 = vsel %vm1222, %v1220, %v1183
    %v1228 = vsel %vm1222, %v1221, %v1185
    %vm1229 = vcmask 195584
    %v1230 = vsel %vm1229, %v1223, %v1199
    %v1231 = vsel %vm1229, %v1224, %v1201
    %v1232 = vsel %vm1229, %v1225, %v1203
    %v1233 = vsel %vm1229, %v1226, %v1205
    %v1234 = vsel %vm1229, %v1227, %v1207
    %v1235 = vsel %vm1229, %v1228, %v1209
    %v1236 = vpack.c.bf16 %v1231, %v1230
    %v1237 = vpack.c.bf16 %v1233, %v1232
    %v1238 = vpack.c.bf16 %v1235, %v1234
    %v1239 = vld [vmem:[%s8] sm:$0xf]
    %v1240 = vld [vmem:[%s8 + $0x4] sm:$0xf]
    %v1241 = vld [vmem:[%s8 + $0x8] sm:$0xf]
    %v1242 = vld [vmem:[%s8 + $0xc] sm:$0xf]
    %v1247 = vunpack.c.l.b16 %v1239
    %v1248 = vunpack.c.l.b16 %v1240
    %v1249 = vunpack.c.l.b16 %v1241
    %v1250 = vunpack.c.l.b16 %v1242
    %v1251 = vpack.c.b16 %v1248, %v1247
    %v1252 = vpack.c.b16 %v1250, %v1249
    %v1256 = vsel %vm268, %v1236, 0
    %v1259 = vsel %vm268, %v1237, 0
    %v1262 = vsel %vm268, %v1238, 0
    %1264 = vmatpush.bf16.msra.mxu0 0
    %1265 = vmatpush.bf16.msra.mxu0 0
    %1266 = vmatpush.bf16.msra.mxu0 0
    %1267 = vmatpush.bf16.msra.mxu0 0
    %1268 = vmatpush.bf16.msra.mxu0 0
    %1269 = vmatpush.bf16.msra.mxu0 0
    %1270 = vmatpush.bf16.msra.mxu0 %v1252
    %1271 = vmatpush.bf16.msra.mxu0 %v1251
    %1272 = vmatmul.bf16.gmra.mxu0 %v1256
    %v1273 = vpop.f32.mrf.mxu0
    %v1274 = vadd.f32 0.0, %v1273
    %v1275 = vpop.f32.mrf.mxu0
    %v1276 = vadd.f32 0.0, %v1275
    %1277 = vmatmul.bf16.gmra.mxu0 %v1259
    %v1278 = vpop.f32.mrf.mxu0
    %v1279 = vadd.f32 0.0, %v1278
    %v1280 = vpop.f32.mrf.mxu0
    %v1281 = vadd.f32 0.0, %v1280
    %1282 = vmatmul.bf16.gmra.mxu0 %v1262
    %v1283 = vpop.f32.mrf.mxu0
    %v1284 = vadd.f32 0.0, %v1283
    %v1285 = vpop.f32.mrf.mxu0
    %v1286 = vadd.f32 0.0, %v1285
    %1287 = vdwg.mxu0
    %v1288 = vadd.f32 %v246, %v1274
    %v1289 = vadd.f32 %v248, %v1276
    %v1290 = vadd.f32 %v251, %v1279
    %v1291 = vadd.f32 %v253, %v1281
    %v1292 = vadd.f32 %v256, %v1284
    %v1293 = vadd.f32 %v258, %v1286
    %v1294 = vld [vmem:[%s9] sm:$0x1]
    %v1296 = vperm.slane %v1294, 0
    %v1298 = vadd.f32 %v1288, %v1296
    %v1299 = vadd.f32 %v1289, %v1296
    %v1300 = vadd.f32 %v1290, %v1296
    %v1301 = vadd.f32 %v1291, %v1296
    %v1302 = vadd.f32 %v1292, %v1296
    %v1303 = vadd.f32 %v1293, %v1296
    %v1304 = vld [vmem:[%s10] sm:$0x1]
    %v1305 = vld [vmem:[%s11] sm:$0x1]
    %v1306 = vsel %vm268, %v1298, 0.0
    %1307 = vadd.xlane.f32.xlu0 %v1306
    %v1308 = vpop.xlane.xlu0 %1307
    %v1309 = vsel %vm268, %v1299, 0.0
    %1310 = vadd.xlane.f32.xlu0 %v1309
    %v1311 = vpop.xlane.xlu0 %1310
    %v1312 = vsel %vm268, %v1300, 0.0
    %1313 = vadd.xlane.f32.xlu0 %v1312
    %v1314 = vpop.xlane.xlu0 %1313
    %v1315 = vsel %vm268, %v1301, 0.0
    %1316 = vadd.xlane.f32.xlu0 %v1315
    %v1317 = vpop.xlane.xlu0 %1316
    %v1318 = vsel %vm268, %v1302, 0.0
    %1319 = vadd.xlane.f32.xlu0 %v1318
    %v1320 = vpop.xlane.xlu0 %1319
    %v1321 = vsel %vm268, %v1303, 0.0
    %1322 = vadd.xlane.f32.xlu0 %v1321
    %v1323 = vpop.xlane.xlu0 %1322
    %v1324 = vmul.f32 %v1308, %v293
    %v1325 = vmul.f32 %v1311, %v293
    %v1326 = vmul.f32 %v1314, %v293
    %v1327 = vmul.f32 %v1317, %v293
    %v1328 = vmul.f32 %v1320, %v293
    %v1329 = vmul.f32 %v1323, %v293
    %v1330 = vsub.f32 %v1298, %v1324
    %v1331 = vsub.f32 %v1299, %v1325
    %v1332 = vsub.f32 %v1300, %v1326
    %v1333 = vsub.f32 %v1301, %v1327
    %v1334 = vsub.f32 %v1302, %v1328
    %v1335 = vsub.f32 %v1303, %v1329
    %v1336 = vmul.f32 %v1330, %v1330
    %v1337 = vmul.f32 %v1331, %v1331
    %v1338 = vmul.f32 %v1332, %v1332
    %v1339 = vmul.f32 %v1333, %v1333
    %v1340 = vmul.f32 %v1334, %v1334
    %v1341 = vmul.f32 %v1335, %v1335
    %v1342 = vsel %vm268, %v1336, 0.0
    %1343 = vadd.xlane.f32.xlu0 %v1342
    %v1344 = vpop.xlane.xlu0 %1343
    %v1345 = vsel %vm268, %v1337, 0.0
    %1346 = vadd.xlane.f32.xlu0 %v1345
    %v1347 = vpop.xlane.xlu0 %1346
    %v1348 = vsel %vm268, %v1338, 0.0
    %1349 = vadd.xlane.f32.xlu0 %v1348
    %v1350 = vpop.xlane.xlu0 %1349
    %v1351 = vsel %vm268, %v1339, 0.0
    %1352 = vadd.xlane.f32.xlu0 %v1351
    %v1353 = vpop.xlane.xlu0 %1352
    %v1354 = vsel %vm268, %v1340, 0.0
    %1355 = vadd.xlane.f32.xlu0 %v1354
    %v1356 = vpop.xlane.xlu0 %1355
    %v1357 = vsel %vm268, %v1341, 0.0
    %1358 = vadd.xlane.f32.xlu0 %v1357
    %v1359 = vpop.xlane.xlu0 %1358
    %v1360 = vmul.f32 %v1344, %v293
    %v1361 = vmul.f32 %v1347, %v293
    %v1362 = vmul.f32 %v1350, %v293
    %v1363 = vmul.f32 %v1353, %v293
    %v1364 = vmul.f32 %v1356, %v293
    %v1365 = vmul.f32 %v1359, %v293
    %v1366 = vadd.f32 %v1360, 1e-06
    %v1367 = vadd.f32 %v1361, 1e-06
    %v1368 = vadd.f32 %v1362, 1e-06
    %v1369 = vadd.f32 %v1363, 1e-06
    %v1370 = vadd.f32 %v1364, 1e-06
    %v1371 = vadd.f32 %v1365, 1e-06
    %v1372 = vrsqrt.pop %v1366
    %v1373 = vmul.f32 %v1372, %v1366
    %v1374 = vmul.f32 %v1373, %v1372
    %v1375 = vmul.f32 0.5, %v1374
    %v1376 = vsub.f32 1.5, %v1375
    %v1377 = vmul.f32 %v1372, %v1376
    %vm1378 = vweird.f32 %v1366
    %vm1379 = vweird.f32 %v1372
    %vm1380 = vmor %vm1378, %vm1379
    %v1381 = vsel %vm1380, %v1372, %v1377
    %v1382 = vrsqrt.pop %v1367
    %v1383 = vmul.f32 %v1382, %v1367
    %v1384 = vmul.f32 %v1383, %v1382
    %v1385 = vmul.f32 0.5, %v1384
    %v1386 = vsub.f32 1.5, %v1385
    %v1387 = vmul.f32 %v1382, %v1386
    %vm1388 = vweird.f32 %v1367
    %vm1389 = vweird.f32 %v1382
    %vm1390 = vmor %vm1388, %vm1389
    %v1391 = vsel %vm1390, %v1382, %v1387
    %v1392 = vrsqrt.pop %v1368
    %v1393 = vmul.f32 %v1392, %v1368
    %v1394 = vmul.f32 %v1393, %v1392
    %v1395 = vmul.f32 0.5, %v1394
    %v1396 = vsub.f32 1.5, %v1395
    %v1397 = vmul.f32 %v1392, %v1396
    %vm1398 = vweird.f32 %v1368
    %vm1399 = vweird.f32 %v1392
    %vm1400 = vmor %vm1398, %vm1399
    %v1401 = vsel %vm1400, %v1392, %v1397
    %v1402 = vrsqrt.pop %v1369
    %v1403 = vmul.f32 %v1402, %v1369
    %v1404 = vmul.f32 %v1403, %v1402
    %v1405 = vmul.f32 0.5, %v1404
    %v1406 = vsub.f32 1.5, %v1405
    %v1407 = vmul.f32 %v1402, %v1406
    %vm1408 = vweird.f32 %v1369
    %vm1409 = vweird.f32 %v1402
    %vm1410 = vmor %vm1408, %vm1409
    %v1411 = vsel %vm1410, %v1402, %v1407
    %v1412 = vrsqrt.pop %v1370
    %v1413 = vmul.f32 %v1412, %v1370
    %v1414 = vmul.f32 %v1413, %v1412
    %v1415 = vmul.f32 0.5, %v1414
    %v1416 = vsub.f32 1.5, %v1415
    %v1417 = vmul.f32 %v1412, %v1416
    %vm1418 = vweird.f32 %v1370
    %vm1419 = vweird.f32 %v1412
    %vm1420 = vmor %vm1418, %vm1419
    %v1421 = vsel %vm1420, %v1412, %v1417
    %v1422 = vrsqrt.pop %v1371
    %v1423 = vmul.f32 %v1422, %v1371
    %v1424 = vmul.f32 %v1423, %v1422
    %v1425 = vmul.f32 0.5, %v1424
    %v1426 = vsub.f32 1.5, %v1425
    %v1427 = vmul.f32 %v1422, %v1426
    %vm1428 = vweird.f32 %v1371
    %vm1429 = vweird.f32 %v1422
    %vm1430 = vmor %vm1428, %vm1429
    %v1431 = vsel %vm1430, %v1422, %v1427
    %v1432 = vmul.f32 %v1330, %v1381
    %v1433 = vmul.f32 %v1331, %v1391
    %v1434 = vmul.f32 %v1332, %v1401
    %v1435 = vmul.f32 %v1333, %v1411
    %v1436 = vmul.f32 %v1334, %v1421
    %v1437 = vmul.f32 %v1335, %v1431
    %v1439 = vperm.slane %v1304, 0
    %v1441 = vmul.f32 %v1432, %v1439
    %v1442 = vmul.f32 %v1433, %v1439
    %v1443 = vmul.f32 %v1434, %v1439
    %v1444 = vmul.f32 %v1435, %v1439
    %v1445 = vmul.f32 %v1436, %v1439
    %v1446 = vmul.f32 %v1437, %v1439
    %v1448 = vperm.slane %v1305, 0
    %v1450 = vadd.f32 %v1441, %v1448
    %v1451 = vadd.f32 %v1442, %v1448
    %v1452 = vadd.f32 %v1443, %v1448
    %v1453 = vadd.f32 %v1444, %v1448
    %v1454 = vadd.f32 %v1445, %v1448
    %v1455 = vadd.f32 %v1446, %v1448
    %v1456 = vpack.c.bf16 %v1451, %v1450
    %v1457 = vpack.c.bf16 %v1453, %v1452
    %v1458 = vpack.c.bf16 %v1455, %v1454
    %v1459 = vld [vmem:[%s12] sm:$0xf]
    %v1460 = vld [vmem:[%s12 + $0x4] sm:$0xf]
    %v1461 = vld [vmem:[%s12 + $0x8] sm:$0xf]
    %v1462 = vld [vmem:[%s12 + $0xc] sm:$0xf]
    %v1463 = vld [vmem:[%s13] sm:$0x1]
    %v1465 = vperm.slane %v1463, 0
    %v1471 = vunpack.c.l.b16 %v1459
    %v1472 = vunpack.c.l.b16 %v1460
    %v1473 = vunpack.c.l.b16 %v1461
    %v1474 = vunpack.c.l.b16 %v1462
    %v1475 = vpack.c.b16 %v1472, %v1471
    %v1476 = vpack.c.b16 %v1474, %v1473
    %v1480 = vsel %vm268, %v1456, 0
    %v1483 = vsel %vm268, %v1457, 0
    %v1486 = vsel %vm268, %v1458, 0
    %1488 = vmatpush.bf16.msra.mxu0 0
    %1489 = vmatpush.bf16.msra.mxu0 0
    %1490 = vmatpush.bf16.msra.mxu0 0
    %1491 = vmatpush.bf16.msra.mxu0 0
    %1492 = vmatpush.bf16.msra.mxu0 0
    %1493 = vmatpush.bf16.msra.mxu0 0
    %1494 = vmatpush.bf16.msra.mxu0 %v1476
    %1495 = vmatpush.bf16.msra.mxu0 %v1475
    %1496 = vmatmul.bf16.gmra.mxu0 %v1480
    %v1497 = vpop.f32.mrf.mxu0
    %v1498 = vadd.f32 %v1465, %v1497
    %v1499 = vpop.f32.mrf.mxu0
    %v1500 = vadd.f32 %v1465, %v1499
    %1501 = vmatmul.bf16.gmra.mxu0 %v1483
    %v1502 = vpop.f32.mrf.mxu0
    %v1503 = vadd.f32 %v1465, %v1502
    %v1504 = vpop.f32.mrf.mxu0
    %v1505 = vadd.f32 %v1465, %v1504
    %1506 = vmatmul.bf16.gmra.mxu0 %v1486
    %v1507 = vpop.f32.mrf.mxu0
    %v1508 = vadd.f32 %v1465, %v1507
    %v1509 = vpop.f32.mrf.mxu0
    %v1510 = vadd.f32 %v1465, %v1509
    %1511 = vdwg.mxu0
    %v1512 = vmul.f32 %v1498, %v1498
    %v1513 = vmul.f32 %v1500, %v1500
    %v1514 = vmul.f32 %v1503, %v1503
    %v1515 = vmul.f32 %v1505, %v1505
    %v1516 = vmul.f32 %v1508, %v1508
    %v1517 = vmul.f32 %v1510, %v1510
    %v1518 = vmul.f32 %v1498, %v1512
    %v1519 = vmul.f32 %v1500, %v1513
    %v1520 = vmul.f32 %v1503, %v1514
    %v1521 = vmul.f32 %v1505, %v1515
    %v1522 = vmul.f32 %v1508, %v1516
    %v1523 = vmul.f32 %v1510, %v1517
    %v1524 = vmul.f32 %v1518, 0.044715
    %v1525 = vmul.f32 %v1519, 0.044715
    %v1526 = vmul.f32 %v1520, 0.044715
    %v1527 = vmul.f32 %v1521, 0.044715
    %v1528 = vmul.f32 %v1522, 0.044715
    %v1529 = vmul.f32 %v1523, 0.044715
    %v1530 = vadd.f32 %v1498, %v1524
    %v1531 = vadd.f32 %v1500, %v1525
    %v1532 = vadd.f32 %v1503, %v1526
    %v1533 = vadd.f32 %v1505, %v1527
    %v1534 = vadd.f32 %v1508, %v1528
    %v1535 = vadd.f32 %v1510, %v1529
    %v1536 = vmul.f32 %v1530, 0.7978846
    %v1537 = vmul.f32 %v1531, 0.7978846
    %v1538 = vmul.f32 %v1532, 0.7978846
    %v1539 = vmul.f32 %v1533, 0.7978846
    %v1540 = vmul.f32 %v1534, 0.7978846
    %v1541 = vmul.f32 %v1535, 0.7978846
    %v1542 = vtanh.pop %v1536
    %v1543 = vtanh.pop %v1537
    %v1544 = vtanh.pop %v1538
    %v1545 = vtanh.pop %v1539
    %v1546 = vtanh.pop %v1540
    %v1547 = vtanh.pop %v1541
    %v1548 = vadd.f32 %v1542, 1.0
    %v1549 = vadd.f32 %v1543, 1.0
    %v1550 = vadd.f32 %v1544, 1.0
    %v1551 = vadd.f32 %v1545, 1.0
    %v1552 = vadd.f32 %v1546, 1.0
    %v1553 = vadd.f32 %v1547, 1.0
    %v1554 = vmul.f32 %v1548, 0.5
    %v1555 = vmul.f32 %v1549, 0.5
    %v1556 = vmul.f32 %v1550, 0.5
    %v1557 = vmul.f32 %v1551, 0.5
    %v1558 = vmul.f32 %v1552, 0.5
    %v1559 = vmul.f32 %v1553, 0.5
    %v1560 = vmul.f32 %v1498, %v1554
    %v1561 = vmul.f32 %v1500, %v1555
    %v1562 = vmul.f32 %v1503, %v1556
    %v1563 = vmul.f32 %v1505, %v1557
    %v1564 = vmul.f32 %v1508, %v1558
    %v1565 = vmul.f32 %v1510, %v1559
    %v1566 = vpack.c.bf16 %v1561, %v1560
    %v1567 = vpack.c.bf16 %v1563, %v1562
    %v1568 = vpack.c.bf16 %v1565, %v1564
    %v1569 = vld [vmem:[%s14] sm:$0xf]
    %v1570 = vld [vmem:[%s14 + $0x4] sm:$0xf]
    %v1571 = vld [vmem:[%s14 + $0x8] sm:$0xf]
    %v1572 = vld [vmem:[%s14 + $0xc] sm:$0xf]
    %v1573 = vld [vmem:[%s14 + $0x10] sm:$0xf]
    %v1574 = vld [vmem:[%s14 + $0x14] sm:$0xf]
    %v1575 = vld [vmem:[%s14 + $0x18] sm:$0xf]
    %v1576 = vld [vmem:[%s14 + $0x1c] sm:$0xf]
    %v1577 = vld [vmem:[%s15] sm:$0x1]
    %v1579 = vperm.slane %v1577, 0
    %v1589 = vunpack.c.l.b16 %v1569
    %v1590 = vunpack.c.l.b16 %v1570
    %v1591 = vunpack.c.l.b16 %v1571
    %v1592 = vunpack.c.l.b16 %v1572
    %v1593 = vunpack.c.l.b16 %v1573
    %v1594 = vunpack.c.l.b16 %v1574
    %v1595 = vunpack.c.l.b16 %v1575
    %v1596 = vunpack.c.l.b16 %v1576
    %v1597 = vpack.c.b16 %v1590, %v1589
    %v1598 = vpack.c.b16 %v1592, %v1591
    %v1599 = vpack.c.b16 %v1594, %v1593
    %v1600 = vpack.c.b16 %v1596, %v1595
    %v1606 = vsel %vm202, %v1566, 0
    %v1609 = vsel %vm202, %v1567, 0
    %v1612 = vsel %vm202, %v1568, 0
    %1614 = vmatpush.bf16.msra.mxu0 0
    %1615 = vmatpush.bf16.msra.mxu0 0
    %1616 = vmatpush.bf16.msra.mxu0 0
    %1617 = vmatpush.bf16.msra.mxu0 0
    %1618 = vmatpush.bf16.msra.mxu0 %v1600
    %1619 = vmatpush.bf16.msra.mxu0 %v1599
    %1620 = vmatpush.bf16.msra.mxu0 %v1598
    %1621 = vmatpush.bf16.msra.mxu0 %v1597
    %1622 = vmatmul.bf16.gmra.mxu0 %v1606
    %v1623 = vpop.f32.mrf.mxu0
    %v1624 = vadd.f32 %v1579, %v1623
    %v1625 = vpop.f32.mrf.mxu0
    %v1626 = vadd.f32 %v1579, %v1625
    %1627 = vmatmul.bf16.gmra.mxu0 %v1609
    %v1628 = vpop.f32.mrf.mxu0
    %v1629 = vadd.f32 %v1579, %v1628
    %v1630 = vpop.f32.mrf.mxu0
    %v1631 = vadd.f32 %v1579, %v1630
    %1632 = vmatmul.bf16.gmra.mxu0 %v1612
    %v1633 = vpop.f32.mrf.mxu0
    %v1634 = vadd.f32 %v1579, %v1633
    %v1635 = vpop.f32.mrf.mxu0
    %v1636 = vadd.f32 %v1579, %v1635
    %1637 = vdwg.mxu0
    %v1638 = vadd.f32 %v1298, %v1624
    %v1639 = vadd.f32 %v1299, %v1626
    %v1640 = vadd.f32 %v1300, %v1629
    %v1641 = vadd.f32 %v1301, %v1631
    %v1642 = vadd.f32 %v1302, %v1634
    %v1643 = vadd.f32 %v1303, %v1636
    %s1644 = scalar_lea.vmem %s4, 1
    %v1645 = vld [vmem:[%s1644] sm:$0x1]
    %s1646 = scalar_lea.vmem %s5, 1
    %v1647 = vld [vmem:[%s1646] sm:$0x1]
    %v1648 = vsel %vm268, %v1638, 0.0
    %1649 = vadd.xlane.f32.xlu0 %v1648
    %v1650 = vpop.xlane.xlu0 %1649
    %v1651 = vsel %vm268, %v1639, 0.0
    %1652 = vadd.xlane.f32.xlu0 %v1651
    %v1653 = vpop.xlane.xlu0 %1652
    %v1654 = vsel %vm268, %v1640, 0.0
    %1655 = vadd.xlane.f32.xlu0 %v1654
    %v1656 = vpop.xlane.xlu0 %1655
    %v1657 = vsel %vm268, %v1641, 0.0
    %1658 = vadd.xlane.f32.xlu0 %v1657
    %v1659 = vpop.xlane.xlu0 %1658
    %v1660 = vsel %vm268, %v1642, 0.0
    %1661 = vadd.xlane.f32.xlu0 %v1660
    %v1662 = vpop.xlane.xlu0 %1661
    %v1663 = vsel %vm268, %v1643, 0.0
    %1664 = vadd.xlane.f32.xlu0 %v1663
    %v1665 = vpop.xlane.xlu0 %1664
    %v1666 = vmul.f32 %v1650, %v293
    %v1667 = vmul.f32 %v1653, %v293
    %v1668 = vmul.f32 %v1656, %v293
    %v1669 = vmul.f32 %v1659, %v293
    %v1670 = vmul.f32 %v1662, %v293
    %v1671 = vmul.f32 %v1665, %v293
    %v1672 = vsub.f32 %v1638, %v1666
    %v1673 = vsub.f32 %v1639, %v1667
    %v1674 = vsub.f32 %v1640, %v1668
    %v1675 = vsub.f32 %v1641, %v1669
    %v1676 = vsub.f32 %v1642, %v1670
    %v1677 = vsub.f32 %v1643, %v1671
    %v1678 = vmul.f32 %v1672, %v1672
    %v1679 = vmul.f32 %v1673, %v1673
    %v1680 = vmul.f32 %v1674, %v1674
    %v1681 = vmul.f32 %v1675, %v1675
    %v1682 = vmul.f32 %v1676, %v1676
    %v1683 = vmul.f32 %v1677, %v1677
    %v1684 = vsel %vm268, %v1678, 0.0
    %1685 = vadd.xlane.f32.xlu0 %v1684
    %v1686 = vpop.xlane.xlu0 %1685
    %v1687 = vsel %vm268, %v1679, 0.0
    %1688 = vadd.xlane.f32.xlu0 %v1687
    %v1689 = vpop.xlane.xlu0 %1688
    %v1690 = vsel %vm268, %v1680, 0.0
    %1691 = vadd.xlane.f32.xlu0 %v1690
    %v1692 = vpop.xlane.xlu0 %1691
    %v1693 = vsel %vm268, %v1681, 0.0
    %1694 = vadd.xlane.f32.xlu0 %v1693
    %v1695 = vpop.xlane.xlu0 %1694
    %v1696 = vsel %vm268, %v1682, 0.0
    %1697 = vadd.xlane.f32.xlu0 %v1696
    %v1698 = vpop.xlane.xlu0 %1697
    %v1699 = vsel %vm268, %v1683, 0.0
    %1700 = vadd.xlane.f32.xlu0 %v1699
    %v1701 = vpop.xlane.xlu0 %1700
    %v1702 = vmul.f32 %v1686, %v293
    %v1703 = vmul.f32 %v1689, %v293
    %v1704 = vmul.f32 %v1692, %v293
    %v1705 = vmul.f32 %v1695, %v293
    %v1706 = vmul.f32 %v1698, %v293
    %v1707 = vmul.f32 %v1701, %v293
    %v1708 = vadd.f32 %v1702, 1e-06
    %v1709 = vadd.f32 %v1703, 1e-06
    %v1710 = vadd.f32 %v1704, 1e-06
    %v1711 = vadd.f32 %v1705, 1e-06
    %v1712 = vadd.f32 %v1706, 1e-06
    %v1713 = vadd.f32 %v1707, 1e-06
    %v1714 = vrsqrt.pop %v1708
    %v1715 = vmul.f32 %v1714, %v1708
    %v1716 = vmul.f32 %v1715, %v1714
    %v1717 = vmul.f32 0.5, %v1716
    %v1718 = vsub.f32 1.5, %v1717
    %v1719 = vmul.f32 %v1714, %v1718
    %vm1720 = vweird.f32 %v1708
    %vm1721 = vweird.f32 %v1714
    %vm1722 = vmor %vm1720, %vm1721
    %v1723 = vsel %vm1722, %v1714, %v1719
    %v1724 = vrsqrt.pop %v1709
    %v1725 = vmul.f32 %v1724, %v1709
    %v1726 = vmul.f32 %v1725, %v1724
    %v1727 = vmul.f32 0.5, %v1726
    %v1728 = vsub.f32 1.5, %v1727
    %v1729 = vmul.f32 %v1724, %v1728
    %vm1730 = vweird.f32 %v1709
    %vm1731 = vweird.f32 %v1724
    %vm1732 = vmor %vm1730, %vm1731
    %v1733 = vsel %vm1732, %v1724, %v1729
    %v1734 = vrsqrt.pop %v1710
    %v1735 = vmul.f32 %v1734, %v1710
    %v1736 = vmul.f32 %v1735, %v1734
    %v1737 = vmul.f32 0.5, %v1736
    %v1738 = vsub.f32 1.5, %v1737
    %v1739 = vmul.f32 %v1734, %v1738
    %vm1740 = vweird.f32 %v1710
    %vm1741 = vweird.f32 %v1734
    %vm1742 = vmor %vm1740, %vm1741
    %v1743 = vsel %vm1742, %v1734, %v1739
    %v1744 = vrsqrt.pop %v1711
    %v1745 = vmul.f32 %v1744, %v1711
    %v1746 = vmul.f32 %v1745, %v1744
    %v1747 = vmul.f32 0.5, %v1746
    %v1748 = vsub.f32 1.5, %v1747
    %v1749 = vmul.f32 %v1744, %v1748
    %vm1750 = vweird.f32 %v1711
    %vm1751 = vweird.f32 %v1744
    %vm1752 = vmor %vm1750, %vm1751
    %v1753 = vsel %vm1752, %v1744, %v1749
    %v1754 = vrsqrt.pop %v1712
    %v1755 = vmul.f32 %v1754, %v1712
    %v1756 = vmul.f32 %v1755, %v1754
    %v1757 = vmul.f32 0.5, %v1756
    %v1758 = vsub.f32 1.5, %v1757
    %v1759 = vmul.f32 %v1754, %v1758
    %vm1760 = vweird.f32 %v1712
    %vm1761 = vweird.f32 %v1754
    %vm1762 = vmor %vm1760, %vm1761
    %v1763 = vsel %vm1762, %v1754, %v1759
    %v1764 = vrsqrt.pop %v1713
    %v1765 = vmul.f32 %v1764, %v1713
    %v1766 = vmul.f32 %v1765, %v1764
    %v1767 = vmul.f32 0.5, %v1766
    %v1768 = vsub.f32 1.5, %v1767
    %v1769 = vmul.f32 %v1764, %v1768
    %vm1770 = vweird.f32 %v1713
    %vm1771 = vweird.f32 %v1764
    %vm1772 = vmor %vm1770, %vm1771
    %v1773 = vsel %vm1772, %v1764, %v1769
    %v1774 = vmul.f32 %v1672, %v1723
    %v1775 = vmul.f32 %v1673, %v1733
    %v1776 = vmul.f32 %v1674, %v1743
    %v1777 = vmul.f32 %v1675, %v1753
    %v1778 = vmul.f32 %v1676, %v1763
    %v1779 = vmul.f32 %v1677, %v1773
    %v1781 = vperm.slane %v1645, 0
    %v1783 = vmul.f32 %v1774, %v1781
    %v1784 = vmul.f32 %v1775, %v1781
    %v1785 = vmul.f32 %v1776, %v1781
    %v1786 = vmul.f32 %v1777, %v1781
    %v1787 = vmul.f32 %v1778, %v1781
    %v1788 = vmul.f32 %v1779, %v1781
    %v1790 = vperm.slane %v1647, 0
    %v1792 = vadd.f32 %v1783, %v1790
    %v1793 = vadd.f32 %v1784, %v1790
    %v1794 = vadd.f32 %v1785, %v1790
    %v1795 = vadd.f32 %v1786, %v1790
    %v1796 = vadd.f32 %v1787, %v1790
    %v1797 = vadd.f32 %v1788, %v1790
    %v1798 = vpack.c.bf16 %v1793, %v1792
    %v1799 = vpack.c.bf16 %v1795, %v1794
    %v1800 = vpack.c.bf16 %v1797, %v1796
    %s1801 = scalar_lea.vmem %s6, 16
    %v1802 = vld [vmem:[%s1801] sm:$0xf]
    %v1803 = vld [vmem:[%s1801 + $0x4] sm:$0xf]
    %v1804 = vld [vmem:[%s1801 + $0x8] sm:$0xf]
    %v1805 = vld [vmem:[%s1801 + $0xc] sm:$0xf]
    %s1806 = scalar_lea.vmem %s7, 1
    %v1807 = vld [vmem:[%s1806] sm:$0x1]
    %v1809 = vperm.slane %v1807, 0
    %v1815 = vunpack.c.l.b16 %v1802
    %v1816 = vunpack.c.l.b16 %v1803
    %v1817 = vunpack.c.l.b16 %v1804
    %v1818 = vunpack.c.l.b16 %v1805
    %v1819 = vpack.c.b16 %v1816, %v1815
    %v1820 = vpack.c.b16 %v1818, %v1817
    %v1824 = vsel %vm268, %v1798, 0
    %v1827 = vsel %vm268, %v1799, 0
    %v1830 = vsel %vm268, %v1800, 0
    %1832 = vmatpush.bf16.msra.mxu0 0
    %1833 = vmatpush.bf16.msra.mxu0 0
    %1834 = vmatpush.bf16.msra.mxu0 0
    %1835 = vmatpush.bf16.msra.mxu0 0
    %1836 = vmatpush.bf16.msra.mxu0 0
    %1837 = vmatpush.bf16.msra.mxu0 0
    %1838 = vmatpush.bf16.msra.mxu0 %v1820
    %1839 = vmatpush.bf16.msra.mxu0 %v1819
    %1840 = vmatmul.bf16.gmra.mxu0 %v1824
    %v1841 = vpop.f32.mrf.mxu0
    %v1842 = vadd.f32 %v1809, %v1841
    %v1843 = vpop.f32.mrf.mxu0
    %v1844 = vadd.f32 %v1809, %v1843
    %1845 = vmatmul.bf16.gmra.mxu0 %v1827
    %v1846 = vpop.f32.mrf.mxu0
    %v1847 = vadd.f32 %v1809, %v1846
    %v1848 = vpop.f32.mrf.mxu0
    %v1849 = vadd.f32 %v1809, %v1848
    %1850 = vmatmul.bf16.gmra.mxu0 %v1830
    %v1851 = vpop.f32.mrf.mxu0
    %v1852 = vadd.f32 %v1809, %v1851
    %v1853 = vpop.f32.mrf.mxu0
    %v1854 = vadd.f32 %v1809, %v1853
    %1855 = vdwg.mxu0
    %v1856 = vpack.c.bf16 %v1844, %v1842
    %v1857 = vpack.c.bf16 %v1849, %v1847
    %v1858 = vpack.c.bf16 %v1854, %v1852
    %1862 = vrot.lane.b32.xlu0 %v1856, 96
    %v1863 = vpop.permute.xlu0 %1862
    %1864 = vrot.lane.b32.xlu0 %v1857, 96
    %v1865 = vpop.permute.xlu0 %1864
    %1866 = vrot.lane.b32.xlu0 %v1858, 96
    %v1867 = vpop.permute.xlu0 %1866
    %v1869 = vsel %vm494, %v1856, 0
    %v1872 = vsel %vm494, %v1857, 0
    %v1875 = vsel %vm494, %v1858, 0
    %v1878 = vsel %vm494, %v1863, 0
    %v1881 = vsel %vm494, %v1865, 0
    %v1884 = vsel %vm494, %v1867, 0
    %1886 = vmatpush.bf16.xpose.msra.mxu0 0
    %1887 = vmatpush.bf16.xpose.msra.mxu0 0
    %1888 = vmatpush.bf16.xpose.msra.mxu0 0
    %1889 = vmatpush.bf16.xpose.msra.mxu0 0
    %1890 = vmatpush.bf16.xpose.msra.mxu0 0
    %1891 = vmatpush.bf16.xpose.msra.mxu0 %v1884
    %1892 = vmatpush.bf16.xpose.msra.mxu0 %v1881
    %1893 = vmatpush.bf16.xpose.msra.mxu0 %v1878
    %1894 = vmatmul.bf16.gmra.mxu0 %v1869
    %v1895 = vpop.f32.mrf.mxu0
    %v1896 = vadd.f32 %v260, %v1895
    %v1897 = vpop.f32.mrf.mxu0
    %v1898 = vadd.f32 %v261, %v1897
    %1899 = vmatmul.bf16.gmra.mxu0 %v1872
    %v1900 = vpop.f32.mrf.mxu0
    %v1901 = vadd.f32 %v262, %v1900
    %v1902 = vpop.f32.mrf.mxu0
    %v1903 = vadd.f32 %v263, %v1902
    %1904 = vmatmul.bf16.gmra.mxu0 %v1875
    %v1905 = vpop.f32.mrf.mxu0
    %v1906 = vadd.f32 %v264, %v1905
    %v1907 = vpop.f32.mrf.mxu0
    %v1908 = vadd.f32 %v265, %v1907
    %1909 = vdwg.mxu0
    %v1910 = vsel %vm537, %v1896, -inf
    %1911 = vmax.xlane.f32.xlu0 %v1910
    %v1912 = vpop.xlane.xlu0 %1911
    %v1913 = vsel %vm537, %v1898, -inf
    %1914 = vmax.xlane.f32.xlu0 %v1913
    %v1915 = vpop.xlane.xlu0 %1914
    %v1916 = vsel %vm537, %v1901, -inf
    %1917 = vmax.xlane.f32.xlu0 %v1916
    %v1918 = vpop.xlane.xlu0 %1917
    %v1919 = vsel %vm537, %v1903, -inf
    %1920 = vmax.xlane.f32.xlu0 %v1919
    %v1921 = vpop.xlane.xlu0 %1920
    %v1922 = vsel %vm537, %v1906, -inf
    %1923 = vmax.xlane.f32.xlu0 %v1922
    %v1924 = vpop.xlane.xlu0 %1923
    %v1925 = vsel %vm537, %v1908, -inf
    %1926 = vmax.xlane.f32.xlu0 %v1925
    %v1927 = vpop.xlane.xlu0 %1926
    %v1928 = vsub.f32 %v1896, %v1912
    %v1929 = vsub.f32 %v1898, %v1915
    %v1930 = vsub.f32 %v1901, %v1918
    %v1931 = vsub.f32 %v1903, %v1921
    %v1932 = vsub.f32 %v1906, %v1924
    %v1933 = vsub.f32 %v1908, %v1927
    %v1934 = vmul.f32 %v1928, 1.442695
    %v1935 = vpow.pop %v1934
    %v1936 = vmul.f32 %v1929, 1.442695
    %v1937 = vpow.pop %v1936
    %v1938 = vmul.f32 %v1930, 1.442695
    %v1939 = vpow.pop %v1938
    %v1940 = vmul.f32 %v1931, 1.442695
    %v1941 = vpow.pop %v1940
    %v1942 = vmul.f32 %v1932, 1.442695
    %v1943 = vpow.pop %v1942
    %v1944 = vmul.f32 %v1933, 1.442695
    %v1945 = vpow.pop %v1944
    %v1946 = vsel %vm537, %v1935, 0.0
    %1947 = vadd.xlane.f32.xlu0 %v1946
    %v1948 = vpop.xlane.xlu0 %1947
    %v1949 = vsel %vm537, %v1937, 0.0
    %1950 = vadd.xlane.f32.xlu0 %v1949
    %v1951 = vpop.xlane.xlu0 %1950
    %v1952 = vsel %vm537, %v1939, 0.0
    %1953 = vadd.xlane.f32.xlu0 %v1952
    %v1954 = vpop.xlane.xlu0 %1953
    %v1955 = vsel %vm537, %v1941, 0.0
    %1956 = vadd.xlane.f32.xlu0 %v1955
    %v1957 = vpop.xlane.xlu0 %1956
    %v1958 = vsel %vm537, %v1943, 0.0
    %1959 = vadd.xlane.f32.xlu0 %v1958
    %v1960 = vpop.xlane.xlu0 %1959
    %v1961 = vsel %vm537, %v1945, 0.0
    %1962 = vadd.xlane.f32.xlu0 %v1961
    %v1963 = vpop.xlane.xlu0 %1962
    %v1964 = vrcp.pop %v1948
    %v1965 = vrcp.pop %v1951
    %v1966 = vrcp.pop %v1954
    %v1967 = vrcp.pop %v1957
    %v1968 = vrcp.pop %v1960
    %v1969 = vrcp.pop %v1963
    %v1970 = vmul.f32 %v1935, %v1964
    %v1971 = vmul.f32 %v1937, %v1965
    %v1972 = vmul.f32 %v1939, %v1966
    %v1973 = vmul.f32 %v1941, %v1967
    %v1974 = vmul.f32 %v1943, %v1968
    %v1975 = vmul.f32 %v1945, %v1969
    %v1976 = vpack.c.bf16 %v1971, %v1970
    %v1977 = vpack.c.bf16 %v1973, %v1972
    %v1978 = vpack.c.bf16 %v1975, %v1974
    %1979 = vrot.lane.b32.xlu0 %v1856, 64
    %v1980 = vpop.permute.xlu0 %1979
    %1981 = vrot.lane.b32.xlu0 %v1857, 64
    %v1982 = vpop.permute.xlu0 %1981
    %1983 = vrot.lane.b32.xlu0 %v1858, 64
    %v1984 = vpop.permute.xlu0 %1983
    %v1989 = vsel %vm537, %v1976, 0
    %v1992 = vsel %vm537, %v1977, 0
    %v1995 = vsel %vm537, %v1978, 0
    %1997 = vmatpush.bf16.msra.mxu0 0
    %1998 = vmatpush.bf16.msra.mxu0 0
    %1999 = vmatpush.bf16.msra.mxu0 0
    %2000 = vmatpush.bf16.msra.mxu0 0
    %2001 = vmatpush.bf16.msra.mxu0 0
    %2002 = vmatpush.bf16.msra.mxu0 %v1984
    %2003 = vmatpush.bf16.msra.mxu0 %v1982
    %2004 = vmatpush.bf16.msra.mxu0 %v1980
    %2005 = vmatmul.bf16.gmra.mxu0 %v1989
    %v2006 = vpop.f32.mrf.mxu0
    %v2007 = vadd.f32 0.0, %v2006
    %v2008 = vpop.f32.mrf.mxu0
    %v2009 = vadd.f32 0.0, %v2008
    %2010 = vmatmul.bf16.gmra.mxu0 %v1992
    %v2011 = vpop.f32.mrf.mxu0
    %v2012 = vadd.f32 0.0, %v2011
    %v2013 = vpop.f32.mrf.mxu0
    %v2014 = vadd.f32 0.0, %v2013
    %2015 = vmatmul.bf16.gmra.mxu0 %v1995
    %v2016 = vpop.f32.mrf.mxu0
    %v2017 = vadd.f32 0.0, %v2016
    %v2018 = vpop.f32.mrf.mxu0
    %v2019 = vadd.f32 0.0, %v2018
    %2020 = vdwg.mxu0
    %2021 = vrot.lane.b32.xlu0 %v1856, 120
    %v2022 = vpop.permute.xlu0 %2021
    %2023 = vrot.lane.b32.xlu0 %v1857, 120
    %v2024 = vpop.permute.xlu0 %2023
    %2025 = vrot.lane.b32.xlu0 %v1858, 120
    %v2026 = vpop.permute.xlu0 %2025
    %2027 = vrot.lane.b32.xlu0 %v1856, 88
    %v2028 = vpop.permute.xlu0 %2027
    %2029 = vrot.lane.b32.xlu0 %v1857, 88
    %v2030 = vpop.permute.xlu0 %2029
    %2031 = vrot.lane.b32.xlu0 %v1858, 88
    %v2032 = vpop.permute.xlu0 %2031
    %v2034 = vsel %vm494, %v2022, 0
    %v2037 = vsel %vm494, %v2024, 0
    %v2040 = vsel %vm494, %v2026, 0
    %v2043 = vsel %vm494, %v2028, 0
    %v2046 = vsel %vm494, %v2030, 0
    %v2049 = vsel %vm494, %v2032, 0
    %2051 = vmatpush.bf16.xpose.msra.mxu0 0
    %2052 = vmatpush.bf16.xpose.msra.mxu0 0
    %2053 = vmatpush.bf16.xpose.msra.mxu0 0
    %2054 = vmatpush.bf16.xpose.msra.mxu0 0
    %2055 = vmatpush.bf16.xpose.msra.mxu0 0
    %2056 = vmatpush.bf16.xpose.msra.mxu0 %v2049
    %2057 = vmatpush.bf16.xpose.msra.mxu0 %v2046
    %2058 = vmatpush.bf16.xpose.msra.mxu0 %v2043
    %2059 = vmatmul.bf16.gmra.mxu0 %v2034
    %v2060 = vpop.f32.mrf.mxu0
    %v2061 = vadd.f32 %v260, %v2060
    %v2062 = vpop.f32.mrf.mxu0
    %v2063 = vadd.f32 %v261, %v2062
    %2064 = vmatmul.bf16.gmra.mxu0 %v2037
    %v2065 = vpop.f32.mrf.mxu0
    %v2066 = vadd.f32 %v262, %v2065
    %v2067 = vpop.f32.mrf.mxu0
    %v2068 = vadd.f32 %v263, %v2067
    %2069 = vmatmul.bf16.gmra.mxu0 %v2040
    %v2070 = vpop.f32.mrf.mxu0
    %v2071 = vadd.f32 %v264, %v2070
    %v2072 = vpop.f32.mrf.mxu0
    %v2073 = vadd.f32 %v265, %v2072
    %2074 = vdwg.mxu0
    %v2075 = vsel %vm537, %v2061, -inf
    %2076 = vmax.xlane.f32.xlu0 %v2075
    %v2077 = vpop.xlane.xlu0 %2076
    %v2078 = vsel %vm537, %v2063, -inf
    %2079 = vmax.xlane.f32.xlu0 %v2078
    %v2080 = vpop.xlane.xlu0 %2079
    %v2081 = vsel %vm537, %v2066, -inf
    %2082 = vmax.xlane.f32.xlu0 %v2081
    %v2083 = vpop.xlane.xlu0 %2082
    %v2084 = vsel %vm537, %v2068, -inf
    %2085 = vmax.xlane.f32.xlu0 %v2084
    %v2086 = vpop.xlane.xlu0 %2085
    %v2087 = vsel %vm537, %v2071, -inf
    %2088 = vmax.xlane.f32.xlu0 %v2087
    %v2089 = vpop.xlane.xlu0 %2088
    %v2090 = vsel %vm537, %v2073, -inf
    %2091 = vmax.xlane.f32.xlu0 %v2090
    %v2092 = vpop.xlane.xlu0 %2091
    %v2093 = vsub.f32 %v2061, %v2077
    %v2094 = vsub.f32 %v2063, %v2080
    %v2095 = vsub.f32 %v2066, %v2083
    %v2096 = vsub.f32 %v2068, %v2086
    %v2097 = vsub.f32 %v2071, %v2089
    %v2098 = vsub.f32 %v2073, %v2092
    %v2099 = vmul.f32 %v2093, 1.442695
    %v2100 = vpow.pop %v2099
    %v2101 = vmul.f32 %v2094, 1.442695
    %v2102 = vpow.pop %v2101
    %v2103 = vmul.f32 %v2095, 1.442695
    %v2104 = vpow.pop %v2103
    %v2105 = vmul.f32 %v2096, 1.442695
    %v2106 = vpow.pop %v2105
    %v2107 = vmul.f32 %v2097, 1.442695
    %v2108 = vpow.pop %v2107
    %v2109 = vmul.f32 %v2098, 1.442695
    %v2110 = vpow.pop %v2109
    %v2111 = vsel %vm537, %v2100, 0.0
    %2112 = vadd.xlane.f32.xlu0 %v2111
    %v2113 = vpop.xlane.xlu0 %2112
    %v2114 = vsel %vm537, %v2102, 0.0
    %2115 = vadd.xlane.f32.xlu0 %v2114
    %v2116 = vpop.xlane.xlu0 %2115
    %v2117 = vsel %vm537, %v2104, 0.0
    %2118 = vadd.xlane.f32.xlu0 %v2117
    %v2119 = vpop.xlane.xlu0 %2118
    %v2120 = vsel %vm537, %v2106, 0.0
    %2121 = vadd.xlane.f32.xlu0 %v2120
    %v2122 = vpop.xlane.xlu0 %2121
    %v2123 = vsel %vm537, %v2108, 0.0
    %2124 = vadd.xlane.f32.xlu0 %v2123
    %v2125 = vpop.xlane.xlu0 %2124
    %v2126 = vsel %vm537, %v2110, 0.0
    %2127 = vadd.xlane.f32.xlu0 %v2126
    %v2128 = vpop.xlane.xlu0 %2127
    %v2129 = vrcp.pop %v2113
    %v2130 = vrcp.pop %v2116
    %v2131 = vrcp.pop %v2119
    %v2132 = vrcp.pop %v2122
    %v2133 = vrcp.pop %v2125
    %v2134 = vrcp.pop %v2128
    %v2135 = vmul.f32 %v2100, %v2129
    %v2136 = vmul.f32 %v2102, %v2130
    %v2137 = vmul.f32 %v2104, %v2131
    %v2138 = vmul.f32 %v2106, %v2132
    %v2139 = vmul.f32 %v2108, %v2133
    %v2140 = vmul.f32 %v2110, %v2134
    %v2141 = vpack.c.bf16 %v2136, %v2135
    %v2142 = vpack.c.bf16 %v2138, %v2137
    %v2143 = vpack.c.bf16 %v2140, %v2139
    %2144 = vrot.lane.b32.xlu0 %v1856, 56
    %v2145 = vpop.permute.xlu0 %2144
    %2146 = vrot.lane.b32.xlu0 %v1857, 56
    %v2147 = vpop.permute.xlu0 %2146
    %2148 = vrot.lane.b32.xlu0 %v1858, 56
    %v2149 = vpop.permute.xlu0 %2148
    %v2154 = vsel %vm537, %v2141, 0
    %v2157 = vsel %vm537, %v2142, 0
    %v2160 = vsel %vm537, %v2143, 0
    %2162 = vmatpush.bf16.msra.mxu0 0
    %2163 = vmatpush.bf16.msra.mxu0 0
    %2164 = vmatpush.bf16.msra.mxu0 0
    %2165 = vmatpush.bf16.msra.mxu0 0
    %2166 = vmatpush.bf16.msra.mxu0 0
    %2167 = vmatpush.bf16.msra.mxu0 %v2149
    %2168 = vmatpush.bf16.msra.mxu0 %v2147
    %2169 = vmatpush.bf16.msra.mxu0 %v2145
    %2170 = vmatmul.bf16.gmra.mxu0 %v2154
    %v2171 = vpop.f32.mrf.mxu0
    %v2172 = vadd.f32 0.0, %v2171
    %v2173 = vpop.f32.mrf.mxu0
    %v2174 = vadd.f32 0.0, %v2173
    %2175 = vmatmul.bf16.gmra.mxu0 %v2157
    %v2176 = vpop.f32.mrf.mxu0
    %v2177 = vadd.f32 0.0, %v2176
    %v2178 = vpop.f32.mrf.mxu0
    %v2179 = vadd.f32 0.0, %v2178
    %2180 = vmatmul.bf16.gmra.mxu0 %v2160
    %v2181 = vpop.f32.mrf.mxu0
    %v2182 = vadd.f32 0.0, %v2181
    %v2183 = vpop.f32.mrf.mxu0
    %v2184 = vadd.f32 0.0, %v2183
    %2185 = vdwg.mxu0
    %2186 = vrot.lane.b32.xlu0 %v1856, 112
    %v2187 = vpop.permute.xlu0 %2186
    %2188 = vrot.lane.b32.xlu0 %v1857, 112
    %v2189 = vpop.permute.xlu0 %2188
    %2190 = vrot.lane.b32.xlu0 %v1858, 112
    %v2191 = vpop.permute.xlu0 %2190
    %2192 = vrot.lane.b32.xlu0 %v1856, 80
    %v2193 = vpop.permute.xlu0 %2192
    %2194 = vrot.lane.b32.xlu0 %v1857, 80
    %v2195 = vpop.permute.xlu0 %2194
    %2196 = vrot.lane.b32.xlu0 %v1858, 80
    %v2197 = vpop.permute.xlu0 %2196
    %v2199 = vsel %vm494, %v2187, 0
    %v2202 = vsel %vm494, %v2189, 0
    %v2205 = vsel %vm494, %v2191, 0
    %v2208 = vsel %vm494, %v2193, 0
    %v2211 = vsel %vm494, %v2195, 0
    %v2214 = vsel %vm494, %v2197, 0
    %2216 = vmatpush.bf16.xpose.msra.mxu0 0
    %2217 = vmatpush.bf16.xpose.msra.mxu0 0
    %2218 = vmatpush.bf16.xpose.msra.mxu0 0
    %2219 = vmatpush.bf16.xpose.msra.mxu0 0
    %2220 = vmatpush.bf16.xpose.msra.mxu0 0
    %2221 = vmatpush.bf16.xpose.msra.mxu0 %v2214
    %2222 = vmatpush.bf16.xpose.msra.mxu0 %v2211
    %2223 = vmatpush.bf16.xpose.msra.mxu0 %v2208
    %2224 = vmatmul.bf16.gmra.mxu0 %v2199
    %v2225 = vpop.f32.mrf.mxu0
    %v2226 = vadd.f32 %v260, %v2225
    %v2227 = vpop.f32.mrf.mxu0
    %v2228 = vadd.f32 %v261, %v2227
    %2229 = vmatmul.bf16.gmra.mxu0 %v2202
    %v2230 = vpop.f32.mrf.mxu0
    %v2231 = vadd.f32 %v262, %v2230
    %v2232 = vpop.f32.mrf.mxu0
    %v2233 = vadd.f32 %v263, %v2232
    %2234 = vmatmul.bf16.gmra.mxu0 %v2205
    %v2235 = vpop.f32.mrf.mxu0
    %v2236 = vadd.f32 %v264, %v2235
    %v2237 = vpop.f32.mrf.mxu0
    %v2238 = vadd.f32 %v265, %v2237
    %2239 = vdwg.mxu0
    %v2240 = vsel %vm537, %v2226, -inf
    %2241 = vmax.xlane.f32.xlu0 %v2240
    %v2242 = vpop.xlane.xlu0 %2241
    %v2243 = vsel %vm537, %v2228, -inf
    %2244 = vmax.xlane.f32.xlu0 %v2243
    %v2245 = vpop.xlane.xlu0 %2244
    %v2246 = vsel %vm537, %v2231, -inf
    %2247 = vmax.xlane.f32.xlu0 %v2246
    %v2248 = vpop.xlane.xlu0 %2247
    %v2249 = vsel %vm537, %v2233, -inf
    %2250 = vmax.xlane.f32.xlu0 %v2249
    %v2251 = vpop.xlane.xlu0 %2250
    %v2252 = vsel %vm537, %v2236, -inf
    %2253 = vmax.xlane.f32.xlu0 %v2252
    %v2254 = vpop.xlane.xlu0 %2253
    %v2255 = vsel %vm537, %v2238, -inf
    %2256 = vmax.xlane.f32.xlu0 %v2255
    %v2257 = vpop.xlane.xlu0 %2256
    %v2258 = vsub.f32 %v2226, %v2242
    %v2259 = vsub.f32 %v2228, %v2245
    %v2260 = vsub.f32 %v2231, %v2248
    %v2261 = vsub.f32 %v2233, %v2251
    %v2262 = vsub.f32 %v2236, %v2254
    %v2263 = vsub.f32 %v2238, %v2257
    %v2264 = vmul.f32 %v2258, 1.442695
    %v2265 = vpow.pop %v2264
    %v2266 = vmul.f32 %v2259, 1.442695
    %v2267 = vpow.pop %v2266
    %v2268 = vmul.f32 %v2260, 1.442695
    %v2269 = vpow.pop %v2268
    %v2270 = vmul.f32 %v2261, 1.442695
    %v2271 = vpow.pop %v2270
    %v2272 = vmul.f32 %v2262, 1.442695
    %v2273 = vpow.pop %v2272
    %v2274 = vmul.f32 %v2263, 1.442695
    %v2275 = vpow.pop %v2274
    %v2276 = vsel %vm537, %v2265, 0.0
    %2277 = vadd.xlane.f32.xlu0 %v2276
    %v2278 = vpop.xlane.xlu0 %2277
    %v2279 = vsel %vm537, %v2267, 0.0
    %2280 = vadd.xlane.f32.xlu0 %v2279
    %v2281 = vpop.xlane.xlu0 %2280
    %v2282 = vsel %vm537, %v2269, 0.0
    %2283 = vadd.xlane.f32.xlu0 %v2282
    %v2284 = vpop.xlane.xlu0 %2283
    %v2285 = vsel %vm537, %v2271, 0.0
    %2286 = vadd.xlane.f32.xlu0 %v2285
    %v2287 = vpop.xlane.xlu0 %2286
    %v2288 = vsel %vm537, %v2273, 0.0
    %2289 = vadd.xlane.f32.xlu0 %v2288
    %v2290 = vpop.xlane.xlu0 %2289
    %v2291 = vsel %vm537, %v2275, 0.0
    %2292 = vadd.xlane.f32.xlu0 %v2291
    %v2293 = vpop.xlane.xlu0 %2292
    %v2294 = vrcp.pop %v2278
    %v2295 = vrcp.pop %v2281
    %v2296 = vrcp.pop %v2284
    %v2297 = vrcp.pop %v2287
    %v2298 = vrcp.pop %v2290
    %v2299 = vrcp.pop %v2293
    %v2300 = vmul.f32 %v2265, %v2294
    %v2301 = vmul.f32 %v2267, %v2295
    %v2302 = vmul.f32 %v2269, %v2296
    %v2303 = vmul.f32 %v2271, %v2297
    %v2304 = vmul.f32 %v2273, %v2298
    %v2305 = vmul.f32 %v2275, %v2299
    %v2306 = vpack.c.bf16 %v2301, %v2300
    %v2307 = vpack.c.bf16 %v2303, %v2302
    %v2308 = vpack.c.bf16 %v2305, %v2304
    %2309 = vrot.lane.b32.xlu0 %v1856, 48
    %v2310 = vpop.permute.xlu0 %2309
    %2311 = vrot.lane.b32.xlu0 %v1857, 48
    %v2312 = vpop.permute.xlu0 %2311
    %2313 = vrot.lane.b32.xlu0 %v1858, 48
    %v2314 = vpop.permute.xlu0 %2313
    %v2319 = vsel %vm537, %v2306, 0
    %v2322 = vsel %vm537, %v2307, 0
    %v2325 = vsel %vm537, %v2308, 0
    %2327 = vmatpush.bf16.msra.mxu0 0
    %2328 = vmatpush.bf16.msra.mxu0 0
    %2329 = vmatpush.bf16.msra.mxu0 0
    %2330 = vmatpush.bf16.msra.mxu0 0
    %2331 = vmatpush.bf16.msra.mxu0 0
    %2332 = vmatpush.bf16.msra.mxu0 %v2314
    %2333 = vmatpush.bf16.msra.mxu0 %v2312
    %2334 = vmatpush.bf16.msra.mxu0 %v2310
    %2335 = vmatmul.bf16.gmra.mxu0 %v2319
    %v2336 = vpop.f32.mrf.mxu0
    %v2337 = vadd.f32 0.0, %v2336
    %v2338 = vpop.f32.mrf.mxu0
    %v2339 = vadd.f32 0.0, %v2338
    %2340 = vmatmul.bf16.gmra.mxu0 %v2322
    %v2341 = vpop.f32.mrf.mxu0
    %v2342 = vadd.f32 0.0, %v2341
    %v2343 = vpop.f32.mrf.mxu0
    %v2344 = vadd.f32 0.0, %v2343
    %2345 = vmatmul.bf16.gmra.mxu0 %v2325
    %v2346 = vpop.f32.mrf.mxu0
    %v2347 = vadd.f32 0.0, %v2346
    %v2348 = vpop.f32.mrf.mxu0
    %v2349 = vadd.f32 0.0, %v2348
    %2350 = vdwg.mxu0
    %2351 = vrot.lane.b32.xlu0 %v1856, 104
    %v2352 = vpop.permute.xlu0 %2351
    %2353 = vrot.lane.b32.xlu0 %v1857, 104
    %v2354 = vpop.permute.xlu0 %2353
    %2355 = vrot.lane.b32.xlu0 %v1858, 104
    %v2356 = vpop.permute.xlu0 %2355
    %2357 = vrot.lane.b32.xlu0 %v1856, 72
    %v2358 = vpop.permute.xlu0 %2357
    %2359 = vrot.lane.b32.xlu0 %v1857, 72
    %v2360 = vpop.permute.xlu0 %2359
    %2361 = vrot.lane.b32.xlu0 %v1858, 72
    %v2362 = vpop.permute.xlu0 %2361
    %v2364 = vsel %vm494, %v2352, 0
    %v2367 = vsel %vm494, %v2354, 0
    %v2370 = vsel %vm494, %v2356, 0
    %v2373 = vsel %vm494, %v2358, 0
    %v2376 = vsel %vm494, %v2360, 0
    %v2379 = vsel %vm494, %v2362, 0
    %2381 = vmatpush.bf16.xpose.msra.mxu0 0
    %2382 = vmatpush.bf16.xpose.msra.mxu0 0
    %2383 = vmatpush.bf16.xpose.msra.mxu0 0
    %2384 = vmatpush.bf16.xpose.msra.mxu0 0
    %2385 = vmatpush.bf16.xpose.msra.mxu0 0
    %2386 = vmatpush.bf16.xpose.msra.mxu0 %v2379
    %2387 = vmatpush.bf16.xpose.msra.mxu0 %v2376
    %2388 = vmatpush.bf16.xpose.msra.mxu0 %v2373
    %2389 = vmatmul.bf16.gmra.mxu0 %v2364
    %v2390 = vpop.f32.mrf.mxu0
    %v2391 = vadd.f32 %v260, %v2390
    %v2392 = vpop.f32.mrf.mxu0
    %v2393 = vadd.f32 %v261, %v2392
    %2394 = vmatmul.bf16.gmra.mxu0 %v2367
    %v2395 = vpop.f32.mrf.mxu0
    %v2396 = vadd.f32 %v262, %v2395
    %v2397 = vpop.f32.mrf.mxu0
    %v2398 = vadd.f32 %v263, %v2397
    %2399 = vmatmul.bf16.gmra.mxu0 %v2370
    %v2400 = vpop.f32.mrf.mxu0
    %v2401 = vadd.f32 %v264, %v2400
    %v2402 = vpop.f32.mrf.mxu0
    %v2403 = vadd.f32 %v265, %v2402
    %2404 = vdwg.mxu0
    %v2405 = vsel %vm537, %v2391, -inf
    %2406 = vmax.xlane.f32.xlu0 %v2405
    %v2407 = vpop.xlane.xlu0 %2406
    %v2408 = vsel %vm537, %v2393, -inf
    %2409 = vmax.xlane.f32.xlu0 %v2408
    %v2410 = vpop.xlane.xlu0 %2409
    %v2411 = vsel %vm537, %v2396, -inf
    %2412 = vmax.xlane.f32.xlu0 %v2411
    %v2413 = vpop.xlane.xlu0 %2412
    %v2414 = vsel %vm537, %v2398, -inf
    %2415 = vmax.xlane.f32.xlu0 %v2414
    %v2416 = vpop.xlane.xlu0 %2415
    %v2417 = vsel %vm537, %v2401, -inf
    %2418 = vmax.xlane.f32.xlu0 %v2417
    %v2419 = vpop.xlane.xlu0 %2418
    %v2420 = vsel %vm537, %v2403, -inf
    %2421 = vmax.xlane.f32.xlu0 %v2420
    %v2422 = vpop.xlane.xlu0 %2421
    %v2423 = vsub.f32 %v2391, %v2407
    %v2424 = vsub.f32 %v2393, %v2410
    %v2425 = vsub.f32 %v2396, %v2413
    %v2426 = vsub.f32 %v2398, %v2416
    %v2427 = vsub.f32 %v2401, %v2419
    %v2428 = vsub.f32 %v2403, %v2422
    %v2429 = vmul.f32 %v2423, 1.442695
    %v2430 = vpow.pop %v2429
    %v2431 = vmul.f32 %v2424, 1.442695
    %v2432 = vpow.pop %v2431
    %v2433 = vmul.f32 %v2425, 1.442695
    %v2434 = vpow.pop %v2433
    %v2435 = vmul.f32 %v2426, 1.442695
    %v2436 = vpow.pop %v2435
    %v2437 = vmul.f32 %v2427, 1.442695
    %v2438 = vpow.pop %v2437
    %v2439 = vmul.f32 %v2428, 1.442695
    %v2440 = vpow.pop %v2439
    %v2441 = vsel %vm537, %v2430, 0.0
    %2442 = vadd.xlane.f32.xlu0 %v2441
    %v2443 = vpop.xlane.xlu0 %2442
    %v2444 = vsel %vm537, %v2432, 0.0
    %2445 = vadd.xlane.f32.xlu0 %v2444
    %v2446 = vpop.xlane.xlu0 %2445
    %v2447 = vsel %vm537, %v2434, 0.0
    %2448 = vadd.xlane.f32.xlu0 %v2447
    %v2449 = vpop.xlane.xlu0 %2448
    %v2450 = vsel %vm537, %v2436, 0.0
    %2451 = vadd.xlane.f32.xlu0 %v2450
    %v2452 = vpop.xlane.xlu0 %2451
    %v2453 = vsel %vm537, %v2438, 0.0
    %2454 = vadd.xlane.f32.xlu0 %v2453
    %v2455 = vpop.xlane.xlu0 %2454
    %v2456 = vsel %vm537, %v2440, 0.0
    %2457 = vadd.xlane.f32.xlu0 %v2456
    %v2458 = vpop.xlane.xlu0 %2457
    %v2459 = vrcp.pop %v2443
    %v2460 = vrcp.pop %v2446
    %v2461 = vrcp.pop %v2449
    %v2462 = vrcp.pop %v2452
    %v2463 = vrcp.pop %v2455
    %v2464 = vrcp.pop %v2458
    %v2465 = vmul.f32 %v2430, %v2459
    %v2466 = vmul.f32 %v2432, %v2460
    %v2467 = vmul.f32 %v2434, %v2461
    %v2468 = vmul.f32 %v2436, %v2462
    %v2469 = vmul.f32 %v2438, %v2463
    %v2470 = vmul.f32 %v2440, %v2464
    %v2471 = vpack.c.bf16 %v2466, %v2465
    %v2472 = vpack.c.bf16 %v2468, %v2467
    %v2473 = vpack.c.bf16 %v2470, %v2469
    %2474 = vrot.lane.b32.xlu0 %v1856, 40
    %v2475 = vpop.permute.xlu0 %2474
    %2476 = vrot.lane.b32.xlu0 %v1857, 40
    %v2477 = vpop.permute.xlu0 %2476
    %2478 = vrot.lane.b32.xlu0 %v1858, 40
    %v2479 = vpop.permute.xlu0 %2478
    %v2484 = vsel %vm537, %v2471, 0
    %v2487 = vsel %vm537, %v2472, 0
    %v2490 = vsel %vm537, %v2473, 0
    %2492 = vmatpush.bf16.msra.mxu0 0
    %2493 = vmatpush.bf16.msra.mxu0 0
    %2494 = vmatpush.bf16.msra.mxu0 0
    %2495 = vmatpush.bf16.msra.mxu0 0
    %2496 = vmatpush.bf16.msra.mxu0 0
    %2497 = vmatpush.bf16.msra.mxu0 %v2479
    %2498 = vmatpush.bf16.msra.mxu0 %v2477
    %2499 = vmatpush.bf16.msra.mxu0 %v2475
    %2500 = vmatmul.bf16.gmra.mxu0 %v2484
    %v2501 = vpop.f32.mrf.mxu0
    %v2502 = vadd.f32 0.0, %v2501
    %v2503 = vpop.f32.mrf.mxu0
    %v2504 = vadd.f32 0.0, %v2503
    %2505 = vmatmul.bf16.gmra.mxu0 %v2487
    %v2506 = vpop.f32.mrf.mxu0
    %v2507 = vadd.f32 0.0, %v2506
    %v2508 = vpop.f32.mrf.mxu0
    %v2509 = vadd.f32 0.0, %v2508
    %2510 = vmatmul.bf16.gmra.mxu0 %v2490
    %v2511 = vpop.f32.mrf.mxu0
    %v2512 = vadd.f32 0.0, %v2511
    %v2513 = vpop.f32.mrf.mxu0
    %v2514 = vadd.f32 0.0, %v2513
    %2515 = vdwg.mxu0
    %2522 = vrot.lane.b32.xlu0 %v2172, 8
    %v2523 = vpop.permute.xlu0 %2522
    %2524 = vrot.lane.b32.xlu0 %v2174, 8
    %v2525 = vpop.permute.xlu0 %2524
    %2526 = vrot.lane.b32.xlu0 %v2177, 8
    %v2527 = vpop.permute.xlu0 %2526
    %2528 = vrot.lane.b32.xlu0 %v2179, 8
    %v2529 = vpop.permute.xlu0 %2528
    %2530 = vrot.lane.b32.xlu0 %v2182, 8
    %v2531 = vpop.permute.xlu0 %2530
    %2532 = vrot.lane.b32.xlu0 %v2184, 8
    %v2533 = vpop.permute.xlu0 %2532
    %2546 = vrot.lane.b32.xlu0 %v2337, 16
    %v2547 = vpop.permute.xlu0 %2546
    %2548 = vrot.lane.b32.xlu0 %v2339, 16
    %v2549 = vpop.permute.xlu0 %2548
    %2550 = vrot.lane.b32.xlu0 %v2342, 16
    %v2551 = vpop.permute.xlu0 %2550
    %2552 = vrot.lane.b32.xlu0 %v2344, 16
    %v2553 = vpop.permute.xlu0 %2552
    %2554 = vrot.lane.b32.xlu0 %v2347, 16
    %v2555 = vpop.permute.xlu0 %2554
    %2556 = vrot.lane.b32.xlu0 %v2349, 16
    %v2557 = vpop.permute.xlu0 %2556
    %2570 = vrot.lane.b32.xlu0 %v2502, 24
    %v2571 = vpop.permute.xlu0 %2570
    %2572 = vrot.lane.b32.xlu0 %v2504, 24
    %v2573 = vpop.permute.xlu0 %2572
    %2574 = vrot.lane.b32.xlu0 %v2507, 24
    %v2575 = vpop.permute.xlu0 %2574
    %2576 = vrot.lane.b32.xlu0 %v2509, 24
    %v2577 = vpop.permute.xlu0 %2576
    %2578 = vrot.lane.b32.xlu0 %v2512, 24
    %v2579 = vpop.permute.xlu0 %2578
    %2580 = vrot.lane.b32.xlu0 %v2514, 24
    %v2581 = vpop.permute.xlu0 %2580
    %v2588 = vsel %vm494, %v2007, %v2523
    %v2589 = vsel %vm494, %v2009, %v2525
    %v2590 = vsel %vm494, %v2012, %v2527
    %v2591 = vsel %vm494, %v2014, %v2529
    %v2592 = vsel %vm494, %v2017, %v2531
    %v2593 = vsel %vm494, %v2019, %v2533
    %v2594 = vsel %vm1222, %v2588, %v2547
    %v2595 = vsel %vm1222, %v2589, %v2549
    %v2596 = vsel %vm1222, %v2590, %v2551
    %v2597 = vsel %vm1222, %v2591, %v2553
    %v2598 = vsel %vm1222, %v2592, %v2555
    %v2599 = vsel %vm1222, %v2593, %v2557
    %v2600 = vsel %vm1229, %v2594, %v2571
    %v2601 = vsel %vm1229, %v2595, %v2573
    %v2602 = vsel %vm1229, %v2596, %v2575
    %v2603 = vsel %vm1229, %v2597, %v2577
    %v2604 = vsel %vm1229, %v2598, %v2579
    %v2605 = vsel %vm1229, %v2599, %v2581
    %v2606 = vpack.c.bf16 %v2601, %v2600
    %v2607 = vpack.c.bf16 %v2603, %v2602
    %v2608 = vpack.c.bf16 %v2605, %v2604
    %s2609 = scalar_lea.vmem %s8, 16
    %v2610 = vld [vmem:[%s2609] sm:$0xf]
    %v2611 = vld [vmem:[%s2609 + $0x4] sm:$0xf]
    %v2612 = vld [vmem:[%s2609 + $0x8] sm:$0xf]
    %v2613 = vld [vmem:[%s2609 + $0xc] sm:$0xf]
    %v2618 = vunpack.c.l.b16 %v2610
    %v2619 = vunpack.c.l.b16 %v2611
    %v2620 = vunpack.c.l.b16 %v2612
    %v2621 = vunpack.c.l.b16 %v2613
    %v2622 = vpack.c.b16 %v2619, %v2618
    %v2623 = vpack.c.b16 %v2621, %v2620
    %v2627 = vsel %vm268, %v2606, 0
    %v2630 = vsel %vm268, %v2607, 0
    %v2633 = vsel %vm268, %v2608, 0
    %2635 = vmatpush.bf16.msra.mxu0 0
    %2636 = vmatpush.bf16.msra.mxu0 0
    %2637 = vmatpush.bf16.msra.mxu0 0
    %2638 = vmatpush.bf16.msra.mxu0 0
    %2639 = vmatpush.bf16.msra.mxu0 0
    %2640 = vmatpush.bf16.msra.mxu0 0
    %2641 = vmatpush.bf16.msra.mxu0 %v2623
    %2642 = vmatpush.bf16.msra.mxu0 %v2622
    %2643 = vmatmul.bf16.gmra.mxu0 %v2627
    %v2644 = vpop.f32.mrf.mxu0
    %v2645 = vadd.f32 0.0, %v2644
    %v2646 = vpop.f32.mrf.mxu0
    %v2647 = vadd.f32 0.0, %v2646
    %2648 = vmatmul.bf16.gmra.mxu0 %v2630
    %v2649 = vpop.f32.mrf.mxu0
    %v2650 = vadd.f32 0.0, %v2649
    %v2651 = vpop.f32.mrf.mxu0
    %v2652 = vadd.f32 0.0, %v2651
    %2653 = vmatmul.bf16.gmra.mxu0 %v2633
    %v2654 = vpop.f32.mrf.mxu0
    %v2655 = vadd.f32 0.0, %v2654
    %v2656 = vpop.f32.mrf.mxu0
    %v2657 = vadd.f32 0.0, %v2656
    %2658 = vdwg.mxu0
    %v2659 = vadd.f32 %v1638, %v2645
    %v2660 = vadd.f32 %v1639, %v2647
    %v2661 = vadd.f32 %v1640, %v2650
    %v2662 = vadd.f32 %v1641, %v2652
    %v2663 = vadd.f32 %v1642, %v2655
    %v2664 = vadd.f32 %v1643, %v2657
    %s2665 = scalar_lea.vmem %s9, 1
    %v2666 = vld [vmem:[%s2665] sm:$0x1]
    %v2668 = vperm.slane %v2666, 0
    %v2670 = vadd.f32 %v2659, %v2668
    %v2671 = vadd.f32 %v2660, %v2668
    %v2672 = vadd.f32 %v2661, %v2668
    %v2673 = vadd.f32 %v2662, %v2668
    %v2674 = vadd.f32 %v2663, %v2668
    %v2675 = vadd.f32 %v2664, %v2668
    %s2676 = scalar_lea.vmem %s10, 1
    %v2677 = vld [vmem:[%s2676] sm:$0x1]
    %s2678 = scalar_lea.vmem %s11, 1
    %v2679 = vld [vmem:[%s2678] sm:$0x1]
    %v2680 = vsel %vm268, %v2670, 0.0
    %2681 = vadd.xlane.f32.xlu0 %v2680
    %v2682 = vpop.xlane.xlu0 %2681
    %v2683 = vsel %vm268, %v2671, 0.0
    %2684 = vadd.xlane.f32.xlu0 %v2683
    %v2685 = vpop.xlane.xlu0 %2684
    %v2686 = vsel %vm268, %v2672, 0.0
    %2687 = vadd.xlane.f32.xlu0 %v2686
    %v2688 = vpop.xlane.xlu0 %2687
    %v2689 = vsel %vm268, %v2673, 0.0
    %2690 = vadd.xlane.f32.xlu0 %v2689
    %v2691 = vpop.xlane.xlu0 %2690
    %v2692 = vsel %vm268, %v2674, 0.0
    %2693 = vadd.xlane.f32.xlu0 %v2692
    %v2694 = vpop.xlane.xlu0 %2693
    %v2695 = vsel %vm268, %v2675, 0.0
    %2696 = vadd.xlane.f32.xlu0 %v2695
    %v2697 = vpop.xlane.xlu0 %2696
    %v2698 = vmul.f32 %v2682, %v293
    %v2699 = vmul.f32 %v2685, %v293
    %v2700 = vmul.f32 %v2688, %v293
    %v2701 = vmul.f32 %v2691, %v293
    %v2702 = vmul.f32 %v2694, %v293
    %v2703 = vmul.f32 %v2697, %v293
    %v2704 = vsub.f32 %v2670, %v2698
    %v2705 = vsub.f32 %v2671, %v2699
    %v2706 = vsub.f32 %v2672, %v2700
    %v2707 = vsub.f32 %v2673, %v2701
    %v2708 = vsub.f32 %v2674, %v2702
    %v2709 = vsub.f32 %v2675, %v2703
    %v2710 = vmul.f32 %v2704, %v2704
    %v2711 = vmul.f32 %v2705, %v2705
    %v2712 = vmul.f32 %v2706, %v2706
    %v2713 = vmul.f32 %v2707, %v2707
    %v2714 = vmul.f32 %v2708, %v2708
    %v2715 = vmul.f32 %v2709, %v2709
    %v2716 = vsel %vm268, %v2710, 0.0
    %2717 = vadd.xlane.f32.xlu0 %v2716
    %v2718 = vpop.xlane.xlu0 %2717
    %v2719 = vsel %vm268, %v2711, 0.0
    %2720 = vadd.xlane.f32.xlu0 %v2719
    %v2721 = vpop.xlane.xlu0 %2720
    %v2722 = vsel %vm268, %v2712, 0.0
    %2723 = vadd.xlane.f32.xlu0 %v2722
    %v2724 = vpop.xlane.xlu0 %2723
    %v2725 = vsel %vm268, %v2713, 0.0
    %2726 = vadd.xlane.f32.xlu0 %v2725
    %v2727 = vpop.xlane.xlu0 %2726
    %v2728 = vsel %vm268, %v2714, 0.0
    %2729 = vadd.xlane.f32.xlu0 %v2728
    %v2730 = vpop.xlane.xlu0 %2729
    %v2731 = vsel %vm268, %v2715, 0.0
    %2732 = vadd.xlane.f32.xlu0 %v2731
    %v2733 = vpop.xlane.xlu0 %2732
    %v2734 = vmul.f32 %v2718, %v293
    %v2735 = vmul.f32 %v2721, %v293
    %v2736 = vmul.f32 %v2724, %v293
    %v2737 = vmul.f32 %v2727, %v293
    %v2738 = vmul.f32 %v2730, %v293
    %v2739 = vmul.f32 %v2733, %v293
    %v2740 = vadd.f32 %v2734, 1e-06
    %v2741 = vadd.f32 %v2735, 1e-06
    %v2742 = vadd.f32 %v2736, 1e-06
    %v2743 = vadd.f32 %v2737, 1e-06
    %v2744 = vadd.f32 %v2738, 1e-06
    %v2745 = vadd.f32 %v2739, 1e-06
    %v2746 = vrsqrt.pop %v2740
    %v2747 = vmul.f32 %v2746, %v2740
    %v2748 = vmul.f32 %v2747, %v2746
    %v2749 = vmul.f32 0.5, %v2748
    %v2750 = vsub.f32 1.5, %v2749
    %v2751 = vmul.f32 %v2746, %v2750
    %vm2752 = vweird.f32 %v2740
    %vm2753 = vweird.f32 %v2746
    %vm2754 = vmor %vm2752, %vm2753
    %v2755 = vsel %vm2754, %v2746, %v2751
    %v2756 = vrsqrt.pop %v2741
    %v2757 = vmul.f32 %v2756, %v2741
    %v2758 = vmul.f32 %v2757, %v2756
    %v2759 = vmul.f32 0.5, %v2758
    %v2760 = vsub.f32 1.5, %v2759
    %v2761 = vmul.f32 %v2756, %v2760
    %vm2762 = vweird.f32 %v2741
    %vm2763 = vweird.f32 %v2756
    %vm2764 = vmor %vm2762, %vm2763
    %v2765 = vsel %vm2764, %v2756, %v2761
    %v2766 = vrsqrt.pop %v2742
    %v2767 = vmul.f32 %v2766, %v2742
    %v2768 = vmul.f32 %v2767, %v2766
    %v2769 = vmul.f32 0.5, %v2768
    %v2770 = vsub.f32 1.5, %v2769
    %v2771 = vmul.f32 %v2766, %v2770
    %vm2772 = vweird.f32 %v2742
    %vm2773 = vweird.f32 %v2766
    %vm2774 = vmor %vm2772, %vm2773
    %v2775 = vsel %vm2774, %v2766, %v2771
    %v2776 = vrsqrt.pop %v2743
    %v2777 = vmul.f32 %v2776, %v2743
    %v2778 = vmul.f32 %v2777, %v2776
    %v2779 = vmul.f32 0.5, %v2778
    %v2780 = vsub.f32 1.5, %v2779
    %v2781 = vmul.f32 %v2776, %v2780
    %vm2782 = vweird.f32 %v2743
    %vm2783 = vweird.f32 %v2776
    %vm2784 = vmor %vm2782, %vm2783
    %v2785 = vsel %vm2784, %v2776, %v2781
    %v2786 = vrsqrt.pop %v2744
    %v2787 = vmul.f32 %v2786, %v2744
    %v2788 = vmul.f32 %v2787, %v2786
    %v2789 = vmul.f32 0.5, %v2788
    %v2790 = vsub.f32 1.5, %v2789
    %v2791 = vmul.f32 %v2786, %v2790
    %vm2792 = vweird.f32 %v2744
    %vm2793 = vweird.f32 %v2786
    %vm2794 = vmor %vm2792, %vm2793
    %v2795 = vsel %vm2794, %v2786, %v2791
    %v2796 = vrsqrt.pop %v2745
    %v2797 = vmul.f32 %v2796, %v2745
    %v2798 = vmul.f32 %v2797, %v2796
    %v2799 = vmul.f32 0.5, %v2798
    %v2800 = vsub.f32 1.5, %v2799
    %v2801 = vmul.f32 %v2796, %v2800
    %vm2802 = vweird.f32 %v2745
    %vm2803 = vweird.f32 %v2796
    %vm2804 = vmor %vm2802, %vm2803
    %v2805 = vsel %vm2804, %v2796, %v2801
    %v2806 = vmul.f32 %v2704, %v2755
    %v2807 = vmul.f32 %v2705, %v2765
    %v2808 = vmul.f32 %v2706, %v2775
    %v2809 = vmul.f32 %v2707, %v2785
    %v2810 = vmul.f32 %v2708, %v2795
    %v2811 = vmul.f32 %v2709, %v2805
    %v2813 = vperm.slane %v2677, 0
    %v2815 = vmul.f32 %v2806, %v2813
    %v2816 = vmul.f32 %v2807, %v2813
    %v2817 = vmul.f32 %v2808, %v2813
    %v2818 = vmul.f32 %v2809, %v2813
    %v2819 = vmul.f32 %v2810, %v2813
    %v2820 = vmul.f32 %v2811, %v2813
    %v2822 = vperm.slane %v2679, 0
    %v2824 = vadd.f32 %v2815, %v2822
    %v2825 = vadd.f32 %v2816, %v2822
    %v2826 = vadd.f32 %v2817, %v2822
    %v2827 = vadd.f32 %v2818, %v2822
    %v2828 = vadd.f32 %v2819, %v2822
    %v2829 = vadd.f32 %v2820, %v2822
    %v2830 = vpack.c.bf16 %v2825, %v2824
    %v2831 = vpack.c.bf16 %v2827, %v2826
    %v2832 = vpack.c.bf16 %v2829, %v2828
    %s2833 = scalar_lea.vmem %s12, 16
    %v2834 = vld [vmem:[%s2833] sm:$0xf]
    %v2835 = vld [vmem:[%s2833 + $0x4] sm:$0xf]
    %v2836 = vld [vmem:[%s2833 + $0x8] sm:$0xf]
    %v2837 = vld [vmem:[%s2833 + $0xc] sm:$0xf]
    %s2838 = scalar_lea.vmem %s13, 1
    %v2839 = vld [vmem:[%s2838] sm:$0x1]
    %v2841 = vperm.slane %v2839, 0
    %v2847 = vunpack.c.l.b16 %v2834
    %v2848 = vunpack.c.l.b16 %v2835
    %v2849 = vunpack.c.l.b16 %v2836
    %v2850 = vunpack.c.l.b16 %v2837
    %v2851 = vpack.c.b16 %v2848, %v2847
    %v2852 = vpack.c.b16 %v2850, %v2849
    %v2856 = vsel %vm268, %v2830, 0
    %v2859 = vsel %vm268, %v2831, 0
    %v2862 = vsel %vm268, %v2832, 0
    %2864 = vmatpush.bf16.msra.mxu0 0
    %2865 = vmatpush.bf16.msra.mxu0 0
    %2866 = vmatpush.bf16.msra.mxu0 0
    %2867 = vmatpush.bf16.msra.mxu0 0
    %2868 = vmatpush.bf16.msra.mxu0 0
    %2869 = vmatpush.bf16.msra.mxu0 0
    %2870 = vmatpush.bf16.msra.mxu0 %v2852
    %2871 = vmatpush.bf16.msra.mxu0 %v2851
    %2872 = vmatmul.bf16.gmra.mxu0 %v2856
    %v2873 = vpop.f32.mrf.mxu0
    %v2874 = vadd.f32 %v2841, %v2873
    %v2875 = vpop.f32.mrf.mxu0
    %v2876 = vadd.f32 %v2841, %v2875
    %2877 = vmatmul.bf16.gmra.mxu0 %v2859
    %v2878 = vpop.f32.mrf.mxu0
    %v2879 = vadd.f32 %v2841, %v2878
    %v2880 = vpop.f32.mrf.mxu0
    %v2881 = vadd.f32 %v2841, %v2880
    %2882 = vmatmul.bf16.gmra.mxu0 %v2862
    %v2883 = vpop.f32.mrf.mxu0
    %v2884 = vadd.f32 %v2841, %v2883
    %v2885 = vpop.f32.mrf.mxu0
    %v2886 = vadd.f32 %v2841, %v2885
    %2887 = vdwg.mxu0
    %v2888 = vmul.f32 %v2874, %v2874
    %v2889 = vmul.f32 %v2876, %v2876
    %v2890 = vmul.f32 %v2879, %v2879
    %v2891 = vmul.f32 %v2881, %v2881
    %v2892 = vmul.f32 %v2884, %v2884
    %v2893 = vmul.f32 %v2886, %v2886
    %v2894 = vmul.f32 %v2874, %v2888
    %v2895 = vmul.f32 %v2876, %v2889
    %v2896 = vmul.f32 %v2879, %v2890
    %v2897 = vmul.f32 %v2881, %v2891
    %v2898 = vmul.f32 %v2884, %v2892
    %v2899 = vmul.f32 %v2886, %v2893
    %v2900 = vmul.f32 %v2894, 0.044715
    %v2901 = vmul.f32 %v2895, 0.044715
    %v2902 = vmul.f32 %v2896, 0.044715
    %v2903 = vmul.f32 %v2897, 0.044715
    %v2904 = vmul.f32 %v2898, 0.044715
    %v2905 = vmul.f32 %v2899, 0.044715
    %v2906 = vadd.f32 %v2874, %v2900
    %v2907 = vadd.f32 %v2876, %v2901
    %v2908 = vadd.f32 %v2879, %v2902
    %v2909 = vadd.f32 %v2881, %v2903
    %v2910 = vadd.f32 %v2884, %v2904
    %v2911 = vadd.f32 %v2886, %v2905
    %v2912 = vmul.f32 %v2906, 0.7978846
    %v2913 = vmul.f32 %v2907, 0.7978846
    %v2914 = vmul.f32 %v2908, 0.7978846
    %v2915 = vmul.f32 %v2909, 0.7978846
    %v2916 = vmul.f32 %v2910, 0.7978846
    %v2917 = vmul.f32 %v2911, 0.7978846
    %v2918 = vtanh.pop %v2912
    %v2919 = vtanh.pop %v2913
    %v2920 = vtanh.pop %v2914
    %v2921 = vtanh.pop %v2915
    %v2922 = vtanh.pop %v2916
    %v2923 = vtanh.pop %v2917
    %v2924 = vadd.f32 %v2918, 1.0
    %v2925 = vadd.f32 %v2919, 1.0
    %v2926 = vadd.f32 %v2920, 1.0
    %v2927 = vadd.f32 %v2921, 1.0
    %v2928 = vadd.f32 %v2922, 1.0
    %v2929 = vadd.f32 %v2923, 1.0
    %v2930 = vmul.f32 %v2924, 0.5
    %v2931 = vmul.f32 %v2925, 0.5
    %v2932 = vmul.f32 %v2926, 0.5
    %v2933 = vmul.f32 %v2927, 0.5
    %v2934 = vmul.f32 %v2928, 0.5
    %v2935 = vmul.f32 %v2929, 0.5
    %v2936 = vmul.f32 %v2874, %v2930
    %v2937 = vmul.f32 %v2876, %v2931
    %v2938 = vmul.f32 %v2879, %v2932
    %v2939 = vmul.f32 %v2881, %v2933
    %v2940 = vmul.f32 %v2884, %v2934
    %v2941 = vmul.f32 %v2886, %v2935
    %v2942 = vpack.c.bf16 %v2937, %v2936
    %v2943 = vpack.c.bf16 %v2939, %v2938
    %v2944 = vpack.c.bf16 %v2941, %v2940
    %s2945 = scalar_lea.vmem %s14, 32
    %v2946 = vld [vmem:[%s2945] sm:$0xf]
    %v2947 = vld [vmem:[%s2945 + $0x4] sm:$0xf]
    %v2948 = vld [vmem:[%s2945 + $0x8] sm:$0xf]
    %v2949 = vld [vmem:[%s2945 + $0xc] sm:$0xf]
    %v2950 = vld [vmem:[%s2945 + $0x10] sm:$0xf]
    %v2951 = vld [vmem:[%s2945 + $0x14] sm:$0xf]
    %v2952 = vld [vmem:[%s2945 + $0x18] sm:$0xf]
    %v2953 = vld [vmem:[%s2945 + $0x1c] sm:$0xf]
    %s2954 = scalar_lea.vmem %s15, 1
    %v2955 = vld [vmem:[%s2954] sm:$0x1]
    %v2957 = vperm.slane %v2955, 0
    %v2967 = vunpack.c.l.b16 %v2946
    %v2968 = vunpack.c.l.b16 %v2947
    %v2969 = vunpack.c.l.b16 %v2948
    %v2970 = vunpack.c.l.b16 %v2949
    %v2971 = vunpack.c.l.b16 %v2950
    %v2972 = vunpack.c.l.b16 %v2951
    %v2973 = vunpack.c.l.b16 %v2952
    %v2974 = vunpack.c.l.b16 %v2953
    %v2975 = vpack.c.b16 %v2968, %v2967
    %v2976 = vpack.c.b16 %v2970, %v2969
    %v2977 = vpack.c.b16 %v2972, %v2971
    %v2978 = vpack.c.b16 %v2974, %v2973
    %v2984 = vsel %vm202, %v2942, 0
    %v2987 = vsel %vm202, %v2943, 0
    %v2990 = vsel %vm202, %v2944, 0
    %2992 = vmatpush.bf16.msra.mxu0 0
    %2993 = vmatpush.bf16.msra.mxu0 0
    %2994 = vmatpush.bf16.msra.mxu0 0
    %2995 = vmatpush.bf16.msra.mxu0 0
    %2996 = vmatpush.bf16.msra.mxu0 %v2978
    %2997 = vmatpush.bf16.msra.mxu0 %v2977
    %2998 = vmatpush.bf16.msra.mxu0 %v2976
    %2999 = vmatpush.bf16.msra.mxu0 %v2975
    %3000 = vmatmul.bf16.gmra.mxu0 %v2984
    %v3001 = vpop.f32.mrf.mxu0
    %v3002 = vadd.f32 %v2957, %v3001
    %v3003 = vpop.f32.mrf.mxu0
    %3004 = vmatmul.bf16.gmra.mxu0 %v2987
    %v3005 = vpop.f32.mrf.mxu0
    %v3006 = vpop.f32.mrf.mxu0
    %v3007 = vadd.f32 %v2957, %v3006
    %3008 = vmatmul.bf16.gmra.mxu0 %v2990
    %v3009 = vpop.f32.mrf.mxu0
    %v3010 = vpop.f32.mrf.mxu0
    %3011 = vdwg.mxu0
    %v3012 = vadd.f32 %v2670, %v3002
    %v3013 = vadd.f32 %v2673, %v3007
    %v3015 = vrot.slane %v3013, 7
    %vm3017 = vcmask 1040384
    %v3018 = vsel %vm3017, %v3012, %v3015
    %v3019 = vld [vmem:[%s16] sm:$0x1]
    %v3020 = vld [vmem:[%s17] sm:$0x1]
    %vm3021 = vcmask 254976
    %v3022 = vsel %vm3021, %v3018, 0.0
    %3023 = vadd.xlane.f32.xlu0 %v3022
    %v3024 = vpop.xlane.xlu0 %3023
    %v3025 = vmul.f32 %v3024, %v293
    %v3026 = vsub.f32 %v3018, %v3025
    %v3027 = vmul.f32 %v3026, %v3026
    %v3028 = vsel %vm3021, %v3027, 0.0
    %3029 = vadd.xlane.f32.xlu0 %v3028
    %v3030 = vpop.xlane.xlu0 %3029
    %v3031 = vmul.f32 %v3030, %v293
    %v3032 = vadd.f32 %v3031, 1e-06
    %v3033 = vrsqrt.pop %v3032
    %v3034 = vmul.f32 %v3033, %v3032
    %v3035 = vmul.f32 %v3034, %v3033
    %v3036 = vmul.f32 0.5, %v3035
    %v3037 = vsub.f32 1.5, %v3036
    %v3038 = vmul.f32 %v3033, %v3037
    %vm3039 = vweird.f32 %v3032
    %vm3040 = vweird.f32 %v3033
    %vm3041 = vmor %vm3039, %vm3040
    %v3042 = vsel %vm3041, %v3033, %v3038
    %v3043 = vmul.f32 %v3026, %v3042
    %v3045 = vperm.slane %v3019, 0
    %v3047 = vmul.f32 %v3043, %v3045
    %v3049 = vperm.slane %v3020, 0
    %v3051 = vadd.f32 %v3047, %v3049
    %v3052 = vpack.c.bf16 %v3051, %v3051
    %v3053 = vld [vmem:[%s18] sm:$0xf]
    %v3054 = vld [vmem:[%s18 + $0x4] sm:$0xf]
    %v3055 = vld [vmem:[%s18 + $0x8] sm:$0xf]
    %v3056 = vld [vmem:[%s18 + $0xc] sm:$0xf]
    %v3057 = vld [vmem:[%s19] sm:$0x1]
    %v3059 = vperm.slane %v3057, 0
    %v3065 = vunpack.c.l.b16 %v3053
    %v3066 = vunpack.c.l.b16 %v3054
    %v3067 = vunpack.c.l.b16 %v3055
    %v3068 = vunpack.c.l.b16 %v3056
    %v3069 = vpack.c.b16 %v3066, %v3065
    %v3070 = vpack.c.b16 %v3068, %v3067
    %v3074 = vsel %vm268, %v3052, 0
    %3076 = vmatpush.bf16.msra.mxu0 0
    %3077 = vmatpush.bf16.msra.mxu0 0
    %3078 = vmatpush.bf16.msra.mxu0 0
    %3079 = vmatpush.bf16.msra.mxu0 0
    %3080 = vmatpush.bf16.msra.mxu0 0
    %3081 = vmatpush.bf16.msra.mxu0 0
    %3082 = vmatpush.bf16.msra.mxu0 %v3070
    %3083 = vmatpush.bf16.msra.mxu0 %v3069
    %3084 = vmatmul.bf16.gmra.mxu0 %v3074
    %v3085 = vpop.f32.mrf.mxu0
    %v3086 = vadd.f32 %v3059, %v3085
    %v3087 = vpop.f32.mrf.mxu0
    %3088 = vdwg.mxu0
    %3089 = vst [vmem:[#allocation2] sm:$0x3] %v3086
    // Predicated region
    $region82: #{my_vit_net_forward.1} parent=1 // pred_check
      _
    $region83: #{my_vit_net_forward.1} parent=1 // pred_check_branch
      %3091 = sbr.rel (0) target = $region85
    $region84: #{my_vit_net_forward.1} parent=1 // pred_region
      %3093 = vsyncadd [#allocation3], 0
      %s3095 = sshll.u32 [#allocation2], 4
      %s3096 = int_to_ptr.vmem [resolvable:$true] %s3095
      %s3097 = sshll.u32 %s20, 4
      %s3098 = int_to_ptr.hbm [resolvable:$true] %s3097
      %3100 = dma.vmem_to_hbm [thread:$0]  %s3096, 32, %s3098, [#allocation3]
    $region85: #{my_vit_net_forward.1} parent=1 // pred_fallthru
      _
    // Predicated region
    $region86: #{my_vit_net_forward.1} parent=1 // pred_check
      _
    $region87: #{my_vit_net_forward.1} parent=1 // pred_check_branch
      %3102 = sbr.rel (0) target = $region89
    $region88: #{my_vit_net_forward.1} parent=1 // pred_region
      %3104 = dma.done [#allocation3], 32
    $region89: #{my_vit_net_forward.1} parent=1 // pred_fallthru
      _
    %3105 = vsyncpa [#allocation3], 1

</llo_original>
